<compile_context>
chip_gen: v7x
topology: tpu7x:2x2x1
jax: 0.10.0
libtpu: 0.0.40
codegen_flags: <defaults>
</compile_context>

<pallas_src>
import functools

import jax
import jax.numpy as jnp
import numpy as np
from jax.experimental import pallas as pl
from jax.experimental.pallas import tpu as pltpu


# ----------------------------------------------------------------------------
# Pallas kernel: processes WB windows x all heads per grid step.
# ----------------------------------------------------------------------------
def _window_attn_kernel(x_ref, wqkv_ref, bqkv_ref, wproj_ref, bproj_ref,
                        bias_ref, *rest, num_heads, has_mask):
    # arg order: inputs..., [mask], output
    if has_mask:
        mask_ref, o_ref = rest
    else:
        mask_ref = None
        (o_ref,) = rest

    WB, N, C = x_ref.shape
    H = num_heads
    hd = C // H

    # ---- fused QKV projection (one wide MXU matmul, f32 accumulation) ----
    # q-scale is already folded into the Q columns of Wqkv / bqkv.
    x2 = x_ref[...].reshape(WB * N, C)                                 # bf16
    qkv = (jnp.dot(x2, wqkv_ref[...],
                   preferred_element_type=jnp.float32)
           + bqkv_ref[...])                                            # (WB*N, 3C) f32

    # ---- stack heads along a single leading batch axis: (H*WB, N, hd) ----
    # The hd-wide lane slices are unavoidable (heads live in lanes after the
    # fused matmul); everything downstream is fused across heads.
    q_parts, k_parts, v_parts = [], [], []
    for h in range(H):
        q_parts.append(qkv[:, h * hd:(h + 1) * hd].reshape(WB, N, hd))
        k_parts.append(qkv[:, C + h * hd:C + (h + 1) * hd].reshape(WB, N, hd))
        v_parts.append(qkv[:, 2 * C + h * hd:2 * C + (h + 1) * hd].reshape(WB, N, hd))
    q_s = jnp.concatenate(q_parts, axis=0).astype(jnp.bfloat16)       # (H*WB, N, hd)
    k_s = jnp.concatenate(k_parts, axis=0).astype(jnp.bfloat16)
    v_s = jnp.concatenate(v_parts, axis=0).astype(jnp.bfloat16)

    # ---- scores for all heads / windows in one batched contraction ----
    s = jnp.einsum('bnd,bmd->bnm', q_s, k_s,
                   preferred_element_type=jnp.float32)                 # (H*WB, N, N)
    s = s.reshape(H, WB, N, N)
    s = s + bias_ref[...]                                              # (H,1,N,N) bcast
    if has_mask:
        s = s + mask_ref[...]                                          # (1,WB,N,N) bcast
    s = s.reshape(H * WB, N, N)

    # ---- numerically stable softmax, f32 (v5e-safe) ----
    s = s - jnp.max(s, axis=-1, keepdims=True)
    p = jnp.exp(s)
    p = p * pl.reciprocal(jnp.sum(p, axis=-1, keepdims=True), approx=True)

    # ---- attention output for all heads in one batched matmul ----
    o = jnp.einsum('bnm,bmd->bnd', p.astype(jnp.bfloat16), v_s,
                   preferred_element_type=jnp.float32)                 # (H*WB, N, hd)
    o = o.reshape(H, WB * N, hd).astype(jnp.bfloat16)

    # ---- output projection: sum_h o_h @ Wproj[h] (+ bias), all lane-dense ----
    # Leading-dim indexing only (no lane slices, no masked stores); each dot
    # is a plain 2-D MXU matmul with a C-wide output.
    y = bproj_ref[...]                                                 # (1, C)
    for h in range(H):
        y = y + jnp.dot(o[h], wproj_ref[h],
                        preferred_element_type=jnp.float32)            # (WB*N, C)

    o_ref[...] = y.reshape(WB, N, C).astype(o_ref.dtype)


# ----------------------------------------------------------------------------
# Glue: relative-position index, VMEM budget, window-block sizing, pallas_call.
# ----------------------------------------------------------------------------
def _relative_position_index(window_size):
    """Static int index table, same construction as the PyTorch __init__."""
    Wh, Ww = window_size
    coords = np.stack(np.meshgrid(np.arange(Wh), np.arange(Ww), indexing="ij"))
    coords_flatten = coords.reshape(2, -1)                      # (2, N)
    rel = coords_flatten[:, :, None] - coords_flatten[:, None, :]
    rel = rel.transpose(1, 2, 0).copy()                         # (N, N, 2)
    rel[:, :, 0] += Wh - 1
    rel[:, :, 1] += Ww - 1
    rel[:, :, 0] *= 2 * Ww - 1
    return rel.sum(-1)                                          # (N, N)


def _round_up(x, m):
    return (x + m - 1) // m * m


def _block_vmem_bytes(WB, N, C, H, nW):
    """Rough, lane/sublane-padding-aware VMEM bytes per grid step: streamed
    blocks double-buffered, resident operands counted twice (default double
    buffering), main live temporaries at their padded spill size."""
    def padded(rows, cols, itemsize):
        return _round_up(rows, 8) * _round_up(cols, 128) * itemsize
    hd = C // H
    b = 0
    b += 2 * WB * padded(N, C, 2)             # x block (bf16), double-buffered
    b += 2 * WB * padded(N, C, 4)             # out block (f32), double-buffered
    b += WB * padded(N, 3 * C, 4)             # qkv (f32, vregs / spill)
    b += 3 * H * WB * padded(N, hd, 2)        # head-stacked q/k/v (bf16)
    b += 2 * H * WB * padded(N, N, 4)         # scores + probabilities (f32)
    b += H * WB * padded(N, hd, 4)            # attention output (f32)
    b += H * padded(WB * N, C, 4)             # projection partials (f32)
    if nW:
        b += 2 * WB * padded(N, N, 4)         # tiled mask (resident, 2 bufs)
    # resident weights / biases (default double buffering)
    b += 2 * (padded(C, 3 * C, 2) + padded(1, 3 * C, 4)
              + H * padded(hd, C, 2) + padded(1, C, 4) + H * padded(N, N, 4))
    return b


def _pick_window_block(B_, N, C, H, nW, vmem_budget, min_steps=8):
    """Largest WB that (a) divides B_, (b) is a multiple of nW (mask layout),
    (c) fits the VMEM byte budget, and (d) leaves >= min_steps grid steps
    when possible (>= ~4 steps per TensorCore on 2-core chips)."""
    step = nW if nW else 1
    cap = B_
    if B_ >= min_steps * step:
        cap = min(cap, B_ // min_steps)
    wb = step
    m = step
    while m <= cap:
        if B_ % m == 0 and _block_vmem_bytes(m, N, C, H, nW) <= vmem_budget:
            wb = m
        m += step
    return max(wb, step)


def window_attention(x, params, window_size, num_heads, mask=None):
    B_, N, C = x.shape
    H = num_heads
    hd = C // H
    scale = hd ** (-0.5)
    out_dtype = x.dtype

    if mask is not None:
        nW = int(mask.shape[0])
        if B_ % nW != 0:
            raise ValueError(f"B_={B_} must be a multiple of nW={nW} when a "
                             f"mask is supplied.")
    else:
        nW = 0

    # relative position bias: (H, 1, N, N), built once, resident for all steps
    rel_idx = jnp.asarray(_relative_position_index(window_size))
    rel_bias = params["rpb_table"][rel_idx.reshape(-1)]
    rel_bias = rel_bias.reshape(N, N, H).transpose(2, 0, 1)
    rel_bias = rel_bias.reshape(H, 1, N, N).astype(jnp.float32)

    # fold the q scaling into the Q columns of the qkv projection (free, once)
    col_scale = jnp.concatenate([jnp.full((C,), scale, jnp.float32),
                                 jnp.ones((2 * C,), jnp.float32)])
    w_qkv = (params["w_qkv"].astype(jnp.float32)
             * col_scale[None, :]).astype(jnp.bfloat16)         # bf16: half DMA
    b_qkv = (params["b_qkv"].astype(jnp.float32).reshape(1, 3 * C)
             * col_scale[None, :])
    # projection weight regrouped per head: rows [h*hd:(h+1)*hd] -> (H, hd, C)
    w_proj = params["w_proj"].astype(jnp.bfloat16).reshape(H, hd, C)
    b_proj = params["b_proj"].astype(jnp.float32).reshape(1, C)

    # ---- VMEM budget / window-block sizing (v5e 16MiB, v6e/v7x 32MiB default
    #      scoped VMEM; v7x 64MiB physical) ----
    try:
        phys_vmem = pltpu.get_tpu_info().vmem_capacity_bytes
    except Exception:
        phys_vmem = 64 * 1024 * 1024            # conservative fallback
    vmem_ceiling = min(int(phys_vmem * 3 // 4), 96 * 1024 * 1024)
    WB = _pick_window_block(B_, N, C, H, nW, vmem_budget=vmem_ceiling // 2)
    if nW:
        assert WB % nW == 0 and B_ % WB == 0
    grid = (B_ // WB,)
    # only raise the scoped-VMEM limit above the per-generation default when
    # the estimated working set actually needs it
    est_bytes = _block_vmem_bytes(WB, N, C, H, nW)
    vmem_limit_bytes = None if est_bytes <= (12 * 1024 * 1024) else vmem_ceiling

    x_bf16 = x.astype(jnp.bfloat16)             # halves the per-step input DMA

    inputs = [x_bf16, w_qkv, b_qkv, w_proj, b_proj, rel_bias]
    in_specs = [
        pl.BlockSpec((WB, N, C), lambda g: (g, 0, 0)),              # x block
        pl.BlockSpec((C, 3 * C), lambda g: (0, 0)),                 # Wqkv (resident)
        pl.BlockSpec((1, 3 * C), lambda g: (0, 0)),                 # bqkv
        pl.BlockSpec((H, hd, C), lambda g: (0, 0, 0)),              # Wproj per head
        pl.BlockSpec((1, C), lambda g: (0, 0)),                     # bproj
        pl.BlockSpec((H, 1, N, N), lambda g: (0, 0, 0, 0)),         # rel bias
    ]
    if nW:
        # pre-tile the mask to the window block: tiled[j] == mask[j % nW]
        # (valid because WB % nW == 0, so (g*WB + j) % nW == j % nW)
        mask_tiled = jnp.tile(mask.astype(jnp.float32), (WB // nW, 1, 1))
        inputs.append(mask_tiled.reshape(1, WB, N, N))
        in_specs.append(pl.BlockSpec((1, WB, N, N), lambda g: (0, 0, 0, 0)))

    kernel = functools.partial(_window_attn_kernel,
                               num_heads=H, has_mask=bool(nW))

    grid_spec = pltpu.PrefetchScalarGridSpec(
        num_scalar_prefetch=0,
        grid=grid,
        in_specs=in_specs,
        out_specs=pl.BlockSpec((WB, N, C), lambda g: (g, 0, 0)),
    )

    return pl.pallas_call(
        kernel,
        out_shape=jax.ShapeDtypeStruct((B_, N, C), out_dtype),
        grid_spec=grid_spec,
        compiler_params=pltpu.CompilerParams(
            dimension_semantics=("parallel",),
            vmem_limit_bytes=vmem_limit_bytes),
    )(*inputs)


# ----------------------------------------------------------------------------
# Pure-JAX reference (mirrors the PyTorch forward) for a correctness check.
# ----------------------------------------------------------------------------
def window_attention_ref(x, params, window_size, num_heads, mask=None):
    B_, N, C = x.shape
    hd = C // num_heads
    scale = hd ** (-0.5)
    qkv = x @ params["w_qkv"] + params["b_qkv"]                     # (B_,N,3C)
    qkv = qkv.reshape(B_, N, 3, num_heads, hd).transpose(2, 0, 3, 1, 4)
    q, k, v = qkv[0], qkv[1], qkv[2]                                # (B_,H,N,hd)
    q = q * scale
    attn = jnp.einsum("bhnd,bhmd->bhnm", q, k)

    rel_idx = jnp.asarray(_relative_position_index(window_size))
    rel_bias = params["rpb_table"][rel_idx.reshape(-1)].reshape(N, N, num_heads)
    rel_bias = rel_bias.transpose(2, 0, 1)                          # (H,N,N)
    attn = attn + rel_bias[None]
    if mask is not None:
        nW = mask.shape[0]
        attn = attn.reshape(B_ // nW, nW, num_heads, N, N) + mask[None, :, None]
        attn = attn.reshape(-1, num_heads, N, N)
    attn = jax.nn.softmax(attn, axis=-1)
    out = jnp.einsum("bhnm,bhmd->bhnd", attn, v)                    # (B_,H,N,hd)
    out = out.transpose(0, 2, 1, 3).reshape(B_, N, C)
    return out @ params["w_proj"] + params["b_proj"]


# ----------------------------------------------------------------------------
if __name__ == "__main__":
    # Shapes consistent with the module:
    #   dim = 32, num_heads = 4, window_size = (4, 4)  ->  N = 16
    #   B_ = 64 windows (16 images x nW=4 windows each)
    dim = 32
    num_heads = 4
    window_size = (4, 4)
    N = window_size[0] * window_size[1]
    nW = 4
    B_ = 16 * nW

    key = jax.random.PRNGKey(0)
    k_x, k_rpb, k_wqkv, k_bqkv, k_wproj, k_bproj, k_mask = jax.random.split(key, 7)

    x = jax.random.normal(k_x, (B_, N, dim), jnp.float32)

    num_rel = (2 * window_size[0] - 1) * (2 * window_size[1] - 1)
    params = {
        # relative_position_bias_table: normal(std=0.02) as in the module
        "rpb_table": 0.02 * jax.random.normal(k_rpb, (num_rel, num_heads), jnp.float32),
        # Linear layers (deterministic synthetic init; stored as (in, out))
        "w_qkv": 0.05 * jax.random.normal(k_wqkv, (dim, 3 * dim), jnp.float32),
        "b_qkv": 0.05 * jax.random.normal(k_bqkv, (3 * dim,), jnp.float32),
        "w_proj": 0.05 * jax.random.normal(k_wproj, (dim, dim), jnp.float32),
        "b_proj": 0.05 * jax.random.normal(k_bproj, (dim,), jnp.float32),
    }
    # attn_drop = proj_drop = 0.0 -> dropout is identity; omitted.

    # --- case 1: no mask (W-MSA) ---
    out = window_attention(x, params, window_size, num_heads, mask=None)
    out = jax.block_until_ready(out)
    ref = window_attention_ref(x, params, window_size, num_heads, mask=None)
    np.testing.assert_allclose(np.asarray(out), np.asarray(ref),
                               rtol=2e-2, atol=2e-2)

    # --- case 2: shifted-window style additive mask (SW-MSA) ---
    mask = jnp.where(jax.random.uniform(k_mask, (nW, N, N)) > 0.8, -100.0, 0.0)
    out_m = window_attention(x, params, window_size, num_heads, mask=mask)
    out_m = jax.block_until_ready(out_m)
    ref_m = window_attention_ref(x, params, window_size, num_heads, mask=mask)
    np.testing.assert_allclose(np.asarray(out_m), np.asarray(ref_m),
                               rtol=2e-2, atol=2e-2)

    print("KERNEL_OK")
</pallas_src>

<mosaic_0001>
module attributes {stable_mosaic.version = 11 : i64} {
  func.func @_window_attn_kernel(%arg0: i32, %arg1: memref<8x16x32xbf16, #tpu.memory_space<vmem>>, %arg2: memref<32x96xbf16, #tpu.memory_space<vmem>>, %arg3: memref<1x96xf32, #tpu.memory_space<vmem>>, %arg4: memref<4x8x32xbf16, #tpu.memory_space<vmem>>, %arg5: memref<1x32xf32, #tpu.memory_space<vmem>>, %arg6: memref<4x1x16x16xf32, #tpu.memory_space<vmem>>, %arg7: memref<8x16x32xf32, #tpu.memory_space<vmem>>) attributes {dimension_semantics = [#tpu.dimension_semantics<parallel>], iteration_bounds = array<i64: 8>, scalar_prefetch = 0 : i64, scratch_operands = 0 : i64, tpu.core_type = #tpu.core_type<tc>, window_params = [{transform_indices = @transform_0, window_bounds = array<i64: 8, 16, 32>}, {pipeline_mode = #tpu.pipeline_mode<synchronous>, transform_indices = @transform_1, window_bounds = array<i64: 32, 96>}, {pipeline_mode = #tpu.pipeline_mode<synchronous>, transform_indices = @transform_2, window_bounds = array<i64: 1, 96>}, {pipeline_mode = #tpu.pipeline_mode<synchronous>, transform_indices = @transform_3, window_bounds = array<i64: 4, 8, 32>}, {pipeline_mode = #tpu.pipeline_mode<synchronous>, transform_indices = @transform_4, window_bounds = array<i64: 1, 32>}, {pipeline_mode = #tpu.pipeline_mode<synchronous>, transform_indices = @transform_5, window_bounds = array<i64: 4, 1, 16, 16>}, {transform_indices = @transform_6, window_bounds = array<i64: 8, 16, 32>}]} {
    %c0 = arith.constant 0 : index
    %c0_0 = arith.constant 0 : index
    %c0_1 = arith.constant 0 : index
    %0 = vector.load %arg1[%c0, %c0_0, %c0_1] : memref<8x16x32xbf16, #tpu.memory_space<vmem>>, vector<8x16x32xbf16>
    %1 = vector.shape_cast %0 : vector<8x16x32xbf16> to vector<128x32xbf16>
    %c0_2 = arith.constant 0 : index
    %c0_3 = arith.constant 0 : index
    %2 = vector.load %arg2[%c0_2, %c0_3] : memref<32x96xbf16, #tpu.memory_space<vmem>>, vector<32x96xbf16>
    %cst = arith.constant dense<0.000000e+00> : vector<128x96xf32>
    %3 = tpu.matmul %1, %2, %cst {dimension_numbers = #tpu.dot_dimension_numbers<[1], [0], [0], [1], [0, 0, 1, 1], [], []>} : vector<128x32xbf16>, vector<32x96xbf16>, vector<128x96xf32> -> vector<128x96xf32>
    %c0_4 = arith.constant 0 : index
    %c0_5 = arith.constant 0 : index
    %4 = vector.load %arg3[%c0_4, %c0_5] : memref<1x96xf32, #tpu.memory_space<vmem>>, vector<1x96xf32>
    %5 = vector.broadcast %4 : vector<1x96xf32> to vector<128x96xf32>
    %6 = arith.addf %3, %5 : vector<128x96xf32>
    %7 = vector.extract_strided_slice %6 {offsets = [0, 0], sizes = [128, 8], strides = [1, 1]} : vector<128x96xf32> to vector<128x8xf32>
    %8 = vector.shape_cast %7 : vector<128x8xf32> to vector<8x16x8xf32>
    %9 = vector.extract_strided_slice %6 {offsets = [0, 32], sizes = [128, 8], strides = [1, 1]} : vector<128x96xf32> to vector<128x8xf32>
    %10 = vector.shape_cast %9 : vector<128x8xf32> to vector<8x16x8xf32>
    %11 = vector.extract_strided_slice %6 {offsets = [0, 64], sizes = [128, 8], strides = [1, 1]} : vector<128x96xf32> to vector<128x8xf32>
    %12 = vector.shape_cast %11 : vector<128x8xf32> to vector<8x16x8xf32>
    %13 = vector.extract_strided_slice %6 {offsets = [0, 8], sizes = [128, 8], strides = [1, 1]} : vector<128x96xf32> to vector<128x8xf32>
    %14 = vector.shape_cast %13 : vector<128x8xf32> to vector<8x16x8xf32>
    %15 = vector.extract_strided_slice %6 {offsets = [0, 40], sizes = [128, 8], strides = [1, 1]} : vector<128x96xf32> to vector<128x8xf32>
    %16 = vector.shape_cast %15 : vector<128x8xf32> to vector<8x16x8xf32>
    %17 = vector.extract_strided_slice %6 {offsets = [0, 72], sizes = [128, 8], strides = [1, 1]} : vector<128x96xf32> to vector<128x8xf32>
    %18 = vector.shape_cast %17 : vector<128x8xf32> to vector<8x16x8xf32>
    %19 = vector.extract_strided_slice %6 {offsets = [0, 16], sizes = [128, 8], strides = [1, 1]} : vector<128x96xf32> to vector<128x8xf32>
    %20 = vector.shape_cast %19 : vector<128x8xf32> to vector<8x16x8xf32>
    %21 = vector.extract_strided_slice %6 {offsets = [0, 48], sizes = [128, 8], strides = [1, 1]} : vector<128x96xf32> to vector<128x8xf32>
    %22 = vector.shape_cast %21 : vector<128x8xf32> to vector<8x16x8xf32>
    %23 = vector.extract_strided_slice %6 {offsets = [0, 80], sizes = [128, 8], strides = [1, 1]} : vector<128x96xf32> to vector<128x8xf32>
    %24 = vector.shape_cast %23 : vector<128x8xf32> to vector<8x16x8xf32>
    %25 = vector.extract_strided_slice %6 {offsets = [0, 24], sizes = [128, 8], strides = [1, 1]} : vector<128x96xf32> to vector<128x8xf32>
    %26 = vector.shape_cast %25 : vector<128x8xf32> to vector<8x16x8xf32>
    %27 = vector.extract_strided_slice %6 {offsets = [0, 56], sizes = [128, 8], strides = [1, 1]} : vector<128x96xf32> to vector<128x8xf32>
    %28 = vector.shape_cast %27 : vector<128x8xf32> to vector<8x16x8xf32>
    %29 = vector.extract_strided_slice %6 {offsets = [0, 88], sizes = [128, 8], strides = [1, 1]} : vector<128x96xf32> to vector<128x8xf32>
    %30 = vector.shape_cast %29 : vector<128x8xf32> to vector<8x16x8xf32>
    %31 = tpu.concatenate %8, %14, %20, %26 in 0 : vector<8x16x8xf32>, vector<8x16x8xf32>, vector<8x16x8xf32>, vector<8x16x8xf32> -> vector<32x16x8xf32>
    %32 = arith.truncf %31 : vector<32x16x8xf32> to vector<32x16x8xbf16>
    %33 = tpu.concatenate %10, %16, %22, %28 in 0 : vector<8x16x8xf32>, vector<8x16x8xf32>, vector<8x16x8xf32>, vector<8x16x8xf32> -> vector<32x16x8xf32>
    %34 = arith.truncf %33 : vector<32x16x8xf32> to vector<32x16x8xbf16>
    %35 = tpu.concatenate %12, %18, %24, %30 in 0 : vector<8x16x8xf32>, vector<8x16x8xf32>, vector<8x16x8xf32>, vector<8x16x8xf32> -> vector<32x16x8xf32>
    %36 = arith.truncf %35 : vector<32x16x8xf32> to vector<32x16x8xbf16>
    "tpu.trace_start"() <{level = 10 : i32, message = "bnd,bmd->bnm"}> : () -> ()
    %cst_6 = arith.constant dense<0.000000e+00> : vector<32x16x16xf32>
    %37 = tpu.matmul %32, %34, %cst_6 {dimension_numbers = #tpu.dot_dimension_numbers<[2], [2], [1], [1], [0, 0, 0, 1, 1, 1], [0], [0]>} : vector<32x16x8xbf16>, vector<32x16x8xbf16>, vector<32x16x16xf32> -> vector<32x16x16xf32>
    "tpu.trace_stop"() : () -> ()
    %38 = vector.shape_cast %37 : vector<32x16x16xf32> to vector<4x8x16x16xf32>
    %c0_7 = arith.constant 0 : index
    %c0_8 = arith.constant 0 : index
    %c0_9 = arith.constant 0 : index
    %c0_10 = arith.constant 0 : index
    %39 = vector.load %arg6[%c0_7, %c0_8, %c0_9, %c0_10] : memref<4x1x16x16xf32, #tpu.memory_space<vmem>>, vector<4x1x16x16xf32>
    %40 = vector.broadcast %39 : vector<4x1x16x16xf32> to vector<4x8x16x16xf32>
    %41 = arith.addf %38, %40 : vector<4x8x16x16xf32>
    %42 = vector.shape_cast %41 : vector<4x8x16x16xf32> to vector<32x16x16xf32>
    %cst_11 = arith.constant dense<0xFF800000> : vector<32x16xf32>
    %43 = vector.multi_reduction <maximumf>, %42, %cst_11 [2] : vector<32x16x16xf32> to vector<32x16xf32>
    %44 = vector.shape_cast %43 : vector<32x16xf32> to vector<32x16x1xf32>
    %45 = vector.broadcast %44 : vector<32x16x1xf32> to vector<32x16x16xf32>
    %46 = arith.subf %42, %45 : vector<32x16x16xf32>
    %47 = math.exp %46 : vector<32x16x16xf32>
    %cst_12 = arith.constant dense<0.000000e+00> : vector<32x16xf32>
    %48 = vector.multi_reduction <add>, %47, %cst_12 [2] : vector<32x16x16xf32> to vector<32x16xf32>
    %49 = vector.shape_cast %48 : vector<32x16xf32> to vector<32x16x1xf32>
    %50 = tpu.reciprocal %49 {approx = true} : vector<32x16x1xf32> -> vector<32x16x1xf32>
    %51 = vector.broadcast %50 : vector<32x16x1xf32> to vector<32x16x16xf32>
    %52 = arith.mulf %47, %51 : vector<32x16x16xf32>
    %53 = arith.truncf %52 : vector<32x16x16xf32> to vector<32x16x16xbf16>
    "tpu.trace_start"() <{level = 10 : i32, message = "bnm,bmd->bnd"}> : () -> ()
    %cst_13 = arith.constant dense<0.000000e+00> : vector<32x16x8xf32>
    %54 = tpu.matmul %53, %36, %cst_13 {dimension_numbers = #tpu.dot_dimension_numbers<[2], [1], [1], [2], [0, 0, 0, 1, 1, 2], [0], [0]>} : vector<32x16x16xbf16>, vector<32x16x8xbf16>, vector<32x16x8xf32> -> vector<32x16x8xf32>
    "tpu.trace_stop"() : () -> ()
    %55 = vector.shape_cast %54 : vector<32x16x8xf32> to vector<4x128x8xf32>
    %56 = arith.truncf %55 : vector<4x128x8xf32> to vector<4x128x8xbf16>
    %c0_14 = arith.constant 0 : index
    %c0_15 = arith.constant 0 : index
    %57 = vector.load %arg5[%c0_14, %c0_15] : memref<1x32xf32, #tpu.memory_space<vmem>>, vector<1x32xf32>
    %58 = vector.extract_strided_slice %56 {offsets = [0, 0, 0], sizes = [1, 128, 8], strides = [1, 1, 1]} : vector<4x128x8xbf16> to vector<1x128x8xbf16>
    %59 = vector.shape_cast %58 : vector<1x128x8xbf16> to vector<128x8xbf16>
    %c0_16 = arith.constant 0 : index
    %c0_17 = arith.constant 0 : index
    %c0_18 = arith.constant 0 : index
    %60 = vector.load %arg4[%c0_16, %c0_17, %c0_18] : memref<4x8x32xbf16, #tpu.memory_space<vmem>>, vector<1x8x32xbf16>
    %61 = vector.shape_cast %60 : vector<1x8x32xbf16> to vector<8x32xbf16>
    %cst_19 = arith.constant dense<0.000000e+00> : vector<128x32xf32>
    %62 = tpu.matmul %59, %61, %cst_19 {dimension_numbers = #tpu.dot_dimension_numbers<[1], [0], [0], [1], [0, 0, 1, 1], [], []>} : vector<128x8xbf16>, vector<8x32xbf16>, vector<128x32xf32> -> vector<128x32xf32>
    %63 = vector.broadcast %57 : vector<1x32xf32> to vector<128x32xf32>
    %64 = arith.addf %63, %62 : vector<128x32xf32>
    %65 = vector.extract_strided_slice %56 {offsets = [1, 0, 0], sizes = [1, 128, 8], strides = [1, 1, 1]} : vector<4x128x8xbf16> to vector<1x128x8xbf16>
    %66 = vector.shape_cast %65 : vector<1x128x8xbf16> to vector<128x8xbf16>
    %c1 = arith.constant 1 : index
    %c0_20 = arith.constant 0 : index
    %c0_21 = arith.constant 0 : index
    %67 = vector.load %arg4[%c1, %c0_20, %c0_21] : memref<4x8x32xbf16, #tpu.memory_space<vmem>>, vector<1x8x32xbf16>
    %68 = vector.shape_cast %67 : vector<1x8x32xbf16> to vector<8x32xbf16>
    %cst_22 = arith.constant dense<0.000000e+00> : vector<128x32xf32>
    %69 = tpu.matmul %66, %68, %cst_22 {dimension_numbers = #tpu.dot_dimension_numbers<[1], [0], [0], [1], [0, 0, 1, 1], [], []>} : vector<128x8xbf16>, vector<8x32xbf16>, vector<128x32xf32> -> vector<128x32xf32>
    %70 = arith.addf %64, %69 : vector<128x32xf32>
    %71 = vector.extract_strided_slice %56 {offsets = [2, 0, 0], sizes = [1, 128, 8], strides = [1, 1, 1]} : vector<4x128x8xbf16> to vector<1x128x8xbf16>
    %72 = vector.shape_cast %71 : vector<1x128x8xbf16> to vector<128x8xbf16>
    %c2 = arith.constant 2 : index
    %c0_23 = arith.constant 0 : index
    %c0_24 = arith.constant 0 : index
    %73 = vector.load %arg4[%c2, %c0_23, %c0_24] : memref<4x8x32xbf16, #tpu.memory_space<vmem>>, vector<1x8x32xbf16>
    %74 = vector.shape_cast %73 : vector<1x8x32xbf16> to vector<8x32xbf16>
    %cst_25 = arith.constant dense<0.000000e+00> : vector<128x32xf32>
    %75 = tpu.matmul %72, %74, %cst_25 {dimension_numbers = #tpu.dot_dimension_numbers<[1], [0], [0], [1], [0, 0, 1, 1], [], []>} : vector<128x8xbf16>, vector<8x32xbf16>, vector<128x32xf32> -> vector<128x32xf32>
    %76 = arith.addf %70, %75 : vector<128x32xf32>
    %77 = vector.extract_strided_slice %56 {offsets = [3, 0, 0], sizes = [1, 128, 8], strides = [1, 1, 1]} : vector<4x128x8xbf16> to vector<1x128x8xbf16>
    %78 = vector.shape_cast %77 : vector<1x128x8xbf16> to vector<128x8xbf16>
    %c3 = arith.constant 3 : index
    %c0_26 = arith.constant 0 : index
    %c0_27 = arith.constant 0 : index
    %79 = vector.load %arg4[%c3, %c0_26, %c0_27] : memref<4x8x32xbf16, #tpu.memory_space<vmem>>, vector<1x8x32xbf16>
    %80 = vector.shape_cast %79 : vector<1x8x32xbf16> to vector<8x32xbf16>
    %cst_28 = arith.constant dense<0.000000e+00> : vector<128x32xf32>
    %81 = tpu.matmul %78, %80, %cst_28 {dimension_numbers = #tpu.dot_dimension_numbers<[1], [0], [0], [1], [0, 0, 1, 1], [], []>} : vector<128x8xbf16>, vector<8x32xbf16>, vector<128x32xf32> -> vector<128x32xf32>
    %82 = arith.addf %76, %81 : vector<128x32xf32>
    %83 = vector.shape_cast %82 : vector<128x32xf32> to vector<8x16x32xf32>
    %c0_29 = arith.constant 0 : index
    %c0_30 = arith.constant 0 : index
    %c0_31 = arith.constant 0 : index
    %84 = vector.load %arg7[%c0_29, %c0_30, %c0_31] : memref<8x16x32xf32, #tpu.memory_space<vmem>>, vector<8x16x32xf32>
    tpu.vector_store %arg7[%c0_29, %c0_30, %c0_31], %83 {strides = array<i32>} : memref<8x16x32xf32, #tpu.memory_space<vmem>>, vector<8x16x32xf32>,
    return
  }
  func.func @transform_0(%arg0: i32) -> (i32, i32, i32) {
    %c0_i32 = arith.constant 0 : i32
    %c0_i32_0 = arith.constant 0 : i32
    %c0_i32_1 = arith.constant 0 : i32
    return %arg0, %c0_i32, %c0_i32_0 : i32, i32, i32
  }
  func.func @transform_1(%arg0: i32) -> (i32, i32) {
    %c0_i32 = arith.constant 0 : i32
    %c0_i32_0 = arith.constant 0 : i32
    %c0_i32_1 = arith.constant 0 : i32
    return %c0_i32, %c0_i32_0 : i32, i32
  }
  func.func @transform_2(%arg0: i32) -> (i32, i32) {
    %c0_i32 = arith.constant 0 : i32
    %c0_i32_0 = arith.constant 0 : i32
    %c0_i32_1 = arith.constant 0 : i32
    return %c0_i32, %c0_i32_0 : i32, i32
  }
  func.func @transform_3(%arg0: i32) -> (i32, i32, i32) {
    %c0_i32 = arith.constant 0 : i32
    %c0_i32_0 = arith.constant 0 : i32
    %c0_i32_1 = arith.constant 0 : i32
    %c0_i32_2 = arith.constant 0 : i32
    return %c0_i32, %c0_i32_0, %c0_i32_1 : i32, i32, i32
  }
  func.func @transform_4(%arg0: i32) -> (i32, i32) {
    %c0_i32 = arith.constant 0 : i32
    %c0_i32_0 = arith.constant 0 : i32
    %c0_i32_1 = arith.constant 0 : i32
    return %c0_i32, %c0_i32_0 : i32, i32
  }
  func.func @transform_5(%arg0: i32) -> (i32, i32, i32, i32) {
    %c0_i32 = arith.constant 0 : i32
    %c0_i32_0 = arith.constant 0 : i32
    %c0_i32_1 = arith.constant 0 : i32
    %c0_i32_2 = arith.constant 0 : i32
    %c0_i32_3 = arith.constant 0 : i32
    return %c0_i32, %c0_i32_0, %c0_i32_1, %c0_i32_2 : i32, i32, i32, i32
  }
  func.func @transform_6(%arg0: i32) -> (i32, i32, i32) {
    %c0_i32 = arith.constant 0 : i32
    %c0_i32_0 = arith.constant 0 : i32
    %c0_i32_1 = arith.constant 0 : i32
    return %arg0, %c0_i32, %c0_i32_0 : i32, i32, i32
  }
}

</mosaic_0001>

<llo_original>
// kernel: tpu_custom_call.1
$region0: #{tpu_custom_call.1}
  #allocation0 [shape = 'u32[]', space=smem, size = 0x4, offset = 0x4, fixed_abs, tag = 'smem constant byte address 0x4 - core index']
  #allocation1 [shape = 'u32[144,128]{1,0:T(1,128)}', space=vmem, size = 0x12000, scoped, tag = 'internal scratch']
  %s0 = inlined_call_operand.vmem [shape: bf16[64,16,32], index: 0, kind: input, shape index: {}]
  %s1 = inlined_call_operand.vmem [shape: bf16[32,96], index: 1, kind: input, shape index: {}]
  %s2 = inlined_call_operand.vmem [shape: f32[1,96], index: 2, kind: input, shape index: {}]
  %s3 = inlined_call_operand.vmem [shape: bf16[4,8,32], index: 3, kind: input, shape index: {}]
  %s4 = inlined_call_operand.vmem [shape: f32[1,32], index: 4, kind: input, shape index: {}]
  %s5 = inlined_call_operand.vmem [shape: f32[4,1,16,16], index: 5, kind: input, shape index: {}]
  %s6 = inlined_call_operand.vmem [shape: f32[64,16,32], index: 6, kind: output, shape index: {}]
  %s7 = sld [smem:[#allocation0]]
  $region57: #{tpu_custom_call.1} parent=0
    _
  %s9 = ssub.s32 1, %s7
  %s10 = scalar_select 0, %s9, %s7
  loop: start=0, step=1, limit=10
  $region2: #{tpu_custom_call.1} parent=0 // loop_pre_header
    _
  $region3: #{tpu_custom_call.1} parent=0 // loop_header
    %s12 = sphi 0, %s16
    %p13 = scmp.ge.s32.totalorder %s12, 10
    %s22 = sphi 0, %s24
    %s25 = sphi 0, %s22
    %s26 = sphi 0, %s25
    %s42 = sphi 0, %s26
    %s46 = sphi 0, %s46
    %s48 = sphi 0, %s46
    %s49 = sphi 0, %s48
    %s63 = sphi 0, %s49
    %s67 = sphi 0, %s67
    %s69 = sphi 0, %s67
    %s70 = sphi 0, %s69
    %s84 = sphi 0, %s70
    %s88 = sphi 0, %s88
    %s90 = sphi 0, %s88
    %s91 = sphi 0, %s90
    %s105 = sphi 0, %s91
    %s109 = sphi 0, %s109
    %s111 = sphi 0, %s109
    %s112 = sphi 0, %s111
    %s126 = sphi 0, %s112
    %s130 = sphi 0, %s130
    %s132 = sphi 0, %s130
    %s133 = sphi 0, %s132
    %s147 = sphi 0, %s133
    %s153 = sphi 0, %s155
    %s156 = sphi 0, %s153
    %s157 = sphi 0, %s156
    %s173 = sphi 0, %s157
  $region4: #{tpu_custom_call.1} parent=0 // loop_header_branch
    %15 = sbr.rel (%p13) target = $region8
  $region5: #{tpu_custom_call.1} parent=0 // loop_body
    %s17 = ssub.s32 %s12, 1
    %s18 = ssub.s32 %s12, 2
    %s19 = sadd.s32 %s12, 1
    %s20 = ssub.s32 %s12, %s19
    %p21 = scmp.eq.s32.totalorder %s20, 0
    %s23 = sadd.s32 %s22, 1
    %s24 = scalar_select %p21, %s22, %s23
    %p27 = pneg %p21
    %p28 = scmp.eq.s32.totalorder %s12, 7
    %p29 = por %p27, %p28
    %p30 = scmp.ne.s32.totalorder %s22, %s25
    %p31 = scmp.eq.s32.totalorder %s12, 0
    %p32 = por %p30, %p31
    %p33 = scmp.ne.s32.totalorder %s22, %s25
    %p34 = scmp.eq.s32.totalorder %s17, 7
    %p35 = por %p33, %p34
    %p36 = scmp.ne.s32.totalorder %s25, %s26
    %p37 = scmp.eq.s32.totalorder %s17, 0
    %p38 = por %p36, %p37
    %p39 = scmp.ne.s32.totalorder %s25, %s26
    %p40 = scmp.eq.s32.totalorder %s18, 7
    %p41 = por %p39, %p40
    %p43 = scmp.ne.s32.totalorder %s26, %s42
    %p44 = scmp.eq.s32.totalorder %s18, 0
    %p45 = por %p43, %p44
    %s47 = sadd.s32 %s46, 1
    %p50 = scmp.eq.s32.totalorder %s12, 7
    %p51 = scmp.ne.s32.totalorder %s46, %s48
    %p52 = scmp.eq.s32.totalorder %s12, 0
    %p53 = por %p51, %p52
    %p54 = scmp.ne.s32.totalorder %s46, %s48
    %p55 = scmp.eq.s32.totalorder %s17, 7
    %p56 = por %p54, %p55
    %p57 = scmp.ne.s32.totalorder %s48, %s49
    %p58 = scmp.eq.s32.totalorder %s17, 0
    %p59 = por %p57, %p58
    %p60 = scmp.ne.s32.totalorder %s48, %s49
    %p61 = scmp.eq.s32.totalorder %s18, 7
    %p62 = por %p60, %p61
    %p64 = scmp.ne.s32.totalorder %s49, %s63
    %p65 = scmp.eq.s32.totalorder %s18, 0
    %p66 = por %p64, %p65
    %s68 = sadd.s32 %s67, 1
    %p71 = scmp.eq.s32.totalorder %s12, 7
    %p72 = scmp.ne.s32.totalorder %s67, %s69
    %p73 = scmp.eq.s32.totalorder %s12, 0
    %p74 = por %p72, %p73
    %p75 = scmp.ne.s32.totalorder %s67, %s69
    %p76 = scmp.eq.s32.totalorder %s17, 7
    %p77 = por %p75, %p76
    %p78 = scmp.ne.s32.totalorder %s69, %s70
    %p79 = scmp.eq.s32.totalorder %s17, 0
    %p80 = por %p78, %p79
    %p81 = scmp.ne.s32.totalorder %s69, %s70
    %p82 = scmp.eq.s32.totalorder %s18, 7
    %p83 = por %p81, %p82
    %p85 = scmp.ne.s32.totalorder %s70, %s84
    %p86 = scmp.eq.s32.totalorder %s18, 0
    %p87 = por %p85, %p86
    %s89 = sadd.s32 %s88, 1
    %p92 = scmp.eq.s32.totalorder %s12, 7
    %p93 = scmp.ne.s32.totalorder %s88, %s90
    %p94 = scmp.eq.s32.totalorder %s12, 0
    %p95 = por %p93, %p94
    %p96 = scmp.ne.s32.totalorder %s88, %s90
    %p97 = scmp.eq.s32.totalorder %s17, 7
    %p98 = por %p96, %p97
    %p99 = scmp.ne.s32.totalorder %s90, %s91
    %p100 = scmp.eq.s32.totalorder %s17, 0
    %p101 = por %p99, %p100
    %p102 = scmp.ne.s32.totalorder %s90, %s91
    %p103 = scmp.eq.s32.totalorder %s18, 7
    %p104 = por %p102, %p103
    %p106 = scmp.ne.s32.totalorder %s91, %s105
    %p107 = scmp.eq.s32.totalorder %s18, 0
    %p108 = por %p106, %p107
    %s110 = sadd.s32 %s109, 1
    %p113 = scmp.eq.s32.totalorder %s12, 7
    %p114 = scmp.ne.s32.totalorder %s109, %s111
    %p115 = scmp.eq.s32.totalorder %s12, 0
    %p116 = por %p114, %p115
    %p117 = scmp.ne.s32.totalorder %s109, %s111
    %p118 = scmp.eq.s32.totalorder %s17, 7
    %p119 = por %p117, %p118
    %p120 = scmp.ne.s32.totalorder %s111, %s112
    %p121 = scmp.eq.s32.totalorder %s17, 0
    %p122 = por %p120, %p121
    %p123 = scmp.ne.s32.totalorder %s111, %s112
    %p124 = scmp.eq.s32.totalorder %s18, 7
    %p125 = por %p123, %p124
    %p127 = scmp.ne.s32.totalorder %s112, %s126
    %p128 = scmp.eq.s32.totalorder %s18, 0
    %p129 = por %p127, %p128
    %s131 = sadd.s32 %s130, 1
    %p134 = scmp.eq.s32.totalorder %s12, 7
    %p135 = scmp.ne.s32.totalorder %s130, %s132
    %p136 = scmp.eq.s32.totalorder %s12, 0
    %p137 = por %p135, %p136
    %p138 = scmp.ne.s32.totalorder %s130, %s132
    %p139 = scmp.eq.s32.totalorder %s17, 7
    %p140 = por %p138, %p139
    %p141 = scmp.ne.s32.totalorder %s132, %s133
    %p142 = scmp.eq.s32.totalorder %s17, 0
    %p143 = por %p141, %p142
    %p144 = scmp.ne.s32.totalorder %s132, %s133
    %p145 = scmp.eq.s32.totalorder %s18, 7
    %p146 = por %p144, %p145
    %p148 = scmp.ne.s32.totalorder %s133, %s147
    %p149 = scmp.eq.s32.totalorder %s18, 0
    %p150 = por %p148, %p149
    %s151 = ssub.s32 %s12, %s19
    %p152 = scmp.eq.s32.totalorder %s151, 0
    %s154 = sadd.s32 %s153, 1
    %s155 = scalar_select %p152, %s153, %s154
    %p158 = pneg %p152
    %p159 = scmp.eq.s32.totalorder %s12, 7
    %p160 = por %p158, %p159
    %p161 = scmp.ne.s32.totalorder %s153, %s156
    %p162 = scmp.eq.s32.totalorder %s12, 0
    %p163 = por %p161, %p162
    %p164 = scmp.ne.s32.totalorder %s153, %s156
    %p165 = scmp.eq.s32.totalorder %s17, 7
    %p166 = por %p164, %p165
    %p167 = scmp.ne.s32.totalorder %s156, %s157
    %p168 = scmp.eq.s32.totalorder %s17, 0
    %p169 = por %p167, %p168
    %p170 = scmp.ne.s32.totalorder %s156, %s157
    %p171 = scmp.eq.s32.totalorder %s18, 7
    %p172 = por %p170, %p171
    %p174 = scmp.ne.s32.totalorder %s157, %s173
    %p175 = scmp.eq.s32.totalorder %s18, 0
    %p176 = por %p174, %p175
    %p177 = scmp.le.s32.totalorder 1, %s12
    %p178 = scmp.lt.s32.totalorder %s12, 9
    %p179 = pnand %p177, %p178
    %p180 = pneg %p179
    // Predicated region
    $region9: #{tpu_custom_call.1} parent=5 // pred_check
      _
    $region10: #{tpu_custom_call.1} parent=5 // pred_check_branch
      %182 = sbr.rel (%p179) target = $region12
    $region11: #{tpu_custom_call.1} parent=5 // pred_region
      %s183 = ssub.s32 %s12, 1
      // Predicated region
      $region13: #{tpu_custom_call.1} parent=11 // pred_check
        %p184 = pneg %p59
      $region14: #{tpu_custom_call.1} parent=11 // pred_check_branch
        %186 = sbr.rel (%p184) target = $region16
      $region15: #{tpu_custom_call.1} parent=11 // pred_region
        _
      $region16: #{tpu_custom_call.1} parent=11 // pred_fallthru
        _
      // Predicated region
      $region17: #{tpu_custom_call.1} parent=11 // pred_check
        %p187 = pneg %p80
      $region18: #{tpu_custom_call.1} parent=11 // pred_check_branch
        %189 = sbr.rel (%p187) target = $region20
      $region19: #{tpu_custom_call.1} parent=11 // pred_region
        _
      $region20: #{tpu_custom_call.1} parent=11 // pred_fallthru
        _
      // Predicated region
      $region21: #{tpu_custom_call.1} parent=11 // pred_check
        %p190 = pneg %p101
      $region22: #{tpu_custom_call.1} parent=11 // pred_check_branch
        %192 = sbr.rel (%p190) target = $region24
      $region23: #{tpu_custom_call.1} parent=11 // pred_region
        _
      $region24: #{tpu_custom_call.1} parent=11 // pred_fallthru
        _
      // Predicated region
      $region25: #{tpu_custom_call.1} parent=11 // pred_check
        %p193 = pneg %p122
      $region26: #{tpu_custom_call.1} parent=11 // pred_check_branch
        %195 = sbr.rel (%p193) target = $region28
      $region27: #{tpu_custom_call.1} parent=11 // pred_region
        _
      $region28: #{tpu_custom_call.1} parent=11 // pred_fallthru
        _
      // Predicated region
      $region29: #{tpu_custom_call.1} parent=11 // pred_check
        %p196 = pneg %p143
      $region30: #{tpu_custom_call.1} parent=11 // pred_check_branch
        %198 = sbr.rel (%p196) target = $region32
      $region31: #{tpu_custom_call.1} parent=11 // pred_region
        _
      $region32: #{tpu_custom_call.1} parent=11 // pred_fallthru
        _
    $region12: #{tpu_custom_call.1} parent=5 // pred_fallthru
      _
    %p199 = scmp.lt.s32.totalorder %s12, 8
    // Predicated region
    $region33: #{tpu_custom_call.1} parent=5 // pred_check
      %p200 = pneg %p199
    $region34: #{tpu_custom_call.1} parent=5 // pred_check_branch
      %202 = sbr.rel (%p200) target = $region36
    $region35: #{tpu_custom_call.1} parent=5 // pred_region
      // Predicated region
      $region37: #{tpu_custom_call.1} parent=35 // pred_check
        %p203 = pneg %p32
      $region38: #{tpu_custom_call.1} parent=35 // pred_check_branch
        %205 = sbr.rel (%p203) target = $region40
      $region39: #{tpu_custom_call.1} parent=35 // pred_region
        %s206 = smul.u32 8, %s12
        %p207 = scmp.lt.s32.totalorder %s206, 63
        %s208 = scalar_select %p207, %s206, 63
        %s209 = smul.addr %s208, 2
        %s210 = smul.addr %s209, 4
        %s211 = scalar_lea.vmem %s0, %s210
        %s212 = smul.u32 8, %s12
      $region40: #{tpu_custom_call.1} parent=35 // pred_fallthru
        _
    $region36: #{tpu_custom_call.1} parent=5 // pred_fallthru
      _
    %p213 = scmp.le.s32.totalorder 1, %s12
    %p214 = scmp.lt.s32.totalorder %s12, 9
    %p215 = pnand %p213, %p214
    %p216 = pneg %p215
    // Predicated region
    $region41: #{tpu_custom_call.1} parent=5 // pred_check
      _
    $region42: #{tpu_custom_call.1} parent=5 // pred_check_branch
      %218 = sbr.rel (%p215) target = $region44
    $region43: #{tpu_custom_call.1} parent=5 // pred_region
      %s219 = ssub.s32 %s12, 1
      %s220 = smul.u32 8, %s17
      %p221 = scmp.lt.s32.totalorder %s220, 63
      %s222 = scalar_select %p221, %s220, 63
      %s223 = smul.addr %s222, 2
      %s224 = smul.addr %s223, 4
      %s225 = scalar_lea.vmem %s0, %s224
      %p226 = pneg %p38
      %p227 = pneg %p35
      %p228 = pneg %p59
      %p229 = pneg %p56
      %p230 = pneg %p80
      %p231 = pneg %p77
      %p232 = pneg %p101
      %p233 = pneg %p98
      %p234 = pneg %p122
      %p235 = pneg %p119
      %p236 = pneg %p143
      %p237 = pneg %p140
      %p238 = pneg %p169
      %p239 = pneg %p166
      %s240 = smul.u32 8, %s17
      %p241 = scmp.lt.s32.totalorder %s240, 63
      %s242 = scalar_select %p241, %s240, 63
      %s243 = smul.addr %s242, 2
      %s244 = smul.addr %s243, 8
      %s245 = scalar_lea.vmem %s6, %s244
      %s246 = smul.u32 8, %s17
      %p247 = scmp.lt.s32.totalorder %s246, 63
      %s248 = scalar_select %p247, %s246, 63
      %s249 = smul.addr %s248, 2
      %s250 = smul.addr %s249, 4
      %s251 = scalar_lea.vmem %s0, %s250
      %s252 = smul.u32 8, %s17
      %s253 = smul.u32 8, %s17
      %p254 = scmp.lt.s32.totalorder %s253, 63
      %s255 = scalar_select %p254, %s253, 63
      %s256 = smul.addr %s255, 2
      %s257 = smul.addr %s256, 8
      %s258 = scalar_lea.vmem %s6, %s257
      %s259 = smul.u32 8, %s17
      %v261 = vld [vmem:[%s251] sm:$0xf]
      %v262 = vld [vmem:[%s251 + $0x4] sm:$0xf]
      %v263 = vld [vmem:[%s251 + $0x8] sm:$0xf]
      %v264 = vld [vmem:[%s251 + $0xc] sm:$0xf]
      %v265 = vld [vmem:[%s251 + $0x10] sm:$0xf]
      %v266 = vld [vmem:[%s251 + $0x14] sm:$0xf]
      %v267 = vld [vmem:[%s251 + $0x18] sm:$0xf]
      %v268 = vld [vmem:[%s251 + $0x1c] sm:$0xf]
      %v269 = vld [vmem:[%s251 + $0x20] sm:$0xf]
      %v270 = vld [vmem:[%s251 + $0x24] sm:$0xf]
      %v271 = vld [vmem:[%s251 + $0x28] sm:$0xf]
      %v272 = vld [vmem:[%s251 + $0x2c] sm:$0xf]
      %v273 = vld [vmem:[%s251 + $0x30] sm:$0xf]
      %v274 = vld [vmem:[%s251 + $0x34] sm:$0xf]
      %v275 = vld [vmem:[%s251 + $0x38] sm:$0xf]
      %v276 = vld [vmem:[%s251 + $0x3c] sm:$0xf]
      %v277 = vld [vmem:[%s1] sm:$0xf]
      %v278 = vld [vmem:[%s1 + $0x4] sm:$0xf]
      %v279 = vld [vmem:[%s1 + $0x8] sm:$0xf]
      %v280 = vld [vmem:[%s1 + $0xc] sm:$0xf]
      %v281 = vld [vmem:[%s2] sm:$0x1]
      %v283 = vlaneseq
      %v284 = vshrl.u32 %v283, 7
      %v285 = vsub.s32 0, %v284
      %v286 = vrot.slane %v281, %v285
      %v304 = vunpack.c.l.b16 %v261
      %v305 = vunpack.c.l.b16 %v262
      %v306 = vunpack.c.l.b16 %v263
      %v307 = vunpack.c.l.b16 %v264
      %v308 = vunpack.c.l.b16 %v265
      %v309 = vunpack.c.l.b16 %v266
      %v310 = vunpack.c.l.b16 %v267
      %v311 = vunpack.c.l.b16 %v268
      %v312 = vunpack.c.l.b16 %v269
      %v313 = vunpack.c.l.b16 %v270
      %v314 = vunpack.c.l.b16 %v271
      %v315 = vunpack.c.l.b16 %v272
      %v316 = vunpack.c.l.b16 %v273
      %v317 = vunpack.c.l.b16 %v274
      %v318 = vunpack.c.l.b16 %v275
      %v319 = vunpack.c.l.b16 %v276
      %v320 = vpack.c.b16 %v305, %v304
      %v321 = vpack.c.b16 %v307, %v306
      %v322 = vpack.c.b16 %v309, %v308
      %v323 = vpack.c.b16 %v311, %v310
      %v324 = vpack.c.b16 %v313, %v312
      %v325 = vpack.c.b16 %v315, %v314
      %v326 = vpack.c.b16 %v317, %v316
      %v327 = vpack.c.b16 %v319, %v318
      %v332 = vunpack.c.l.b16 %v277
      %v333 = vunpack.c.l.b16 %v278
      %v334 = vunpack.c.l.b16 %v279
      %v335 = vunpack.c.l.b16 %v280
      %v336 = vpack.c.b16 %v333, %v332
      %v337 = vpack.c.b16 %v335, %v334
      %vm340 = vcmask 261120
      %v342 = vsel %vm340, %v320, 0
      %v345 = vsel %vm340, %v321, 0
      %v348 = vsel %vm340, %v322, 0
      %v351 = vsel %vm340, %v323, 0
      %v354 = vsel %vm340, %v324, 0
      %v357 = vsel %vm340, %v325, 0
      %v360 = vsel %vm340, %v326, 0
      %v363 = vsel %vm340, %v327, 0
      %365 = vmatprep.subr.bf16.mxu0 0
      %366 = vmatpush1.bf16.msra.mxu0 %v336
      %367 = vmatprep.subr.bf16.mxu0 0
      %368 = vmatpush1.bf16.msra.mxu0 %v337
      %369 = vmatprep.subr.bf16.mxu0 0
      %370 = vmatpush1.bf16.msra.mxu0 0
      %371 = vmatprep.subr.bf16.mxu0 0
      %372 = vmatpush1.bf16.msra.mxu0 0
      %373 = vmatprep.subr.bf16.mxu0 0
      %374 = vmatpush1.bf16.msra.mxu0 0
      %375 = vmatprep.subr.bf16.mxu0 0
      %376 = vmatpush1.bf16.msra.mxu0 0
      %377 = vmatprep.subr.bf16.mxu0 0
      %378 = vmatpush1.bf16.msra.mxu0 0
      %379 = vmatprep.subr.bf16.mxu0 0
      %380 = vmatpush1.bf16.msra.mxu0 0
      %381 = vmatprep.subr.bf16.mxu0 0
      %382 = vmatpush1.bf16.msra.mxu0 0
      %383 = vmatprep.subr.bf16.mxu0 0
      %384 = vmatpush1.bf16.msra.mxu0 0
      %385 = vmatprep.subr.bf16.mxu0 0
      %386 = vmatpush1.bf16.msra.mxu0 0
      %387 = vmatprep.subr.bf16.mxu0 0
      %388 = vmatpush1.bf16.msra.mxu0 0
      %389 = vmatprep.subr.bf16.mxu0 0
      %390 = vmatpush1.bf16.msra.mxu0 0
      %391 = vmatprep.subr.bf16.mxu0 0
      %392 = vmatpush1.bf16.msra.mxu0 0
      %393 = vmatprep.subr.bf16.mxu0 0
      %394 = vmatpush1.bf16.msra.mxu0 0
      %395 = vmatprep.subr.bf16.mxu0 0
      %396 = vmatpush1.bf16.msra.mxu0 0
      %397 = vmatprep.mubr.bf16.mxu0 0
      %398 = vmatmul.mubr.bf16.gmra.mrb[0].mxu0 %v342
      %v399 = vpop.f32.mrb[0].mxu0
      %v400 = vadd.f32 %v286, %v399
      %v401 = vpop.f32.mrb[0].mxu0
      %v402 = vpop.f32.mrb[0].mxu0
      %v403 = vadd.f32 %v286, %v402
      %v404 = vpop.f32.mrb[0].mxu0
      %405 = vmatprep.mubr.bf16.mxu0 0
      %406 = vmatmul.mubr.bf16.gmra.mrb[0].mxu0 %v345
      %v407 = vpop.f32.mrb[0].mxu0
      %v408 = vadd.f32 %v286, %v407
      %v409 = vpop.f32.mrb[0].mxu0
      %v410 = vpop.f32.mrb[0].mxu0
      %v411 = vadd.f32 %v286, %v410
      %v412 = vpop.f32.mrb[0].mxu0
      %413 = vmatprep.mubr.bf16.mxu0 0
      %414 = vmatmul.mubr.bf16.gmra.mrb[0].mxu0 %v348
      %v415 = vpop.f32.mrb[0].mxu0
      %v416 = vadd.f32 %v286, %v415
      %v417 = vpop.f32.mrb[0].mxu0
      %v418 = vpop.f32.mrb[0].mxu0
      %v419 = vadd.f32 %v286, %v418
      %v420 = vpop.f32.mrb[0].mxu0
      %421 = vmatprep.mubr.bf16.mxu0 0
      %422 = vmatmul.mubr.bf16.gmra.mrb[0].mxu0 %v351
      %v423 = vpop.f32.mrb[0].mxu0
      %v424 = vadd.f32 %v286, %v423
      %v425 = vpop.f32.mrb[0].mxu0
      %v426 = vpop.f32.mrb[0].mxu0
      %v427 = vadd.f32 %v286, %v426
      %v428 = vpop.f32.mrb[0].mxu0
      %429 = vmatprep.mubr.bf16.mxu0 0
      %430 = vmatmul.mubr.bf16.gmra.mrb[0].mxu0 %v354
      %v431 = vpop.f32.mrb[0].mxu0
      %v432 = vadd.f32 %v286, %v431
      %v433 = vpop.f32.mrb[0].mxu0
      %v434 = vpop.f32.mrb[0].mxu0
      %v435 = vadd.f32 %v286, %v434
      %v436 = vpop.f32.mrb[0].mxu0
      %437 = vmatprep.mubr.bf16.mxu0 0
      %438 = vmatmul.mubr.bf16.gmra.mrb[0].mxu0 %v357
      %v439 = vpop.f32.mrb[0].mxu0
      %v440 = vadd.f32 %v286, %v439
      %v441 = vpop.f32.mrb[0].mxu0
      %v442 = vpop.f32.mrb[0].mxu0
      %v443 = vadd.f32 %v286, %v442
      %v444 = vpop.f32.mrb[0].mxu0
      %445 = vmatprep.mubr.bf16.mxu0 0
      %446 = vmatmul.mubr.bf16.gmra.mrb[0].mxu0 %v360
      %v447 = vpop.f32.mrb[0].mxu0
      %v448 = vadd.f32 %v286, %v447
      %v449 = vpop.f32.mrb[0].mxu0
      %v450 = vpop.f32.mrb[0].mxu0
      %v451 = vadd.f32 %v286, %v450
      %v452 = vpop.f32.mrb[0].mxu0
      %453 = vmatprep.mubr.bf16.mxu0 0
      %454 = vmatmul.mubr.bf16.gmra.mrb[0].mxu0 %v363
      %v455 = vpop.f32.mrb[0].mxu0
      %v456 = vadd.f32 %v286, %v455
      %v457 = vpop.f32.mrb[0].mxu0
      %v458 = vpop.f32.mrb[0].mxu0
      %v459 = vadd.f32 %v286, %v458
      %v460 = vpop.f32.mrb[0].mxu0
      %461 = vdwg.mxu0
      %478 = vrot.lane.b32.xlu0 %v400, 120
      %v479 = vpop.permute.xlu0 %478
      %480 = vrot.lane.b32.xlu0 %v403, 120
      %v481 = vpop.permute.xlu0 %480
      %482 = vrot.lane.b32.xlu0 %v408, 120
      %v483 = vpop.permute.xlu0 %482
      %484 = vrot.lane.b32.xlu0 %v411, 120
      %v485 = vpop.permute.xlu0 %484
      %486 = vrot.lane.b32.xlu0 %v416, 120
      %v487 = vpop.permute.xlu0 %486
      %488 = vrot.lane.b32.xlu0 %v419, 120
      %v489 = vpop.permute.xlu0 %488
      %490 = vrot.lane.b32.xlu0 %v424, 120
      %v491 = vpop.permute.xlu0 %490
      %492 = vrot.lane.b32.xlu0 %v427, 120
      %v493 = vpop.permute.xlu0 %492
      %494 = vrot.lane.b32.xlu0 %v432, 120
      %v495 = vpop.permute.xlu0 %494
      %496 = vrot.lane.b32.xlu0 %v435, 120
      %v497 = vpop.permute.xlu0 %496
      %498 = vrot.lane.b32.xlu0 %v440, 120
      %v499 = vpop.permute.xlu0 %498
      %500 = vrot.lane.b32.xlu0 %v443, 120
      %v501 = vpop.permute.xlu0 %500
      %502 = vrot.lane.b32.xlu0 %v448, 120
      %v503 = vpop.permute.xlu0 %502
      %504 = vrot.lane.b32.xlu0 %v451, 120
      %v505 = vpop.permute.xlu0 %504
      %506 = vrot.lane.b32.xlu0 %v456, 120
      %v507 = vpop.permute.xlu0 %506
      %508 = vrot.lane.b32.xlu0 %v459, 120
      %v509 = vpop.permute.xlu0 %508
      %526 = vrot.lane.b32.xlu0 %v400, 112
      %v527 = vpop.permute.xlu0 %526
      %528 = vrot.lane.b32.xlu0 %v403, 112
      %v529 = vpop.permute.xlu0 %528
      %530 = vrot.lane.b32.xlu0 %v408, 112
      %v531 = vpop.permute.xlu0 %530
      %532 = vrot.lane.b32.xlu0 %v411, 112
      %v533 = vpop.permute.xlu0 %532
      %534 = vrot.lane.b32.xlu0 %v416, 112
      %v535 = vpop.permute.xlu0 %534
      %536 = vrot.lane.b32.xlu0 %v419, 112
      %v537 = vpop.permute.xlu0 %536
      %538 = vrot.lane.b32.xlu0 %v424, 112
      %v539 = vpop.permute.xlu0 %538
      %540 = vrot.lane.b32.xlu0 %v427, 112
      %v541 = vpop.permute.xlu0 %540
      %542 = vrot.lane.b32.xlu0 %v432, 112
      %v543 = vpop.permute.xlu0 %542
      %544 = vrot.lane.b32.xlu0 %v435, 112
      %v545 = vpop.permute.xlu0 %544
      %546 = vrot.lane.b32.xlu0 %v440, 112
      %v547 = vpop.permute.xlu0 %546
      %548 = vrot.lane.b32.xlu0 %v443, 112
      %v549 = vpop.permute.xlu0 %548
      %550 = vrot.lane.b32.xlu0 %v448, 112
      %v551 = vpop.permute.xlu0 %550
      %552 = vrot.lane.b32.xlu0 %v451, 112
      %v553 = vpop.permute.xlu0 %552
      %554 = vrot.lane.b32.xlu0 %v456, 112
      %v555 = vpop.permute.xlu0 %554
      %556 = vrot.lane.b32.xlu0 %v459, 112
      %v557 = vpop.permute.xlu0 %556
      %574 = vrot.lane.b32.xlu0 %v400, 104
      %v575 = vpop.permute.xlu0 %574
      %576 = vrot.lane.b32.xlu0 %v403, 104
      %v577 = vpop.permute.xlu0 %576
      %578 = vrot.lane.b32.xlu0 %v408, 104
      %v579 = vpop.permute.xlu0 %578
      %580 = vrot.lane.b32.xlu0 %v411, 104
      %v581 = vpop.permute.xlu0 %580
      %582 = vrot.lane.b32.xlu0 %v416, 104
      %v583 = vpop.permute.xlu0 %582
      %584 = vrot.lane.b32.xlu0 %v419, 104
      %v585 = vpop.permute.xlu0 %584
      %586 = vrot.lane.b32.xlu0 %v424, 104
      %v587 = vpop.permute.xlu0 %586
      %588 = vrot.lane.b32.xlu0 %v427, 104
      %v589 = vpop.permute.xlu0 %588
      %590 = vrot.lane.b32.xlu0 %v432, 104
      %v591 = vpop.permute.xlu0 %590
      %592 = vrot.lane.b32.xlu0 %v435, 104
      %v593 = vpop.permute.xlu0 %592
      %594 = vrot.lane.b32.xlu0 %v440, 104
      %v595 = vpop.permute.xlu0 %594
      %596 = vrot.lane.b32.xlu0 %v443, 104
      %v597 = vpop.permute.xlu0 %596
      %598 = vrot.lane.b32.xlu0 %v448, 104
      %v599 = vpop.permute.xlu0 %598
      %600 = vrot.lane.b32.xlu0 %v451, 104
      %v601 = vpop.permute.xlu0 %600
      %602 = vrot.lane.b32.xlu0 %v456, 104
      %v603 = vpop.permute.xlu0 %602
      %604 = vrot.lane.b32.xlu0 %v459, 104
      %v605 = vpop.permute.xlu0 %604
      %v622 = vpack.c.bf16 %v403, %v400
      %v623 = vpack.c.bf16 %v411, %v408
      %v624 = vpack.c.bf16 %v419, %v416
      %v625 = vpack.c.bf16 %v427, %v424
      %v626 = vpack.c.bf16 %v435, %v432
      %v627 = vpack.c.bf16 %v443, %v440
      %v628 = vpack.c.bf16 %v451, %v448
      %v629 = vpack.c.bf16 %v459, %v456
      %v630 = vpack.c.bf16 %v481, %v479
      %v631 = vpack.c.bf16 %v485, %v483
      %v632 = vpack.c.bf16 %v489, %v487
      %v633 = vpack.c.bf16 %v493, %v491
      %v634 = vpack.c.bf16 %v497, %v495
      %v635 = vpack.c.bf16 %v501, %v499
      %v636 = vpack.c.bf16 %v505, %v503
      %v637 = vpack.c.bf16 %v509, %v507
      %v638 = vpack.c.bf16 %v529, %v527
      %v639 = vpack.c.bf16 %v533, %v531
      %v640 = vpack.c.bf16 %v537, %v535
      %v641 = vpack.c.bf16 %v541, %v539
      %v642 = vpack.c.bf16 %v545, %v543
      %v643 = vpack.c.bf16 %v549, %v547
      %v644 = vpack.c.bf16 %v553, %v551
      %v645 = vpack.c.bf16 %v557, %v555
      %v646 = vpack.c.bf16 %v577, %v575
      %v647 = vpack.c.bf16 %v581, %v579
      %v648 = vpack.c.bf16 %v585, %v583
      %v649 = vpack.c.bf16 %v589, %v587
      %v650 = vpack.c.bf16 %v593, %v591
      %v651 = vpack.c.bf16 %v597, %v595
      %v652 = vpack.c.bf16 %v601, %v599
      %v653 = vpack.c.bf16 %v605, %v603
      %655 = vrot.lane.b32.xlu0 %v622, 96
      %v656 = vpop.permute.xlu0 %655
      %vm657 = vcmask 64512
      %v659 = vsel %vm657, %v622, 0
      %v662 = vsel %vm657, %v656, 0
      %664 = vmatprep.subr.bf16.mxu0 0
      %665 = vmatpush1.bf16.xpose.msra.mxu0 %v662
      %666 = vmatprep.subr.bf16.mxu0 0
      %667 = vmatpush1.bf16.xpose.msra.mxu0 0
      %668 = vmatprep.subr.bf16.mxu0 0
      %669 = vmatpush1.bf16.xpose.msra.mxu0 0
      %670 = vmatprep.subr.bf16.mxu0 0
      %671 = vmatpush1.bf16.xpose.msra.mxu0 0
      %672 = vmatprep.subr.bf16.mxu0 0
      %673 = vmatpush1.bf16.xpose.msra.mxu0 0
      %674 = vmatprep.subr.bf16.mxu0 0
      %675 = vmatpush1.bf16.xpose.msra.mxu0 0
      %676 = vmatprep.subr.bf16.mxu0 0
      %677 = vmatpush1.bf16.xpose.msra.mxu0 0
      %678 = vmatprep.subr.bf16.mxu0 0
      %679 = vmatpush1.bf16.xpose.msra.mxu0 0
      %680 = vmatprep.subr.bf16.mxu0 0
      %681 = vmatpush1.bf16.xpose.msra.mxu0 0
      %682 = vmatprep.subr.bf16.mxu0 0
      %683 = vmatpush1.bf16.xpose.msra.mxu0 0
      %684 = vmatprep.subr.bf16.mxu0 0
      %685 = vmatpush1.bf16.xpose.msra.mxu0 0
      %686 = vmatprep.subr.bf16.mxu0 0
      %687 = vmatpush1.bf16.xpose.msra.mxu0 0
      %688 = vmatprep.subr.bf16.mxu0 0
      %689 = vmatpush1.bf16.xpose.msra.mxu0 0
      %690 = vmatprep.subr.bf16.mxu0 0
      %691 = vmatpush1.bf16.xpose.msra.mxu0 0
      %692 = vmatprep.subr.bf16.mxu0 0
      %693 = vmatpush1.bf16.xpose.msra.mxu0 0
      %694 = vmatprep.subr.bf16.mxu0 0
      %695 = vmatpush1.bf16.xpose.msra.mxu0 0
      %696 = vmatprep.mubr.bf16.mxu0 0
      %697 = vmatmul.mubr.bf16.gmra.mrb[0].mxu0 %v659
      %v698 = vpop.f32.mrb[0].mxu0
      %v699 = vadd.f32 0.0, %v698
      %v700 = vpop.f32.mrb[0].mxu0
      %v701 = vpop.f32.mrb[0].mxu0
      %v702 = vadd.f32 0.0, %v701
      %v703 = vpop.f32.mrb[0].mxu0
      %704 = vdwg.mxu0
      %706 = vrot.lane.b32.xlu0 %v623, 96
      %v707 = vpop.permute.xlu0 %706
      %v709 = vsel %vm657, %v623, 0
      %v712 = vsel %vm657, %v707, 0
      %714 = vmatprep.subr.bf16.mxu0 0
      %715 = vmatpush1.bf16.xpose.msra.mxu0 %v712
      %716 = vmatprep.subr.bf16.mxu0 0
      %717 = vmatpush1.bf16.xpose.msra.mxu0 0
      %718 = vmatprep.subr.bf16.mxu0 0
      %719 = vmatpush1.bf16.xpose.msra.mxu0 0
      %720 = vmatprep.subr.bf16.mxu0 0
      %721 = vmatpush1.bf16.xpose.msra.mxu0 0
      %722 = vmatprep.subr.bf16.mxu0 0
      %723 = vmatpush1.bf16.xpose.msra.mxu0 0
      %724 = vmatprep.subr.bf16.mxu0 0
      %725 = vmatpush1.bf16.xpose.msra.mxu0 0
      %726 = vmatprep.subr.bf16.mxu0 0
      %727 = vmatpush1.bf16.xpose.msra.mxu0 0
      %728 = vmatprep.subr.bf16.mxu0 0
      %729 = vmatpush1.bf16.xpose.msra.mxu0 0
      %730 = vmatprep.subr.bf16.mxu0 0
      %731 = vmatpush1.bf16.xpose.msra.mxu0 0
      %732 = vmatprep.subr.bf16.mxu0 0
      %733 = vmatpush1.bf16.xpose.msra.mxu0 0
      %734 = vmatprep.subr.bf16.mxu0 0
      %735 = vmatpush1.bf16.xpose.msra.mxu0 0
      %736 = vmatprep.subr.bf16.mxu0 0
      %737 = vmatpush1.bf16.xpose.msra.mxu0 0
      %738 = vmatprep.subr.bf16.mxu0 0
      %739 = vmatpush1.bf16.xpose.msra.mxu0 0
      %740 = vmatprep.subr.bf16.mxu0 0
      %741 = vmatpush1.bf16.xpose.msra.mxu0 0
      %742 = vmatprep.subr.bf16.mxu0 0
      %743 = vmatpush1.bf16.xpose.msra.mxu0 0
      %744 = vmatprep.subr.bf16.mxu0 0
      %745 = vmatpush1.bf16.xpose.msra.mxu0 0
      %746 = vmatprep.mubr.bf16.mxu0 0
      %747 = vmatmul.mubr.bf16.gmra.mrb[0].mxu0 %v709
      %v748 = vpop.f32.mrb[0].mxu0
      %v749 = vadd.f32 0.0, %v748
      %v750 = vpop.f32.mrb[0].mxu0
      %v751 = vpop.f32.mrb[0].mxu0
      %v752 = vadd.f32 0.0, %v751
      %v753 = vpop.f32.mrb[0].mxu0
      %754 = vdwg.mxu0
      %756 = vrot.lane.b32.xlu0 %v624, 96
      %v757 = vpop.permute.xlu0 %756
      %v759 = vsel %vm657, %v624, 0
      %v762 = vsel %vm657, %v757, 0
      %764 = vmatprep.subr.bf16.mxu0 0
      %765 = vmatpush1.bf16.xpose.msra.mxu0 %v762
      %766 = vmatprep.subr.bf16.mxu0 0
      %767 = vmatpush1.bf16.xpose.msra.mxu0 0
      %768 = vmatprep.subr.bf16.mxu0 0
      %769 = vmatpush1.bf16.xpose.msra.mxu0 0
      %770 = vmatprep.subr.bf16.mxu0 0
      %771 = vmatpush1.bf16.xpose.msra.mxu0 0
      %772 = vmatprep.subr.bf16.mxu0 0
      %773 = vmatpush1.bf16.xpose.msra.mxu0 0
      %774 = vmatprep.subr.bf16.mxu0 0
      %775 = vmatpush1.bf16.xpose.msra.mxu0 0
      %776 = vmatprep.subr.bf16.mxu0 0
      %777 = vmatpush1.bf16.xpose.msra.mxu0 0
      %778 = vmatprep.subr.bf16.mxu0 0
      %779 = vmatpush1.bf16.xpose.msra.mxu0 0
      %780 = vmatprep.subr.bf16.mxu0 0
      %781 = vmatpush1.bf16.xpose.msra.mxu0 0
      %782 = vmatprep.subr.bf16.mxu0 0
      %783 = vmatpush1.bf16.xpose.msra.mxu0 0
      %784 = vmatprep.subr.bf16.mxu0 0
      %785 = vmatpush1.bf16.xpose.msra.mxu0 0
      %786 = vmatprep.subr.bf16.mxu0 0
      %787 = vmatpush1.bf16.xpose.msra.mxu0 0
      %788 = vmatprep.subr.bf16.mxu0 0
      %789 = vmatpush1.bf16.xpose.msra.mxu0 0
      %790 = vmatprep.subr.bf16.mxu0 0
      %791 = vmatpush1.bf16.xpose.msra.mxu0 0
      %792 = vmatprep.subr.bf16.mxu0 0
      %793 = vmatpush1.bf16.xpose.msra.mxu0 0
      %794 = vmatprep.subr.bf16.mxu0 0
      %795 = vmatpush1.bf16.xpose.msra.mxu0 0
      %796 = vmatprep.mubr.bf16.mxu0 0
      %797 = vmatmul.mubr.bf16.gmra.mrb[0].mxu0 %v759
      %v798 = vpop.f32.mrb[0].mxu0
      %v799 = vadd.f32 0.0, %v798
      %v800 = vpop.f32.mrb[0].mxu0
      %v801 = vpop.f32.mrb[0].mxu0
      %v802 = vadd.f32 0.0, %v801
      %v803 = vpop.f32.mrb[0].mxu0
      %804 = vdwg.mxu0
      %806 = vrot.lane.b32.xlu0 %v625, 96
      %v807 = vpop.permute.xlu0 %806
      %v809 = vsel %vm657, %v625, 0
      %v812 = vsel %vm657, %v807, 0
      %814 = vmatprep.subr.bf16.mxu0 0
      %815 = vmatpush1.bf16.xpose.msra.mxu0 %v812
      %816 = vmatprep.subr.bf16.mxu0 0
      %817 = vmatpush1.bf16.xpose.msra.mxu0 0
      %818 = vmatprep.subr.bf16.mxu0 0
      %819 = vmatpush1.bf16.xpose.msra.mxu0 0
      %820 = vmatprep.subr.bf16.mxu0 0
      %821 = vmatpush1.bf16.xpose.msra.mxu0 0
      %822 = vmatprep.subr.bf16.mxu0 0
      %823 = vmatpush1.bf16.xpose.msra.mxu0 0
      %824 = vmatprep.subr.bf16.mxu0 0
      %825 = vmatpush1.bf16.xpose.msra.mxu0 0
      %826 = vmatprep.subr.bf16.mxu0 0
      %827 = vmatpush1.bf16.xpose.msra.mxu0 0
      %828 = vmatprep.subr.bf16.mxu0 0
      %829 = vmatpush1.bf16.xpose.msra.mxu0 0
      %830 = vmatprep.subr.bf16.mxu0 0
      %831 = vmatpush1.bf16.xpose.msra.mxu0 0
      %832 = vmatprep.subr.bf16.mxu0 0
      %833 = vmatpush1.bf16.xpose.msra.mxu0 0
      %834 = vmatprep.subr.bf16.mxu0 0
      %835 = vmatpush1.bf16.xpose.msra.mxu0 0
      %836 = vmatprep.subr.bf16.mxu0 0
      %837 = vmatpush1.bf16.xpose.msra.mxu0 0
      %838 = vmatprep.subr.bf16.mxu0 0
      %839 = vmatpush1.bf16.xpose.msra.mxu0 0
      %840 = vmatprep.subr.bf16.mxu0 0
      %841 = vmatpush1.bf16.xpose.msra.mxu0 0
      %842 = vmatprep.subr.bf16.mxu0 0
      %843 = vmatpush1.bf16.xpose.msra.mxu0 0
      %844 = vmatprep.subr.bf16.mxu0 0
      %845 = vmatpush1.bf16.xpose.msra.mxu0 0
      %846 = vmatprep.mubr.bf16.mxu0 0
      %847 = vmatmul.mubr.bf16.gmra.mrb[0].mxu0 %v809
      %v848 = vpop.f32.mrb[0].mxu0
      %v849 = vadd.f32 0.0, %v848
      %v850 = vpop.f32.mrb[0].mxu0
      %v851 = vpop.f32.mrb[0].mxu0
      %v852 = vadd.f32 0.0, %v851
      %v853 = vpop.f32.mrb[0].mxu0
      %854 = vdwg.mxu0
      %856 = vrot.lane.b32.xlu0 %v626, 96
      %v857 = vpop.permute.xlu0 %856
      %v859 = vsel %vm657, %v626, 0
      %v862 = vsel %vm657, %v857, 0
      %864 = vmatprep.subr.bf16.mxu0 0
      %865 = vmatpush1.bf16.xpose.msra.mxu0 %v862
      %866 = vmatprep.subr.bf16.mxu0 0
      %867 = vmatpush1.bf16.xpose.msra.mxu0 0
      %868 = vmatprep.subr.bf16.mxu0 0
      %869 = vmatpush1.bf16.xpose.msra.mxu0 0
      %870 = vmatprep.subr.bf16.mxu0 0
      %871 = vmatpush1.bf16.xpose.msra.mxu0 0
      %872 = vmatprep.subr.bf16.mxu0 0
      %873 = vmatpush1.bf16.xpose.msra.mxu0 0
      %874 = vmatprep.subr.bf16.mxu0 0
      %875 = vmatpush1.bf16.xpose.msra.mxu0 0
      %876 = vmatprep.subr.bf16.mxu0 0
      %877 = vmatpush1.bf16.xpose.msra.mxu0 0
      %878 = vmatprep.subr.bf16.mxu0 0
      %879 = vmatpush1.bf16.xpose.msra.mxu0 0
      %880 = vmatprep.subr.bf16.mxu0 0
      %881 = vmatpush1.bf16.xpose.msra.mxu0 0
      %882 = vmatprep.subr.bf16.mxu0 0
      %883 = vmatpush1.bf16.xpose.msra.mxu0 0
      %884 = vmatprep.subr.bf16.mxu0 0
      %885 = vmatpush1.bf16.xpose.msra.mxu0 0
      %886 = vmatprep.subr.bf16.mxu0 0
      %887 = vmatpush1.bf16.xpose.msra.mxu0 0
      %888 = vmatprep.subr.bf16.mxu0 0
      %889 = vmatpush1.bf16.xpose.msra.mxu0 0
      %890 = vmatprep.subr.bf16.mxu0 0
      %891 = vmatpush1.bf16.xpose.msra.mxu0 0
      %892 = vmatprep.subr.bf16.mxu0 0
      %893 = vmatpush1.bf16.xpose.msra.mxu0 0
      %894 = vmatprep.subr.bf16.mxu0 0
      %895 = vmatpush1.bf16.xpose.msra.mxu0 0
      %896 = vmatprep.mubr.bf16.mxu0 0
      %897 = vmatmul.mubr.bf16.gmra.mrb[0].mxu0 %v859
      %v898 = vpop.f32.mrb[0].mxu0
      %v899 = vadd.f32 0.0, %v898
      %v900 = vpop.f32.mrb[0].mxu0
      %v901 = vpop.f32.mrb[0].mxu0
      %v902 = vadd.f32 0.0, %v901
      %v903 = vpop.f32.mrb[0].mxu0
      %904 = vdwg.mxu0
      %906 = vrot.lane.b32.xlu0 %v627, 96
      %v907 = vpop.permute.xlu0 %906
      %v909 = vsel %vm657, %v627, 0
      %v912 = vsel %vm657, %v907, 0
      %914 = vmatprep.subr.bf16.mxu0 0
      %915 = vmatpush1.bf16.xpose.msra.mxu0 %v912
      %916 = vmatprep.subr.bf16.mxu0 0
      %917 = vmatpush1.bf16.xpose.msra.mxu0 0
      %918 = vmatprep.subr.bf16.mxu0 0
      %919 = vmatpush1.bf16.xpose.msra.mxu0 0
      %920 = vmatprep.subr.bf16.mxu0 0
      %921 = vmatpush1.bf16.xpose.msra.mxu0 0
      %922 = vmatprep.subr.bf16.mxu0 0
      %923 = vmatpush1.bf16.xpose.msra.mxu0 0
      %924 = vmatprep.subr.bf16.mxu0 0
      %925 = vmatpush1.bf16.xpose.msra.mxu0 0
      %926 = vmatprep.subr.bf16.mxu0 0
      %927 = vmatpush1.bf16.xpose.msra.mxu0 0
      %928 = vmatprep.subr.bf16.mxu0 0
      %929 = vmatpush1.bf16.xpose.msra.mxu0 0
      %930 = vmatprep.subr.bf16.mxu0 0
      %931 = vmatpush1.bf16.xpose.msra.mxu0 0
      %932 = vmatprep.subr.bf16.mxu0 0
      %933 = vmatpush1.bf16.xpose.msra.mxu0 0
      %934 = vmatprep.subr.bf16.mxu0 0
      %935 = vmatpush1.bf16.xpose.msra.mxu0 0
      %936 = vmatprep.subr.bf16.mxu0 0
      %937 = vmatpush1.bf16.xpose.msra.mxu0 0
      %938 = vmatprep.subr.bf16.mxu0 0
      %939 = vmatpush1.bf16.xpose.msra.mxu0 0
      %940 = vmatprep.subr.bf16.mxu0 0
      %941 = vmatpush1.bf16.xpose.msra.mxu0 0
      %942 = vmatprep.subr.bf16.mxu0 0
      %943 = vmatpush1.bf16.xpose.msra.mxu0 0
      %944 = vmatprep.subr.bf16.mxu0 0
      %945 = vmatpush1.bf16.xpose.msra.mxu0 0
      %946 = vmatprep.mubr.bf16.mxu0 0
      %947 = vmatmul.mubr.bf16.gmra.mrb[0].mxu0 %v909
      %v948 = vpop.f32.mrb[0].mxu0
      %v949 = vadd.f32 0.0, %v948
      %v950 = vpop.f32.mrb[0].mxu0
      %v951 = vpop.f32.mrb[0].mxu0
      %v952 = vadd.f32 0.0, %v951
      %v953 = vpop.f32.mrb[0].mxu0
      %954 = vdwg.mxu0
      %956 = vrot.lane.b32.xlu0 %v628, 96
      %v957 = vpop.permute.xlu0 %956
      %v959 = vsel %vm657, %v628, 0
      %v962 = vsel %vm657, %v957, 0
      %964 = vmatprep.subr.bf16.mxu0 0
      %965 = vmatpush1.bf16.xpose.msra.mxu0 %v962
      %966 = vmatprep.subr.bf16.mxu0 0
      %967 = vmatpush1.bf16.xpose.msra.mxu0 0
      %968 = vmatprep.subr.bf16.mxu0 0
      %969 = vmatpush1.bf16.xpose.msra.mxu0 0
      %970 = vmatprep.subr.bf16.mxu0 0
      %971 = vmatpush1.bf16.xpose.msra.mxu0 0
      %972 = vmatprep.subr.bf16.mxu0 0
      %973 = vmatpush1.bf16.xpose.msra.mxu0 0
      %974 = vmatprep.subr.bf16.mxu0 0
      %975 = vmatpush1.bf16.xpose.msra.mxu0 0
      %976 = vmatprep.subr.bf16.mxu0 0
      %977 = vmatpush1.bf16.xpose.msra.mxu0 0
      %978 = vmatprep.subr.bf16.mxu0 0
      %979 = vmatpush1.bf16.xpose.msra.mxu0 0
      %980 = vmatprep.subr.bf16.mxu0 0
      %981 = vmatpush1.bf16.xpose.msra.mxu0 0
      %982 = vmatprep.subr.bf16.mxu0 0
      %983 = vmatpush1.bf16.xpose.msra.mxu0 0
      %984 = vmatprep.subr.bf16.mxu0 0
      %985 = vmatpush1.bf16.xpose.msra.mxu0 0
      %986 = vmatprep.subr.bf16.mxu0 0
      %987 = vmatpush1.bf16.xpose.msra.mxu0 0
      %988 = vmatprep.subr.bf16.mxu0 0
      %989 = vmatpush1.bf16.xpose.msra.mxu0 0
      %990 = vmatprep.subr.bf16.mxu0 0
      %991 = vmatpush1.bf16.xpose.msra.mxu0 0
      %992 = vmatprep.subr.bf16.mxu0 0
      %993 = vmatpush1.bf16.xpose.msra.mxu0 0
      %994 = vmatprep.subr.bf16.mxu0 0
      %995 = vmatpush1.bf16.xpose.msra.mxu0 0
      %996 = vmatprep.mubr.bf16.mxu0 0
      %997 = vmatmul.mubr.bf16.gmra.mrb[0].mxu0 %v959
      %v998 = vpop.f32.mrb[0].mxu0
      %v999 = vadd.f32 0.0, %v998
      %v1000 = vpop.f32.mrb[0].mxu0
      %v1001 = vpop.f32.mrb[0].mxu0
      %v1002 = vadd.f32 0.0, %v1001
      %v1003 = vpop.f32.mrb[0].mxu0
      %1004 = vdwg.mxu0
      %1006 = vrot.lane.b32.xlu0 %v629, 96
      %v1007 = vpop.permute.xlu0 %1006
      %v1009 = vsel %vm657, %v629, 0
      %v1012 = vsel %vm657, %v1007, 0
      %1014 = vmatprep.subr.bf16.mxu0 0
      %1015 = vmatpush1.bf16.xpose.msra.mxu0 %v1012
      %1016 = vmatprep.subr.bf16.mxu0 0
      %1017 = vmatpush1.bf16.xpose.msra.mxu0 0
      %1018 = vmatprep.subr.bf16.mxu0 0
      %1019 = vmatpush1.bf16.xpose.msra.mxu0 0
      %1020 = vmatprep.subr.bf16.mxu0 0
      %1021 = vmatpush1.bf16.xpose.msra.mxu0 0
      %1022 = vmatprep.subr.bf16.mxu0 0
      %1023 = vmatpush1.bf16.xpose.msra.mxu0 0
      %1024 = vmatprep.subr.bf16.mxu0 0
      %1025 = vmatpush1.bf16.xpose.msra.mxu0 0
      %1026 = vmatprep.subr.bf16.mxu0 0
      %1027 = vmatpush1.bf16.xpose.msra.mxu0 0
      %1028 = vmatprep.subr.bf16.mxu0 0
      %1029 = vmatpush1.bf16.xpose.msra.mxu0 0
      %1030 = vmatprep.subr.bf16.mxu0 0
      %1031 = vmatpush1.bf16.xpose.msra.mxu0 0
      %1032 = vmatprep.subr.bf16.mxu0 0
      %1033 = vmatpush1.bf16.xpose.msra.mxu0 0
      %1034 = vmatprep.subr.bf16.mxu0 0
      %1035 = vmatpush1.bf16.xpose.msra.mxu0 0
      %1036 = vmatprep.subr.bf16.mxu0 0
      %1037 = vmatpush1.bf16.xpose.msra.mxu0 0
      %1038 = vmatprep.subr.bf16.mxu0 0
      %1039 = vmatpush1.bf16.xpose.msra.mxu0 0
      %1040 = vmatprep.subr.bf16.mxu0 0
      %1041 = vmatpush1.bf16.xpose.msra.mxu0 0
      %1042 = vmatprep.subr.bf16.mxu0 0
      %1043 = vmatpush1.bf16.xpose.msra.mxu0 0
      %1044 = vmatprep.subr.bf16.mxu0 0
      %1045 = vmatpush1.bf16.xpose.msra.mxu0 0
      %1046 = vmatprep.mubr.bf16.mxu0 0
      %1047 = vmatmul.mubr.bf16.gmra.mrb[0].mxu0 %v1009
      %v1048 = vpop.f32.mrb[0].mxu0
      %v1049 = vadd.f32 0.0, %v1048
      %v1050 = vpop.f32.mrb[0].mxu0
      %v1051 = vpop.f32.mrb[0].mxu0
      %v1052 = vadd.f32 0.0, %v1051
      %v1053 = vpop.f32.mrb[0].mxu0
      %1054 = vdwg.mxu0
      %1056 = vrot.lane.b32.xlu0 %v630, 96
      %v1057 = vpop.permute.xlu0 %1056
      %v1059 = vsel %vm657, %v630, 0
      %v1062 = vsel %vm657, %v1057, 0
      %1064 = vmatprep.subr.bf16.mxu0 0
      %1065 = vmatpush1.bf16.xpose.msra.mxu0 %v1062
      %1066 = vmatprep.subr.bf16.mxu0 0
      %1067 = vmatpush1.bf16.xpose.msra.mxu0 0
      %1068 = vmatprep.subr.bf16.mxu0 0
      %1069 = vmatpush1.bf16.xpose.msra.mxu0 0
      %1070 = vmatprep.subr.bf16.mxu0 0
      %1071 = vmatpush1.bf16.xpose.msra.mxu0 0
      %1072 = vmatprep.subr.bf16.mxu0 0
      %1073 = vmatpush1.bf16.xpose.msra.mxu0 0
      %1074 = vmatprep.subr.bf16.mxu0 0
      %1075 = vmatpush1.bf16.xpose.msra.mxu0 0
      %1076 = vmatprep.subr.bf16.mxu0 0
      %1077 = vmatpush1.bf16.xpose.msra.mxu0 0
      %1078 = vmatprep.subr.bf16.mxu0 0
      %1079 = vmatpush1.bf16.xpose.msra.mxu0 0
      %1080 = vmatprep.subr.bf16.mxu0 0
      %1081 = vmatpush1.bf16.xpose.msra.mxu0 0
      %1082 = vmatprep.subr.bf16.mxu0 0
      %1083 = vmatpush1.bf16.xpose.msra.mxu0 0
      %1084 = vmatprep.subr.bf16.mxu0 0
      %1085 = vmatpush1.bf16.xpose.msra.mxu0 0
      %1086 = vmatprep.subr.bf16.mxu0 0
      %1087 = vmatpush1.bf16.xpose.msra.mxu0 0
      %1088 = vmatprep.subr.bf16.mxu0 0
      %1089 = vmatpush1.bf16.xpose.msra.mxu0 0
      %1090 = vmatprep.subr.bf16.mxu0 0
      %1091 = vmatpush1.bf16.xpose.msra.mxu0 0
      %1092 = vmatprep.subr.bf16.mxu0 0
      %1093 = vmatpush1.bf16.xpose.msra.mxu0 0
      %1094 = vmatprep.subr.bf16.mxu0 0
      %1095 = vmatpush1.bf16.xpose.msra.mxu0 0
      %1096 = vmatprep.mubr.bf16.mxu0 0
      %1097 = vmatmul.mubr.bf16.gmra.mrb[0].mxu0 %v1059
      %v1098 = vpop.f32.mrb[0].mxu0
      %v1099 = vadd.f32 0.0, %v1098
      %v1100 = vpop.f32.mrb[0].mxu0
      %v1101 = vpop.f32.mrb[0].mxu0
      %v1102 = vadd.f32 0.0, %v1101
      %v1103 = vpop.f32.mrb[0].mxu0
      %1104 = vdwg.mxu0
      %1106 = vrot.lane.b32.xlu0 %v631, 96
      %v1107 = vpop.permute.xlu0 %1106
      %v1109 = vsel %vm657, %v631, 0
      %v1112 = vsel %vm657, %v1107, 0
      %1114 = vmatprep.subr.bf16.mxu0 0
      %1115 = vmatpush1.bf16.xpose.msra.mxu0 %v1112
      %1116 = vmatprep.subr.bf16.mxu0 0
      %1117 = vmatpush1.bf16.xpose.msra.mxu0 0
      %1118 = vmatprep.subr.bf16.mxu0 0
      %1119 = vmatpush1.bf16.xpose.msra.mxu0 0
      %1120 = vmatprep.subr.bf16.mxu0 0
      %1121 = vmatpush1.bf16.xpose.msra.mxu0 0
      %1122 = vmatprep.subr.bf16.mxu0 0
      %1123 = vmatpush1.bf16.xpose.msra.mxu0 0
      %1124 = vmatprep.subr.bf16.mxu0 0
      %1125 = vmatpush1.bf16.xpose.msra.mxu0 0
      %1126 = vmatprep.subr.bf16.mxu0 0
      %1127 = vmatpush1.bf16.xpose.msra.mxu0 0
      %1128 = vmatprep.subr.bf16.mxu0 0
      %1129 = vmatpush1.bf16.xpose.msra.mxu0 0
      %1130 = vmatprep.subr.bf16.mxu0 0
      %1131 = vmatpush1.bf16.xpose.msra.mxu0 0
      %1132 = vmatprep.subr.bf16.mxu0 0
      %1133 = vmatpush1.bf16.xpose.msra.mxu0 0
      %1134 = vmatprep.subr.bf16.mxu0 0
      %1135 = vmatpush1.bf16.xpose.msra.mxu0 0
      %1136 = vmatprep.subr.bf16.mxu0 0
      %1137 = vmatpush1.bf16.xpose.msra.mxu0 0
      %1138 = vmatprep.subr.bf16.mxu0 0
      %1139 = vmatpush1.bf16.xpose.msra.mxu0 0
      %1140 = vmatprep.subr.bf16.mxu0 0
      %1141 = vmatpush1.bf16.xpose.msra.mxu0 0
      %1142 = vmatprep.subr.bf16.mxu0 0
      %1143 = vmatpush1.bf16.xpose.msra.mxu0 0
      %1144 = vmatprep.subr.bf16.mxu0 0
      %1145 = vmatpush1.bf16.xpose.msra.mxu0 0
      %1146 = vmatprep.mubr.bf16.mxu0 0
      %1147 = vmatmul.mubr.bf16.gmra.mrb[0].mxu0 %v1109
      %v1148 = vpop.f32.mrb[0].mxu0
      %v1149 = vadd.f32 0.0, %v1148
      %v1150 = vpop.f32.mrb[0].mxu0
      %v1151 = vpop.f32.mrb[0].mxu0
      %v1152 = vadd.f32 0.0, %v1151
      %v1153 = vpop.f32.mrb[0].mxu0
      %1154 = vdwg.mxu0
      %1156 = vrot.lane.b32.xlu0 %v632, 96
      %v1157 = vpop.permute.xlu0 %1156
      %v1159 = vsel %vm657, %v632, 0
      %v1162 = vsel %vm657, %v1157, 0
      %1164 = vmatprep.subr.bf16.mxu0 0
      %1165 = vmatpush1.bf16.xpose.msra.mxu0 %v1162
      %1166 = vmatprep.subr.bf16.mxu0 0
      %1167 = vmatpush1.bf16.xpose.msra.mxu0 0
      %1168 = vmatprep.subr.bf16.mxu0 0
      %1169 = vmatpush1.bf16.xpose.msra.mxu0 0
      %1170 = vmatprep.subr.bf16.mxu0 0
      %1171 = vmatpush1.bf16.xpose.msra.mxu0 0
      %1172 = vmatprep.subr.bf16.mxu0 0
      %1173 = vmatpush1.bf16.xpose.msra.mxu0 0
      %1174 = vmatprep.subr.bf16.mxu0 0
      %1175 = vmatpush1.bf16.xpose.msra.mxu0 0
      %1176 = vmatprep.subr.bf16.mxu0 0
      %1177 = vmatpush1.bf16.xpose.msra.mxu0 0
      %1178 = vmatprep.subr.bf16.mxu0 0
      %1179 = vmatpush1.bf16.xpose.msra.mxu0 0
      %1180 = vmatprep.subr.bf16.mxu0 0
      %1181 = vmatpush1.bf16.xpose.msra.mxu0 0
      %1182 = vmatprep.subr.bf16.mxu0 0
      %1183 = vmatpush1.bf16.xpose.msra.mxu0 0
      %1184 = vmatprep.subr.bf16.mxu0 0
      %1185 = vmatpush1.bf16.xpose.msra.mxu0 0
      %1186 = vmatprep.subr.bf16.mxu0 0
      %1187 = vmatpush1.bf16.xpose.msra.mxu0 0
      %1188 = vmatprep.subr.bf16.mxu0 0
      %1189 = vmatpush1.bf16.xpose.msra.mxu0 0
      %1190 = vmatprep.subr.bf16.mxu0 0
      %1191 = vmatpush1.bf16.xpose.msra.mxu0 0
      %1192 = vmatprep.subr.bf16.mxu0 0
      %1193 = vmatpush1.bf16.xpose.msra.mxu0 0
      %1194 = vmatprep.subr.bf16.mxu0 0
      %1195 = vmatpush1.bf16.xpose.msra.mxu0 0
      %1196 = vmatprep.mubr.bf16.mxu0 0
      %1197 = vmatmul.mubr.bf16.gmra.mrb[0].mxu0 %v1159
      %v1198 = vpop.f32.mrb[0].mxu0
      %v1199 = vadd.f32 0.0, %v1198
      %v1200 = vpop.f32.mrb[0].mxu0
      %v1201 = vpop.f32.mrb[0].mxu0
      %v1202 = vadd.f32 0.0, %v1201
      %v1203 = vpop.f32.mrb[0].mxu0
      %1204 = vdwg.mxu0
      %1206 = vrot.lane.b32.xlu0 %v633, 96
      %v1207 = vpop.permute.xlu0 %1206
      %v1209 = vsel %vm657, %v633, 0
      %v1212 = vsel %vm657, %v1207, 0
      %1214 = vmatprep.subr.bf16.mxu0 0
      %1215 = vmatpush1.bf16.xpose.msra.mxu0 %v1212
      %1216 = vmatprep.subr.bf16.mxu0 0
      %1217 = vmatpush1.bf16.xpose.msra.mxu0 0
      %1218 = vmatprep.subr.bf16.mxu0 0
      %1219 = vmatpush1.bf16.xpose.msra.mxu0 0
      %1220 = vmatprep.subr.bf16.mxu0 0
      %1221 = vmatpush1.bf16.xpose.msra.mxu0 0
      %1222 = vmatprep.subr.bf16.mxu0 0
      %1223 = vmatpush1.bf16.xpose.msra.mxu0 0
      %1224 = vmatprep.subr.bf16.mxu0 0
      %1225 = vmatpush1.bf16.xpose.msra.mxu0 0
      %1226 = vmatprep.subr.bf16.mxu0 0
      %1227 = vmatpush1.bf16.xpose.msra.mxu0 0
      %1228 = vmatprep.subr.bf16.mxu0 0
      %1229 = vmatpush1.bf16.xpose.msra.mxu0 0
      %1230 = vmatprep.subr.bf16.mxu0 0
      %1231 = vmatpush1.bf16.xpose.msra.mxu0 0
      %1232 = vmatprep.subr.bf16.mxu0 0
      %1233 = vmatpush1.bf16.xpose.msra.mxu0 0
      %1234 = vmatprep.subr.bf16.mxu0 0
      %1235 = vmatpush1.bf16.xpose.msra.mxu0 0
      %1236 = vmatprep.subr.bf16.mxu0 0
      %1237 = vmatpush1.bf16.xpose.msra.mxu0 0
      %1238 = vmatprep.subr.bf16.mxu0 0
      %1239 = vmatpush1.bf16.xpose.msra.mxu0 0
      %1240 = vmatprep.subr.bf16.mxu0 0
      %1241 = vmatpush1.bf16.xpose.msra.mxu0 0
      %1242 = vmatprep.subr.bf16.mxu0 0
      %1243 = vmatpush1.bf16.xpose.msra.mxu0 0
      %1244 = vmatprep.subr.bf16.mxu0 0
      %1245 = vmatpush1.bf16.xpose.msra.mxu0 0
      %1246 = vmatprep.mubr.bf16.mxu0 0
      %1247 = vmatmul.mubr.bf16.gmra.mrb[0].mxu0 %v1209
      %v1248 = vpop.f32.mrb[0].mxu0
      %v1249 = vadd.f32 0.0, %v1248
      %v1250 = vpop.f32.mrb[0].mxu0
      %v1251 = vpop.f32.mrb[0].mxu0
      %v1252 = vadd.f32 0.0, %v1251
      %v1253 = vpop.f32.mrb[0].mxu0
      %1254 = vdwg.mxu0
      %1256 = vrot.lane.b32.xlu0 %v634, 96
      %v1257 = vpop.permute.xlu0 %1256
      %v1259 = vsel %vm657, %v634, 0
      %v1262 = vsel %vm657, %v1257, 0
      %1264 = vmatprep.subr.bf16.mxu0 0
      %1265 = vmatpush1.bf16.xpose.msra.mxu0 %v1262
      %1266 = vmatprep.subr.bf16.mxu0 0
      %1267 = vmatpush1.bf16.xpose.msra.mxu0 0
      %1268 = vmatprep.subr.bf16.mxu0 0
      %1269 = vmatpush1.bf16.xpose.msra.mxu0 0
      %1270 = vmatprep.subr.bf16.mxu0 0
      %1271 = vmatpush1.bf16.xpose.msra.mxu0 0
      %1272 = vmatprep.subr.bf16.mxu0 0
      %1273 = vmatpush1.bf16.xpose.msra.mxu0 0
      %1274 = vmatprep.subr.bf16.mxu0 0
      %1275 = vmatpush1.bf16.xpose.msra.mxu0 0
      %1276 = vmatprep.subr.bf16.mxu0 0
      %1277 = vmatpush1.bf16.xpose.msra.mxu0 0
      %1278 = vmatprep.subr.bf16.mxu0 0
      %1279 = vmatpush1.bf16.xpose.msra.mxu0 0
      %1280 = vmatprep.subr.bf16.mxu0 0
      %1281 = vmatpush1.bf16.xpose.msra.mxu0 0
      %1282 = vmatprep.subr.bf16.mxu0 0
      %1283 = vmatpush1.bf16.xpose.msra.mxu0 0
      %1284 = vmatprep.subr.bf16.mxu0 0
      %1285 = vmatpush1.bf16.xpose.msra.mxu0 0
      %1286 = vmatprep.subr.bf16.mxu0 0
      %1287 = vmatpush1.bf16.xpose.msra.mxu0 0
      %1288 = vmatprep.subr.bf16.mxu0 0
      %1289 = vmatpush1.bf16.xpose.msra.mxu0 0
      %1290 = vmatprep.subr.bf16.mxu0 0
      %1291 = vmatpush1.bf16.xpose.msra.mxu0 0
      %1292 = vmatprep.subr.bf16.mxu0 0
      %1293 = vmatpush1.bf16.xpose.msra.mxu0 0
      %1294 = vmatprep.subr.bf16.mxu0 0
      %1295 = vmatpush1.bf16.xpose.msra.mxu0 0
      %1296 = vmatprep.mubr.bf16.mxu0 0
      %1297 = vmatmul.mubr.bf16.gmra.mrb[0].mxu0 %v1259
      %v1298 = vpop.f32.mrb[0].mxu0
      %v1299 = vadd.f32 0.0, %v1298
      %v1300 = vpop.f32.mrb[0].mxu0
      %v1301 = vpop.f32.mrb[0].mxu0
      %v1302 = vadd.f32 0.0, %v1301
      %v1303 = vpop.f32.mrb[0].mxu0
      %1304 = vdwg.mxu0
      %1306 = vrot.lane.b32.xlu0 %v635, 96
      %v1307 = vpop.permute.xlu0 %1306
      %v1309 = vsel %vm657, %v635, 0
      %v1312 = vsel %vm657, %v1307, 0
      %1314 = vmatprep.subr.bf16.mxu0 0
      %1315 = vmatpush1.bf16.xpose.msra.mxu0 %v1312
      %1316 = vmatprep.subr.bf16.mxu0 0
      %1317 = vmatpush1.bf16.xpose.msra.mxu0 0
      %1318 = vmatprep.subr.bf16.mxu0 0
      %1319 = vmatpush1.bf16.xpose.msra.mxu0 0
      %1320 = vmatprep.subr.bf16.mxu0 0
      %1321 = vmatpush1.bf16.xpose.msra.mxu0 0
      %1322 = vmatprep.subr.bf16.mxu0 0
      %1323 = vmatpush1.bf16.xpose.msra.mxu0 0
      %1324 = vmatprep.subr.bf16.mxu0 0
      %1325 = vmatpush1.bf16.xpose.msra.mxu0 0
      %1326 = vmatprep.subr.bf16.mxu0 0
      %1327 = vmatpush1.bf16.xpose.msra.mxu0 0
      %1328 = vmatprep.subr.bf16.mxu0 0
      %1329 = vmatpush1.bf16.xpose.msra.mxu0 0
      %1330 = vmatprep.subr.bf16.mxu0 0
      %1331 = vmatpush1.bf16.xpose.msra.mxu0 0
      %1332 = vmatprep.subr.bf16.mxu0 0
      %1333 = vmatpush1.bf16.xpose.msra.mxu0 0
      %1334 = vmatprep.subr.bf16.mxu0 0
      %1335 = vmatpush1.bf16.xpose.msra.mxu0 0
      %1336 = vmatprep.subr.bf16.mxu0 0
      %1337 = vmatpush1.bf16.xpose.msra.mxu0 0
      %1338 = vmatprep.subr.bf16.mxu0 0
      %1339 = vmatpush1.bf16.xpose.msra.mxu0 0
      %1340 = vmatprep.subr.bf16.mxu0 0
      %1341 = vmatpush1.bf16.xpose.msra.mxu0 0
      %1342 = vmatprep.subr.bf16.mxu0 0
      %1343 = vmatpush1.bf16.xpose.msra.mxu0 0
      %1344 = vmatprep.subr.bf16.mxu0 0
      %1345 = vmatpush1.bf16.xpose.msra.mxu0 0
      %1346 = vmatprep.mubr.bf16.mxu0 0
      %1347 = vmatmul.mubr.bf16.gmra.mrb[0].mxu0 %v1309
      %v1348 = vpop.f32.mrb[0].mxu0
      %v1349 = vadd.f32 0.0, %v1348
      %v1350 = vpop.f32.mrb[0].mxu0
      %v1351 = vpop.f32.mrb[0].mxu0
      %v1352 = vadd.f32 0.0, %v1351
      %v1353 = vpop.f32.mrb[0].mxu0
      %1354 = vdwg.mxu0
      %1356 = vrot.lane.b32.xlu0 %v636, 96
      %v1357 = vpop.permute.xlu0 %1356
      %v1359 = vsel %vm657, %v636, 0
      %v1362 = vsel %vm657, %v1357, 0
      %1364 = vmatprep.subr.bf16.mxu0 0
      %1365 = vmatpush1.bf16.xpose.msra.mxu0 %v1362
      %1366 = vmatprep.subr.bf16.mxu0 0
      %1367 = vmatpush1.bf16.xpose.msra.mxu0 0
      %1368 = vmatprep.subr.bf16.mxu0 0
      %1369 = vmatpush1.bf16.xpose.msra.mxu0 0
      %1370 = vmatprep.subr.bf16.mxu0 0
      %1371 = vmatpush1.bf16.xpose.msra.mxu0 0
      %1372 = vmatprep.subr.bf16.mxu0 0
      %1373 = vmatpush1.bf16.xpose.msra.mxu0 0
      %1374 = vmatprep.subr.bf16.mxu0 0
      %1375 = vmatpush1.bf16.xpose.msra.mxu0 0
      %1376 = vmatprep.subr.bf16.mxu0 0
      %1377 = vmatpush1.bf16.xpose.msra.mxu0 0
      %1378 = vmatprep.subr.bf16.mxu0 0
      %1379 = vmatpush1.bf16.xpose.msra.mxu0 0
      %1380 = vmatprep.subr.bf16.mxu0 0
      %1381 = vmatpush1.bf16.xpose.msra.mxu0 0
      %1382 = vmatprep.subr.bf16.mxu0 0
      %1383 = vmatpush1.bf16.xpose.msra.mxu0 0
      %1384 = vmatprep.subr.bf16.mxu0 0
      %1385 = vmatpush1.bf16.xpose.msra.mxu0 0
      %1386 = vmatprep.subr.bf16.mxu0 0
      %1387 = vmatpush1.bf16.xpose.msra.mxu0 0
      %1388 = vmatprep.subr.bf16.mxu0 0
      %1389 = vmatpush1.bf16.xpose.msra.mxu0 0
      %1390 = vmatprep.subr.bf16.mxu0 0
      %1391 = vmatpush1.bf16.xpose.msra.mxu0 0
      %1392 = vmatprep.subr.bf16.mxu0 0
      %1393 = vmatpush1.bf16.xpose.msra.mxu0 0
      %1394 = vmatprep.subr.bf16.mxu0 0
      %1395 = vmatpush1.bf16.xpose.msra.mxu0 0
      %1396 = vmatprep.mubr.bf16.mxu0 0
      %1397 = vmatmul.mubr.bf16.gmra.mrb[0].mxu0 %v1359
      %v1398 = vpop.f32.mrb[0].mxu0
      %v1399 = vadd.f32 0.0, %v1398
      %v1400 = vpop.f32.mrb[0].mxu0
      %v1401 = vpop.f32.mrb[0].mxu0
      %v1402 = vadd.f32 0.0, %v1401
      %v1403 = vpop.f32.mrb[0].mxu0
      %1404 = vdwg.mxu0
      %1406 = vrot.lane.b32.xlu0 %v637, 96
      %v1407 = vpop.permute.xlu0 %1406
      %v1409 = vsel %vm657, %v637, 0
      %v1412 = vsel %vm657, %v1407, 0
      %1414 = vmatprep.subr.bf16.mxu0 0
      %1415 = vmatpush1.bf16.xpose.msra.mxu0 %v1412
      %1416 = vmatprep.subr.bf16.mxu0 0
      %1417 = vmatpush1.bf16.xpose.msra.mxu0 0
      %1418 = vmatprep.subr.bf16.mxu0 0
      %1419 = vmatpush1.bf16.xpose.msra.mxu0 0
      %1420 = vmatprep.subr.bf16.mxu0 0
      %1421 = vmatpush1.bf16.xpose.msra.mxu0 0
      %1422 = vmatprep.subr.bf16.mxu0 0
      %1423 = vmatpush1.bf16.xpose.msra.mxu0 0
      %1424 = vmatprep.subr.bf16.mxu0 0
      %1425 = vmatpush1.bf16.xpose.msra.mxu0 0
      %1426 = vmatprep.subr.bf16.mxu0 0
      %1427 = vmatpush1.bf16.xpose.msra.mxu0 0
      %1428 = vmatprep.subr.bf16.mxu0 0
      %1429 = vmatpush1.bf16.xpose.msra.mxu0 0
      %1430 = vmatprep.subr.bf16.mxu0 0
      %1431 = vmatpush1.bf16.xpose.msra.mxu0 0
      %1432 = vmatprep.subr.bf16.mxu0 0
      %1433 = vmatpush1.bf16.xpose.msra.mxu0 0
      %1434 = vmatprep.subr.bf16.mxu0 0
      %1435 = vmatpush1.bf16.xpose.msra.mxu0 0
      %1436 = vmatprep.subr.bf16.mxu0 0
      %1437 = vmatpush1.bf16.xpose.msra.mxu0 0
      %1438 = vmatprep.subr.bf16.mxu0 0
      %1439 = vmatpush1.bf16.xpose.msra.mxu0 0
      %1440 = vmatprep.subr.bf16.mxu0 0
      %1441 = vmatpush1.bf16.xpose.msra.mxu0 0
      %1442 = vmatprep.subr.bf16.mxu0 0
      %1443 = vmatpush1.bf16.xpose.msra.mxu0 0
      %1444 = vmatprep.subr.bf16.mxu0 0
      %1445 = vmatpush1.bf16.xpose.msra.mxu0 0
      %1446 = vmatprep.mubr.bf16.mxu0 0
      %1447 = vmatmul.mubr.bf16.gmra.mrb[0].mxu0 %v1409
      %v1448 = vpop.f32.mrb[0].mxu0
      %v1449 = vadd.f32 0.0, %v1448
      %v1450 = vpop.f32.mrb[0].mxu0
      %v1451 = vpop.f32.mrb[0].mxu0
      %v1452 = vadd.f32 0.0, %v1451
      %v1453 = vpop.f32.mrb[0].mxu0
      %1454 = vdwg.mxu0
      %1456 = vrot.lane.b32.xlu0 %v638, 96
      %v1457 = vpop.permute.xlu0 %1456
      %v1459 = vsel %vm657, %v638, 0
      %v1462 = vsel %vm657, %v1457, 0
      %1464 = vmatprep.subr.bf16.mxu0 0
      %1465 = vmatpush1.bf16.xpose.msra.mxu0 %v1462
      %1466 = vmatprep.subr.bf16.mxu0 0
      %1467 = vmatpush1.bf16.xpose.msra.mxu0 0
      %1468 = vmatprep.subr.bf16.mxu0 0
      %1469 = vmatpush1.bf16.xpose.msra.mxu0 0
      %1470 = vmatprep.subr.bf16.mxu0 0
      %1471 = vmatpush1.bf16.xpose.msra.mxu0 0
      %1472 = vmatprep.subr.bf16.mxu0 0
      %1473 = vmatpush1.bf16.xpose.msra.mxu0 0
      %1474 = vmatprep.subr.bf16.mxu0 0
      %1475 = vmatpush1.bf16.xpose.msra.mxu0 0
      %1476 = vmatprep.subr.bf16.mxu0 0
      %1477 = vmatpush1.bf16.xpose.msra.mxu0 0
      %1478 = vmatprep.subr.bf16.mxu0 0
      %1479 = vmatpush1.bf16.xpose.msra.mxu0 0
      %1480 = vmatprep.subr.bf16.mxu0 0
      %1481 = vmatpush1.bf16.xpose.msra.mxu0 0
      %1482 = vmatprep.subr.bf16.mxu0 0
      %1483 = vmatpush1.bf16.xpose.msra.mxu0 0
      %1484 = vmatprep.subr.bf16.mxu0 0
      %1485 = vmatpush1.bf16.xpose.msra.mxu0 0
      %1486 = vmatprep.subr.bf16.mxu0 0
      %1487 = vmatpush1.bf16.xpose.msra.mxu0 0
      %1488 = vmatprep.subr.bf16.mxu0 0
      %1489 = vmatpush1.bf16.xpose.msra.mxu0 0
      %1490 = vmatprep.subr.bf16.mxu0 0
      %1491 = vmatpush1.bf16.xpose.msra.mxu0 0
      %1492 = vmatprep.subr.bf16.mxu0 0
      %1493 = vmatpush1.bf16.xpose.msra.mxu0 0
      %1494 = vmatprep.subr.bf16.mxu0 0
      %1495 = vmatpush1.bf16.xpose.msra.mxu0 0
      %1496 = vmatprep.mubr.bf16.mxu0 0
      %1497 = vmatmul.mubr.bf16.gmra.mrb[0].mxu0 %v1459
      %v1498 = vpop.f32.mrb[0].mxu0
      %v1499 = vadd.f32 0.0, %v1498
      %v1500 = vpop.f32.mrb[0].mxu0
      %v1501 = vpop.f32.mrb[0].mxu0
      %v1502 = vadd.f32 0.0, %v1501
      %v1503 = vpop.f32.mrb[0].mxu0
      %1504 = vdwg.mxu0
      %1506 = vrot.lane.b32.xlu0 %v639, 96
      %v1507 = vpop.permute.xlu0 %1506
      %v1509 = vsel %vm657, %v639, 0
      %v1512 = vsel %vm657, %v1507, 0
      %1514 = vmatprep.subr.bf16.mxu0 0
      %1515 = vmatpush1.bf16.xpose.msra.mxu0 %v1512
      %1516 = vmatprep.subr.bf16.mxu0 0
      %1517 = vmatpush1.bf16.xpose.msra.mxu0 0
      %1518 = vmatprep.subr.bf16.mxu0 0
      %1519 = vmatpush1.bf16.xpose.msra.mxu0 0
      %1520 = vmatprep.subr.bf16.mxu0 0
      %1521 = vmatpush1.bf16.xpose.msra.mxu0 0
      %1522 = vmatprep.subr.bf16.mxu0 0
      %1523 = vmatpush1.bf16.xpose.msra.mxu0 0
      %1524 = vmatprep.subr.bf16.mxu0 0
      %1525 = vmatpush1.bf16.xpose.msra.mxu0 0
      %1526 = vmatprep.subr.bf16.mxu0 0
      %1527 = vmatpush1.bf16.xpose.msra.mxu0 0
      %1528 = vmatprep.subr.bf16.mxu0 0
      %1529 = vmatpush1.bf16.xpose.msra.mxu0 0
      %1530 = vmatprep.subr.bf16.mxu0 0
      %1531 = vmatpush1.bf16.xpose.msra.mxu0 0
      %1532 = vmatprep.subr.bf16.mxu0 0
      %1533 = vmatpush1.bf16.xpose.msra.mxu0 0
      %1534 = vmatprep.subr.bf16.mxu0 0
      %1535 = vmatpush1.bf16.xpose.msra.mxu0 0
      %1536 = vmatprep.subr.bf16.mxu0 0
      %1537 = vmatpush1.bf16.xpose.msra.mxu0 0
      %1538 = vmatprep.subr.bf16.mxu0 0
      %1539 = vmatpush1.bf16.xpose.msra.mxu0 0
      %1540 = vmatprep.subr.bf16.mxu0 0
      %1541 = vmatpush1.bf16.xpose.msra.mxu0 0
      %1542 = vmatprep.subr.bf16.mxu0 0
      %1543 = vmatpush1.bf16.xpose.msra.mxu0 0
      %1544 = vmatprep.subr.bf16.mxu0 0
      %1545 = vmatpush1.bf16.xpose.msra.mxu0 0
      %1546 = vmatprep.mubr.bf16.mxu0 0
      %1547 = vmatmul.mubr.bf16.gmra.mrb[0].mxu0 %v1509
      %v1548 = vpop.f32.mrb[0].mxu0
      %v1549 = vadd.f32 0.0, %v1548
      %v1550 = vpop.f32.mrb[0].mxu0
      %v1551 = vpop.f32.mrb[0].mxu0
      %v1552 = vadd.f32 0.0, %v1551
      %v1553 = vpop.f32.mrb[0].mxu0
      %1554 = vdwg.mxu0
      %1556 = vrot.lane.b32.xlu0 %v640, 96
      %v1557 = vpop.permute.xlu0 %1556
      %v1559 = vsel %vm657, %v640, 0
      %v1562 = vsel %vm657, %v1557, 0
      %1564 = vmatprep.subr.bf16.mxu0 0
      %1565 = vmatpush1.bf16.xpose.msra.mxu0 %v1562
      %1566 = vmatprep.subr.bf16.mxu0 0
      %1567 = vmatpush1.bf16.xpose.msra.mxu0 0
      %1568 = vmatprep.subr.bf16.mxu0 0
      %1569 = vmatpush1.bf16.xpose.msra.mxu0 0
      %1570 = vmatprep.subr.bf16.mxu0 0
      %1571 = vmatpush1.bf16.xpose.msra.mxu0 0
      %1572 = vmatprep.subr.bf16.mxu0 0
      %1573 = vmatpush1.bf16.xpose.msra.mxu0 0
      %1574 = vmatprep.subr.bf16.mxu0 0
      %1575 = vmatpush1.bf16.xpose.msra.mxu0 0
      %1576 = vmatprep.subr.bf16.mxu0 0
      %1577 = vmatpush1.bf16.xpose.msra.mxu0 0
      %1578 = vmatprep.subr.bf16.mxu0 0
      %1579 = vmatpush1.bf16.xpose.msra.mxu0 0
      %1580 = vmatprep.subr.bf16.mxu0 0
      %1581 = vmatpush1.bf16.xpose.msra.mxu0 0
      %1582 = vmatprep.subr.bf16.mxu0 0
      %1583 = vmatpush1.bf16.xpose.msra.mxu0 0
      %1584 = vmatprep.subr.bf16.mxu0 0
      %1585 = vmatpush1.bf16.xpose.msra.mxu0 0
      %1586 = vmatprep.subr.bf16.mxu0 0
      %1587 = vmatpush1.bf16.xpose.msra.mxu0 0
      %1588 = vmatprep.subr.bf16.mxu0 0
      %1589 = vmatpush1.bf16.xpose.msra.mxu0 0
      %1590 = vmatprep.subr.bf16.mxu0 0
      %1591 = vmatpush1.bf16.xpose.msra.mxu0 0
      %1592 = vmatprep.subr.bf16.mxu0 0
      %1593 = vmatpush1.bf16.xpose.msra.mxu0 0
      %1594 = vmatprep.subr.bf16.mxu0 0
      %1595 = vmatpush1.bf16.xpose.msra.mxu0 0
      %1596 = vmatprep.mubr.bf16.mxu0 0
      %1597 = vmatmul.mubr.bf16.gmra.mrb[0].mxu0 %v1559
      %v1598 = vpop.f32.mrb[0].mxu0
      %v1599 = vadd.f32 0.0, %v1598
      %v1600 = vpop.f32.mrb[0].mxu0
      %v1601 = vpop.f32.mrb[0].mxu0
      %v1602 = vadd.f32 0.0, %v1601
      %v1603 = vpop.f32.mrb[0].mxu0
      %1604 = vdwg.mxu0
      %1606 = vrot.lane.b32.xlu0 %v641, 96
      %v1607 = vpop.permute.xlu0 %1606
      %v1609 = vsel %vm657, %v641, 0
      %v1612 = vsel %vm657, %v1607, 0
      %1614 = vmatprep.subr.bf16.mxu0 0
      %1615 = vmatpush1.bf16.xpose.msra.mxu0 %v1612
      %1616 = vmatprep.subr.bf16.mxu0 0
      %1617 = vmatpush1.bf16.xpose.msra.mxu0 0
      %1618 = vmatprep.subr.bf16.mxu0 0
      %1619 = vmatpush1.bf16.xpose.msra.mxu0 0
      %1620 = vmatprep.subr.bf16.mxu0 0
      %1621 = vmatpush1.bf16.xpose.msra.mxu0 0
      %1622 = vmatprep.subr.bf16.mxu0 0
      %1623 = vmatpush1.bf16.xpose.msra.mxu0 0
      %1624 = vmatprep.subr.bf16.mxu0 0
      %1625 = vmatpush1.bf16.xpose.msra.mxu0 0
      %1626 = vmatprep.subr.bf16.mxu0 0
      %1627 = vmatpush1.bf16.xpose.msra.mxu0 0
      %1628 = vmatprep.subr.bf16.mxu0 0
      %1629 = vmatpush1.bf16.xpose.msra.mxu0 0
      %1630 = vmatprep.subr.bf16.mxu0 0
      %1631 = vmatpush1.bf16.xpose.msra.mxu0 0
      %1632 = vmatprep.subr.bf16.mxu0 0
      %1633 = vmatpush1.bf16.xpose.msra.mxu0 0
      %1634 = vmatprep.subr.bf16.mxu0 0
      %1635 = vmatpush1.bf16.xpose.msra.mxu0 0
      %1636 = vmatprep.subr.bf16.mxu0 0
      %1637 = vmatpush1.bf16.xpose.msra.mxu0 0
      %1638 = vmatprep.subr.bf16.mxu0 0
      %1639 = vmatpush1.bf16.xpose.msra.mxu0 0
      %1640 = vmatprep.subr.bf16.mxu0 0
      %1641 = vmatpush1.bf16.xpose.msra.mxu0 0
      %1642 = vmatprep.subr.bf16.mxu0 0
      %1643 = vmatpush1.bf16.xpose.msra.mxu0 0
      %1644 = vmatprep.subr.bf16.mxu0 0
      %1645 = vmatpush1.bf16.xpose.msra.mxu0 0
      %1646 = vmatprep.mubr.bf16.mxu0 0
      %1647 = vmatmul.mubr.bf16.gmra.mrb[0].mxu0 %v1609
      %v1648 = vpop.f32.mrb[0].mxu0
      %v1649 = vadd.f32 0.0, %v1648
      %v1650 = vpop.f32.mrb[0].mxu0
      %v1651 = vpop.f32.mrb[0].mxu0
      %v1652 = vadd.f32 0.0, %v1651
      %v1653 = vpop.f32.mrb[0].mxu0
      %1654 = vdwg.mxu0
      %1656 = vrot.lane.b32.xlu0 %v642, 96
      %v1657 = vpop.permute.xlu0 %1656
      %v1659 = vsel %vm657, %v642, 0
      %v1662 = vsel %vm657, %v1657, 0
      %1664 = vmatprep.subr.bf16.mxu0 0
      %1665 = vmatpush1.bf16.xpose.msra.mxu0 %v1662
      %1666 = vmatprep.subr.bf16.mxu0 0
      %1667 = vmatpush1.bf16.xpose.msra.mxu0 0
      %1668 = vmatprep.subr.bf16.mxu0 0
      %1669 = vmatpush1.bf16.xpose.msra.mxu0 0
      %1670 = vmatprep.subr.bf16.mxu0 0
      %1671 = vmatpush1.bf16.xpose.msra.mxu0 0
      %1672 = vmatprep.subr.bf16.mxu0 0
      %1673 = vmatpush1.bf16.xpose.msra.mxu0 0
      %1674 = vmatprep.subr.bf16.mxu0 0
      %1675 = vmatpush1.bf16.xpose.msra.mxu0 0
      %1676 = vmatprep.subr.bf16.mxu0 0
      %1677 = vmatpush1.bf16.xpose.msra.mxu0 0
      %1678 = vmatprep.subr.bf16.mxu0 0
      %1679 = vmatpush1.bf16.xpose.msra.mxu0 0
      %1680 = vmatprep.subr.bf16.mxu0 0
      %1681 = vmatpush1.bf16.xpose.msra.mxu0 0
      %1682 = vmatprep.subr.bf16.mxu0 0
      %1683 = vmatpush1.bf16.xpose.msra.mxu0 0
      %1684 = vmatprep.subr.bf16.mxu0 0
      %1685 = vmatpush1.bf16.xpose.msra.mxu0 0
      %1686 = vmatprep.subr.bf16.mxu0 0
      %1687 = vmatpush1.bf16.xpose.msra.mxu0 0
      %1688 = vmatprep.subr.bf16.mxu0 0
      %1689 = vmatpush1.bf16.xpose.msra.mxu0 0
      %1690 = vmatprep.subr.bf16.mxu0 0
      %1691 = vmatpush1.bf16.xpose.msra.mxu0 0
      %1692 = vmatprep.subr.bf16.mxu0 0
      %1693 = vmatpush1.bf16.xpose.msra.mxu0 0
      %1694 = vmatprep.subr.bf16.mxu0 0
      %1695 = vmatpush1.bf16.xpose.msra.mxu0 0
      %1696 = vmatprep.mubr.bf16.mxu0 0
      %1697 = vmatmul.mubr.bf16.gmra.mrb[0].mxu0 %v1659
      %v1698 = vpop.f32.mrb[0].mxu0
      %v1699 = vadd.f32 0.0, %v1698
      %v1700 = vpop.f32.mrb[0].mxu0
      %v1701 = vpop.f32.mrb[0].mxu0
      %v1702 = vadd.f32 0.0, %v1701
      %v1703 = vpop.f32.mrb[0].mxu0
      %1704 = vdwg.mxu0
      %1706 = vrot.lane.b32.xlu0 %v643, 96
      %v1707 = vpop.permute.xlu0 %1706
      %v1709 = vsel %vm657, %v643, 0
      %v1712 = vsel %vm657, %v1707, 0
      %1714 = vmatprep.subr.bf16.mxu0 0
      %1715 = vmatpush1.bf16.xpose.msra.mxu0 %v1712
      %1716 = vmatprep.subr.bf16.mxu0 0
      %1717 = vmatpush1.bf16.xpose.msra.mxu0 0
      %1718 = vmatprep.subr.bf16.mxu0 0
      %1719 = vmatpush1.bf16.xpose.msra.mxu0 0
      %1720 = vmatprep.subr.bf16.mxu0 0
      %1721 = vmatpush1.bf16.xpose.msra.mxu0 0
      %1722 = vmatprep.subr.bf16.mxu0 0
      %1723 = vmatpush1.bf16.xpose.msra.mxu0 0
      %1724 = vmatprep.subr.bf16.mxu0 0
      %1725 = vmatpush1.bf16.xpose.msra.mxu0 0
      %1726 = vmatprep.subr.bf16.mxu0 0
      %1727 = vmatpush1.bf16.xpose.msra.mxu0 0
      %1728 = vmatprep.subr.bf16.mxu0 0
      %1729 = vmatpush1.bf16.xpose.msra.mxu0 0
      %1730 = vmatprep.subr.bf16.mxu0 0
      %1731 = vmatpush1.bf16.xpose.msra.mxu0 0
      %1732 = vmatprep.subr.bf16.mxu0 0
      %1733 = vmatpush1.bf16.xpose.msra.mxu0 0
      %1734 = vmatprep.subr.bf16.mxu0 0
      %1735 = vmatpush1.bf16.xpose.msra.mxu0 0
      %1736 = vmatprep.subr.bf16.mxu0 0
      %1737 = vmatpush1.bf16.xpose.msra.mxu0 0
      %1738 = vmatprep.subr.bf16.mxu0 0
      %1739 = vmatpush1.bf16.xpose.msra.mxu0 0
      %1740 = vmatprep.subr.bf16.mxu0 0
      %1741 = vmatpush1.bf16.xpose.msra.mxu0 0
      %1742 = vmatprep.subr.bf16.mxu0 0
      %1743 = vmatpush1.bf16.xpose.msra.mxu0 0
      %1744 = vmatprep.subr.bf16.mxu0 0
      %1745 = vmatpush1.bf16.xpose.msra.mxu0 0
      %1746 = vmatprep.mubr.bf16.mxu0 0
      %1747 = vmatmul.mubr.bf16.gmra.mrb[0].mxu0 %v1709
      %v1748 = vpop.f32.mrb[0].mxu0
      %v1749 = vadd.f32 0.0, %v1748
      %v1750 = vpop.f32.mrb[0].mxu0
      %v1751 = vpop.f32.mrb[0].mxu0
      %v1752 = vadd.f32 0.0, %v1751
      %v1753 = vpop.f32.mrb[0].mxu0
      %1754 = vdwg.mxu0
      %1756 = vrot.lane.b32.xlu0 %v644, 96
      %v1757 = vpop.permute.xlu0 %1756
      %v1759 = vsel %vm657, %v644, 0
      %v1762 = vsel %vm657, %v1757, 0
      %1764 = vmatprep.subr.bf16.mxu0 0
      %1765 = vmatpush1.bf16.xpose.msra.mxu0 %v1762
      %1766 = vmatprep.subr.bf16.mxu0 0
      %1767 = vmatpush1.bf16.xpose.msra.mxu0 0
      %1768 = vmatprep.subr.bf16.mxu0 0
      %1769 = vmatpush1.bf16.xpose.msra.mxu0 0
      %1770 = vmatprep.subr.bf16.mxu0 0
      %1771 = vmatpush1.bf16.xpose.msra.mxu0 0
      %1772 = vmatprep.subr.bf16.mxu0 0
      %1773 = vmatpush1.bf16.xpose.msra.mxu0 0
      %1774 = vmatprep.subr.bf16.mxu0 0
      %1775 = vmatpush1.bf16.xpose.msra.mxu0 0
      %1776 = vmatprep.subr.bf16.mxu0 0
      %1777 = vmatpush1.bf16.xpose.msra.mxu0 0
      %1778 = vmatprep.subr.bf16.mxu0 0
      %1779 = vmatpush1.bf16.xpose.msra.mxu0 0
      %1780 = vmatprep.subr.bf16.mxu0 0
      %1781 = vmatpush1.bf16.xpose.msra.mxu0 0
      %1782 = vmatprep.subr.bf16.mxu0 0
      %1783 = vmatpush1.bf16.xpose.msra.mxu0 0
      %1784 = vmatprep.subr.bf16.mxu0 0
      %1785 = vmatpush1.bf16.xpose.msra.mxu0 0
      %1786 = vmatprep.subr.bf16.mxu0 0
      %1787 = vmatpush1.bf16.xpose.msra.mxu0 0
      %1788 = vmatprep.subr.bf16.mxu0 0
      %1789 = vmatpush1.bf16.xpose.msra.mxu0 0
      %1790 = vmatprep.subr.bf16.mxu0 0
      %1791 = vmatpush1.bf16.xpose.msra.mxu0 0
      %1792 = vmatprep.subr.bf16.mxu0 0
      %1793 = vmatpush1.bf16.xpose.msra.mxu0 0
      %1794 = vmatprep.subr.bf16.mxu0 0
      %1795 = vmatpush1.bf16.xpose.msra.mxu0 0
      %1796 = vmatprep.mubr.bf16.mxu0 0
      %1797 = vmatmul.mubr.bf16.gmra.mrb[0].mxu0 %v1759
      %v1798 = vpop.f32.mrb[0].mxu0
      %v1799 = vadd.f32 0.0, %v1798
      %v1800 = vpop.f32.mrb[0].mxu0
      %v1801 = vpop.f32.mrb[0].mxu0
      %v1802 = vadd.f32 0.0, %v1801
      %v1803 = vpop.f32.mrb[0].mxu0
      %1804 = vdwg.mxu0
      %1806 = vrot.lane.b32.xlu0 %v645, 96
      %v1807 = vpop.permute.xlu0 %1806
      %v1809 = vsel %vm657, %v645, 0
      %v1812 = vsel %vm657, %v1807, 0
      %1814 = vmatprep.subr.bf16.mxu0 0
      %1815 = vmatpush1.bf16.xpose.msra.mxu0 %v1812
      %1816 = vmatprep.subr.bf16.mxu0 0
      %1817 = vmatpush1.bf16.xpose.msra.mxu0 0
      %1818 = vmatprep.subr.bf16.mxu0 0
      %1819 = vmatpush1.bf16.xpose.msra.mxu0 0
      %1820 = vmatprep.subr.bf16.mxu0 0
      %1821 = vmatpush1.bf16.xpose.msra.mxu0 0
      %1822 = vmatprep.subr.bf16.mxu0 0
      %1823 = vmatpush1.bf16.xpose.msra.mxu0 0
      %1824 = vmatprep.subr.bf16.mxu0 0
      %1825 = vmatpush1.bf16.xpose.msra.mxu0 0
      %1826 = vmatprep.subr.bf16.mxu0 0
      %1827 = vmatpush1.bf16.xpose.msra.mxu0 0
      %1828 = vmatprep.subr.bf16.mxu0 0
      %1829 = vmatpush1.bf16.xpose.msra.mxu0 0
      %1830 = vmatprep.subr.bf16.mxu0 0
      %1831 = vmatpush1.bf16.xpose.msra.mxu0 0
      %1832 = vmatprep.subr.bf16.mxu0 0
      %1833 = vmatpush1.bf16.xpose.msra.mxu0 0
      %1834 = vmatprep.subr.bf16.mxu0 0
      %1835 = vmatpush1.bf16.xpose.msra.mxu0 0
      %1836 = vmatprep.subr.bf16.mxu0 0
      %1837 = vmatpush1.bf16.xpose.msra.mxu0 0
      %1838 = vmatprep.subr.bf16.mxu0 0
      %1839 = vmatpush1.bf16.xpose.msra.mxu0 0
      %1840 = vmatprep.subr.bf16.mxu0 0
      %1841 = vmatpush1.bf16.xpose.msra.mxu0 0
      %1842 = vmatprep.subr.bf16.mxu0 0
      %1843 = vmatpush1.bf16.xpose.msra.mxu0 0
      %1844 = vmatprep.subr.bf16.mxu0 0
      %1845 = vmatpush1.bf16.xpose.msra.mxu0 0
      %1846 = vmatprep.mubr.bf16.mxu0 0
      %1847 = vmatmul.mubr.bf16.gmra.mrb[0].mxu0 %v1809
      %v1848 = vpop.f32.mrb[0].mxu0
      %v1849 = vadd.f32 0.0, %v1848
      %v1850 = vpop.f32.mrb[0].mxu0
      %v1851 = vpop.f32.mrb[0].mxu0
      %v1852 = vadd.f32 0.0, %v1851
      %v1853 = vpop.f32.mrb[0].mxu0
      %1854 = vdwg.mxu0
      %1856 = vrot.lane.b32.xlu0 %v646, 96
      %v1857 = vpop.permute.xlu0 %1856
      %v1859 = vsel %vm657, %v646, 0
      %v1862 = vsel %vm657, %v1857, 0
      %1864 = vmatprep.subr.bf16.mxu0 0
      %1865 = vmatpush1.bf16.xpose.msra.mxu0 %v1862
      %1866 = vmatprep.subr.bf16.mxu0 0
      %1867 = vmatpush1.bf16.xpose.msra.mxu0 0
      %1868 = vmatprep.subr.bf16.mxu0 0
      %1869 = vmatpush1.bf16.xpose.msra.mxu0 0
      %1870 = vmatprep.subr.bf16.mxu0 0
      %1871 = vmatpush1.bf16.xpose.msra.mxu0 0
      %1872 = vmatprep.subr.bf16.mxu0 0
      %1873 = vmatpush1.bf16.xpose.msra.mxu0 0
      %1874 = vmatprep.subr.bf16.mxu0 0
      %1875 = vmatpush1.bf16.xpose.msra.mxu0 0
      %1876 = vmatprep.subr.bf16.mxu0 0
      %1877 = vmatpush1.bf16.xpose.msra.mxu0 0
      %1878 = vmatprep.subr.bf16.mxu0 0
      %1879 = vmatpush1.bf16.xpose.msra.mxu0 0
      %1880 = vmatprep.subr.bf16.mxu0 0
      %1881 = vmatpush1.bf16.xpose.msra.mxu0 0
      %1882 = vmatprep.subr.bf16.mxu0 0
      %1883 = vmatpush1.bf16.xpose.msra.mxu0 0
      %1884 = vmatprep.subr.bf16.mxu0 0
      %1885 = vmatpush1.bf16.xpose.msra.mxu0 0
      %1886 = vmatprep.subr.bf16.mxu0 0
      %1887 = vmatpush1.bf16.xpose.msra.mxu0 0
      %1888 = vmatprep.subr.bf16.mxu0 0
      %1889 = vmatpush1.bf16.xpose.msra.mxu0 0
      %1890 = vmatprep.subr.bf16.mxu0 0
      %1891 = vmatpush1.bf16.xpose.msra.mxu0 0
      %1892 = vmatprep.subr.bf16.mxu0 0
      %1893 = vmatpush1.bf16.xpose.msra.mxu0 0
      %1894 = vmatprep.subr.bf16.mxu0 0
      %1895 = vmatpush1.bf16.xpose.msra.mxu0 0
      %1896 = vmatprep.mubr.bf16.mxu0 0
      %1897 = vmatmul.mubr.bf16.gmra.mrb[0].mxu0 %v1859
      %v1898 = vpop.f32.mrb[0].mxu0
      %v1899 = vadd.f32 0.0, %v1898
      %v1900 = vpop.f32.mrb[0].mxu0
      %v1901 = vpop.f32.mrb[0].mxu0
      %v1902 = vadd.f32 0.0, %v1901
      %v1903 = vpop.f32.mrb[0].mxu0
      %1904 = vdwg.mxu0
      %1906 = vrot.lane.b32.xlu0 %v647, 96
      %v1907 = vpop.permute.xlu0 %1906
      %v1909 = vsel %vm657, %v647, 0
      %v1912 = vsel %vm657, %v1907, 0
      %1914 = vmatprep.subr.bf16.mxu0 0
      %1915 = vmatpush1.bf16.xpose.msra.mxu0 %v1912
      %1916 = vmatprep.subr.bf16.mxu0 0
      %1917 = vmatpush1.bf16.xpose.msra.mxu0 0
      %1918 = vmatprep.subr.bf16.mxu0 0
      %1919 = vmatpush1.bf16.xpose.msra.mxu0 0
      %1920 = vmatprep.subr.bf16.mxu0 0
      %1921 = vmatpush1.bf16.xpose.msra.mxu0 0
      %1922 = vmatprep.subr.bf16.mxu0 0
      %1923 = vmatpush1.bf16.xpose.msra.mxu0 0
      %1924 = vmatprep.subr.bf16.mxu0 0
      %1925 = vmatpush1.bf16.xpose.msra.mxu0 0
      %1926 = vmatprep.subr.bf16.mxu0 0
      %1927 = vmatpush1.bf16.xpose.msra.mxu0 0
      %1928 = vmatprep.subr.bf16.mxu0 0
      %1929 = vmatpush1.bf16.xpose.msra.mxu0 0
      %1930 = vmatprep.subr.bf16.mxu0 0
      %1931 = vmatpush1.bf16.xpose.msra.mxu0 0
      %1932 = vmatprep.subr.bf16.mxu0 0
      %1933 = vmatpush1.bf16.xpose.msra.mxu0 0
      %1934 = vmatprep.subr.bf16.mxu0 0
      %1935 = vmatpush1.bf16.xpose.msra.mxu0 0
      %1936 = vmatprep.subr.bf16.mxu0 0
      %1937 = vmatpush1.bf16.xpose.msra.mxu0 0
      %1938 = vmatprep.subr.bf16.mxu0 0
      %1939 = vmatpush1.bf16.xpose.msra.mxu0 0
      %1940 = vmatprep.subr.bf16.mxu0 0
      %1941 = vmatpush1.bf16.xpose.msra.mxu0 0
      %1942 = vmatprep.subr.bf16.mxu0 0
      %1943 = vmatpush1.bf16.xpose.msra.mxu0 0
      %1944 = vmatprep.subr.bf16.mxu0 0
      %1945 = vmatpush1.bf16.xpose.msra.mxu0 0
      %1946 = vmatprep.mubr.bf16.mxu0 0
      %1947 = vmatmul.mubr.bf16.gmra.mrb[0].mxu0 %v1909
      %v1948 = vpop.f32.mrb[0].mxu0
      %v1949 = vadd.f32 0.0, %v1948
      %v1950 = vpop.f32.mrb[0].mxu0
      %v1951 = vpop.f32.mrb[0].mxu0
      %v1952 = vadd.f32 0.0, %v1951
      %v1953 = vpop.f32.mrb[0].mxu0
      %1954 = vdwg.mxu0
      %1956 = vrot.lane.b32.xlu0 %v648, 96
      %v1957 = vpop.permute.xlu0 %1956
      %v1959 = vsel %vm657, %v648, 0
      %v1962 = vsel %vm657, %v1957, 0
      %1964 = vmatprep.subr.bf16.mxu0 0
      %1965 = vmatpush1.bf16.xpose.msra.mxu0 %v1962
      %1966 = vmatprep.subr.bf16.mxu0 0
      %1967 = vmatpush1.bf16.xpose.msra.mxu0 0
      %1968 = vmatprep.subr.bf16.mxu0 0
      %1969 = vmatpush1.bf16.xpose.msra.mxu0 0
      %1970 = vmatprep.subr.bf16.mxu0 0
      %1971 = vmatpush1.bf16.xpose.msra.mxu0 0
      %1972 = vmatprep.subr.bf16.mxu0 0
      %1973 = vmatpush1.bf16.xpose.msra.mxu0 0
      %1974 = vmatprep.subr.bf16.mxu0 0
      %1975 = vmatpush1.bf16.xpose.msra.mxu0 0
      %1976 = vmatprep.subr.bf16.mxu0 0
      %1977 = vmatpush1.bf16.xpose.msra.mxu0 0
      %1978 = vmatprep.subr.bf16.mxu0 0
      %1979 = vmatpush1.bf16.xpose.msra.mxu0 0
      %1980 = vmatprep.subr.bf16.mxu0 0
      %1981 = vmatpush1.bf16.xpose.msra.mxu0 0
      %1982 = vmatprep.subr.bf16.mxu0 0
      %1983 = vmatpush1.bf16.xpose.msra.mxu0 0
      %1984 = vmatprep.subr.bf16.mxu0 0
      %1985 = vmatpush1.bf16.xpose.msra.mxu0 0
      %1986 = vmatprep.subr.bf16.mxu0 0
      %1987 = vmatpush1.bf16.xpose.msra.mxu0 0
      %1988 = vmatprep.subr.bf16.mxu0 0
      %1989 = vmatpush1.bf16.xpose.msra.mxu0 0
      %1990 = vmatprep.subr.bf16.mxu0 0
      %1991 = vmatpush1.bf16.xpose.msra.mxu0 0
      %1992 = vmatprep.subr.bf16.mxu0 0
      %1993 = vmatpush1.bf16.xpose.msra.mxu0 0
      %1994 = vmatprep.subr.bf16.mxu0 0
      %1995 = vmatpush1.bf16.xpose.msra.mxu0 0
      %1996 = vmatprep.mubr.bf16.mxu0 0
      %1997 = vmatmul.mubr.bf16.gmra.mrb[0].mxu0 %v1959
      %v1998 = vpop.f32.mrb[0].mxu0
      %v1999 = vadd.f32 0.0, %v1998
      %v2000 = vpop.f32.mrb[0].mxu0
      %v2001 = vpop.f32.mrb[0].mxu0
      %v2002 = vadd.f32 0.0, %v2001
      %v2003 = vpop.f32.mrb[0].mxu0
      %2004 = vdwg.mxu0
      %2006 = vrot.lane.b32.xlu0 %v649, 96
      %v2007 = vpop.permute.xlu0 %2006
      %v2009 = vsel %vm657, %v649, 0
      %v2012 = vsel %vm657, %v2007, 0
      %2014 = vmatprep.subr.bf16.mxu0 0
      %2015 = vmatpush1.bf16.xpose.msra.mxu0 %v2012
      %2016 = vmatprep.subr.bf16.mxu0 0
      %2017 = vmatpush1.bf16.xpose.msra.mxu0 0
      %2018 = vmatprep.subr.bf16.mxu0 0
      %2019 = vmatpush1.bf16.xpose.msra.mxu0 0
      %2020 = vmatprep.subr.bf16.mxu0 0
      %2021 = vmatpush1.bf16.xpose.msra.mxu0 0
      %2022 = vmatprep.subr.bf16.mxu0 0
      %2023 = vmatpush1.bf16.xpose.msra.mxu0 0
      %2024 = vmatprep.subr.bf16.mxu0 0
      %2025 = vmatpush1.bf16.xpose.msra.mxu0 0
      %2026 = vmatprep.subr.bf16.mxu0 0
      %2027 = vmatpush1.bf16.xpose.msra.mxu0 0
      %2028 = vmatprep.subr.bf16.mxu0 0
      %2029 = vmatpush1.bf16.xpose.msra.mxu0 0
      %2030 = vmatprep.subr.bf16.mxu0 0
      %2031 = vmatpush1.bf16.xpose.msra.mxu0 0
      %2032 = vmatprep.subr.bf16.mxu0 0
      %2033 = vmatpush1.bf16.xpose.msra.mxu0 0
      %2034 = vmatprep.subr.bf16.mxu0 0
      %2035 = vmatpush1.bf16.xpose.msra.mxu0 0
      %2036 = vmatprep.subr.bf16.mxu0 0
      %2037 = vmatpush1.bf16.xpose.msra.mxu0 0
      %2038 = vmatprep.subr.bf16.mxu0 0
      %2039 = vmatpush1.bf16.xpose.msra.mxu0 0
      %2040 = vmatprep.subr.bf16.mxu0 0
      %2041 = vmatpush1.bf16.xpose.msra.mxu0 0
      %2042 = vmatprep.subr.bf16.mxu0 0
      %2043 = vmatpush1.bf16.xpose.msra.mxu0 0
      %2044 = vmatprep.subr.bf16.mxu0 0
      %2045 = vmatpush1.bf16.xpose.msra.mxu0 0
      %2046 = vmatprep.mubr.bf16.mxu0 0
      %2047 = vmatmul.mubr.bf16.gmra.mrb[0].mxu0 %v2009
      %v2048 = vpop.f32.mrb[0].mxu0
      %v2049 = vadd.f32 0.0, %v2048
      %v2050 = vpop.f32.mrb[0].mxu0
      %v2051 = vpop.f32.mrb[0].mxu0
      %v2052 = vadd.f32 0.0, %v2051
      %v2053 = vpop.f32.mrb[0].mxu0
      %2054 = vdwg.mxu0
      %2056 = vrot.lane.b32.xlu0 %v650, 96
      %v2057 = vpop.permute.xlu0 %2056
      %v2059 = vsel %vm657, %v650, 0
      %v2062 = vsel %vm657, %v2057, 0
      %2064 = vmatprep.subr.bf16.mxu0 0
      %2065 = vmatpush1.bf16.xpose.msra.mxu0 %v2062
      %2066 = vmatprep.subr.bf16.mxu0 0
      %2067 = vmatpush1.bf16.xpose.msra.mxu0 0
      %2068 = vmatprep.subr.bf16.mxu0 0
      %2069 = vmatpush1.bf16.xpose.msra.mxu0 0
      %2070 = vmatprep.subr.bf16.mxu0 0
      %2071 = vmatpush1.bf16.xpose.msra.mxu0 0
      %2072 = vmatprep.subr.bf16.mxu0 0
      %2073 = vmatpush1.bf16.xpose.msra.mxu0 0
      %2074 = vmatprep.subr.bf16.mxu0 0
      %2075 = vmatpush1.bf16.xpose.msra.mxu0 0
      %2076 = vmatprep.subr.bf16.mxu0 0
      %2077 = vmatpush1.bf16.xpose.msra.mxu0 0
      %2078 = vmatprep.subr.bf16.mxu0 0
      %2079 = vmatpush1.bf16.xpose.msra.mxu0 0
      %2080 = vmatprep.subr.bf16.mxu0 0
      %2081 = vmatpush1.bf16.xpose.msra.mxu0 0
      %2082 = vmatprep.subr.bf16.mxu0 0
      %2083 = vmatpush1.bf16.xpose.msra.mxu0 0
      %2084 = vmatprep.subr.bf16.mxu0 0
      %2085 = vmatpush1.bf16.xpose.msra.mxu0 0
      %2086 = vmatprep.subr.bf16.mxu0 0
      %2087 = vmatpush1.bf16.xpose.msra.mxu0 0
      %2088 = vmatprep.subr.bf16.mxu0 0
      %2089 = vmatpush1.bf16.xpose.msra.mxu0 0
      %2090 = vmatprep.subr.bf16.mxu0 0
      %2091 = vmatpush1.bf16.xpose.msra.mxu0 0
      %2092 = vmatprep.subr.bf16.mxu0 0
      %2093 = vmatpush1.bf16.xpose.msra.mxu0 0
      %2094 = vmatprep.subr.bf16.mxu0 0
      %2095 = vmatpush1.bf16.xpose.msra.mxu0 0
      %2096 = vmatprep.mubr.bf16.mxu0 0
      %2097 = vmatmul.mubr.bf16.gmra.mrb[0].mxu0 %v2059
      %v2098 = vpop.f32.mrb[0].mxu0
      %v2099 = vadd.f32 0.0, %v2098
      %v2100 = vpop.f32.mrb[0].mxu0
      %v2101 = vpop.f32.mrb[0].mxu0
      %v2102 = vadd.f32 0.0, %v2101
      %v2103 = vpop.f32.mrb[0].mxu0
      %2104 = vdwg.mxu0
      %2106 = vrot.lane.b32.xlu0 %v651, 96
      %v2107 = vpop.permute.xlu0 %2106
      %v2109 = vsel %vm657, %v651, 0
      %v2112 = vsel %vm657, %v2107, 0
      %2114 = vmatprep.subr.bf16.mxu0 0
      %2115 = vmatpush1.bf16.xpose.msra.mxu0 %v2112
      %2116 = vmatprep.subr.bf16.mxu0 0
      %2117 = vmatpush1.bf16.xpose.msra.mxu0 0
      %2118 = vmatprep.subr.bf16.mxu0 0
      %2119 = vmatpush1.bf16.xpose.msra.mxu0 0
      %2120 = vmatprep.subr.bf16.mxu0 0
      %2121 = vmatpush1.bf16.xpose.msra.mxu0 0
      %2122 = vmatprep.subr.bf16.mxu0 0
      %2123 = vmatpush1.bf16.xpose.msra.mxu0 0
      %2124 = vmatprep.subr.bf16.mxu0 0
      %2125 = vmatpush1.bf16.xpose.msra.mxu0 0
      %2126 = vmatprep.subr.bf16.mxu0 0
      %2127 = vmatpush1.bf16.xpose.msra.mxu0 0
      %2128 = vmatprep.subr.bf16.mxu0 0
      %2129 = vmatpush1.bf16.xpose.msra.mxu0 0
      %2130 = vmatprep.subr.bf16.mxu0 0
      %2131 = vmatpush1.bf16.xpose.msra.mxu0 0
      %2132 = vmatprep.subr.bf16.mxu0 0
      %2133 = vmatpush1.bf16.xpose.msra.mxu0 0
      %2134 = vmatprep.subr.bf16.mxu0 0
      %2135 = vmatpush1.bf16.xpose.msra.mxu0 0
      %2136 = vmatprep.subr.bf16.mxu0 0
      %2137 = vmatpush1.bf16.xpose.msra.mxu0 0
      %2138 = vmatprep.subr.bf16.mxu0 0
      %2139 = vmatpush1.bf16.xpose.msra.mxu0 0
      %2140 = vmatprep.subr.bf16.mxu0 0
      %2141 = vmatpush1.bf16.xpose.msra.mxu0 0
      %2142 = vmatprep.subr.bf16.mxu0 0
      %2143 = vmatpush1.bf16.xpose.msra.mxu0 0
      %2144 = vmatprep.subr.bf16.mxu0 0
      %2145 = vmatpush1.bf16.xpose.msra.mxu0 0
      %2146 = vmatprep.mubr.bf16.mxu0 0
      %2147 = vmatmul.mubr.bf16.gmra.mrb[0].mxu0 %v2109
      %v2148 = vpop.f32.mrb[0].mxu0
      %v2149 = vadd.f32 0.0, %v2148
      %v2150 = vpop.f32.mrb[0].mxu0
      %v2151 = vpop.f32.mrb[0].mxu0
      %v2152 = vadd.f32 0.0, %v2151
      %v2153 = vpop.f32.mrb[0].mxu0
      %2154 = vdwg.mxu0
      %2156 = vrot.lane.b32.xlu0 %v652, 96
      %v2157 = vpop.permute.xlu0 %2156
      %v2159 = vsel %vm657, %v652, 0
      %v2162 = vsel %vm657, %v2157, 0
      %2164 = vmatprep.subr.bf16.mxu0 0
      %2165 = vmatpush1.bf16.xpose.msra.mxu0 %v2162
      %2166 = vmatprep.subr.bf16.mxu0 0
      %2167 = vmatpush1.bf16.xpose.msra.mxu0 0
      %2168 = vmatprep.subr.bf16.mxu0 0
      %2169 = vmatpush1.bf16.xpose.msra.mxu0 0
      %2170 = vmatprep.subr.bf16.mxu0 0
      %2171 = vmatpush1.bf16.xpose.msra.mxu0 0
      %2172 = vmatprep.subr.bf16.mxu0 0
      %2173 = vmatpush1.bf16.xpose.msra.mxu0 0
      %2174 = vmatprep.subr.bf16.mxu0 0
      %2175 = vmatpush1.bf16.xpose.msra.mxu0 0
      %2176 = vmatprep.subr.bf16.mxu0 0
      %2177 = vmatpush1.bf16.xpose.msra.mxu0 0
      %2178 = vmatprep.subr.bf16.mxu0 0
      %2179 = vmatpush1.bf16.xpose.msra.mxu0 0
      %2180 = vmatprep.subr.bf16.mxu0 0
      %2181 = vmatpush1.bf16.xpose.msra.mxu0 0
      %2182 = vmatprep.subr.bf16.mxu0 0
      %2183 = vmatpush1.bf16.xpose.msra.mxu0 0
      %2184 = vmatprep.subr.bf16.mxu0 0
      %2185 = vmatpush1.bf16.xpose.msra.mxu0 0
      %2186 = vmatprep.subr.bf16.mxu0 0
      %2187 = vmatpush1.bf16.xpose.msra.mxu0 0
      %2188 = vmatprep.subr.bf16.mxu0 0
      %2189 = vmatpush1.bf16.xpose.msra.mxu0 0
      %2190 = vmatprep.subr.bf16.mxu0 0
      %2191 = vmatpush1.bf16.xpose.msra.mxu0 0
      %2192 = vmatprep.subr.bf16.mxu0 0
      %2193 = vmatpush1.bf16.xpose.msra.mxu0 0
      %2194 = vmatprep.subr.bf16.mxu0 0
      %2195 = vmatpush1.bf16.xpose.msra.mxu0 0
      %2196 = vmatprep.mubr.bf16.mxu0 0
      %2197 = vmatmul.mubr.bf16.gmra.mrb[0].mxu0 %v2159
      %v2198 = vpop.f32.mrb[0].mxu0
      %v2199 = vadd.f32 0.0, %v2198
      %v2200 = vpop.f32.mrb[0].mxu0
      %v2201 = vpop.f32.mrb[0].mxu0
      %v2202 = vadd.f32 0.0, %v2201
      %v2203 = vpop.f32.mrb[0].mxu0
      %2204 = vdwg.mxu0
      %2206 = vrot.lane.b32.xlu0 %v653, 96
      %v2207 = vpop.permute.xlu0 %2206
      %v2209 = vsel %vm657, %v653, 0
      %v2212 = vsel %vm657, %v2207, 0
      %2214 = vmatprep.subr.bf16.mxu0 0
      %2215 = vmatpush1.bf16.xpose.msra.mxu0 %v2212
      %2216 = vmatprep.subr.bf16.mxu0 0
      %2217 = vmatpush1.bf16.xpose.msra.mxu0 0
      %2218 = vmatprep.subr.bf16.mxu0 0
      %2219 = vmatpush1.bf16.xpose.msra.mxu0 0
      %2220 = vmatprep.subr.bf16.mxu0 0
      %2221 = vmatpush1.bf16.xpose.msra.mxu0 0
      %2222 = vmatprep.subr.bf16.mxu0 0
      %2223 = vmatpush1.bf16.xpose.msra.mxu0 0
      %2224 = vmatprep.subr.bf16.mxu0 0
      %2225 = vmatpush1.bf16.xpose.msra.mxu0 0
      %2226 = vmatprep.subr.bf16.mxu0 0
      %2227 = vmatpush1.bf16.xpose.msra.mxu0 0
      %2228 = vmatprep.subr.bf16.mxu0 0
      %2229 = vmatpush1.bf16.xpose.msra.mxu0 0
      %2230 = vmatprep.subr.bf16.mxu0 0
      %2231 = vmatpush1.bf16.xpose.msra.mxu0 0
      %2232 = vmatprep.subr.bf16.mxu0 0
      %2233 = vmatpush1.bf16.xpose.msra.mxu0 0
      %2234 = vmatprep.subr.bf16.mxu0 0
      %2235 = vmatpush1.bf16.xpose.msra.mxu0 0
      %2236 = vmatprep.subr.bf16.mxu0 0
      %2237 = vmatpush1.bf16.xpose.msra.mxu0 0
      %2238 = vmatprep.subr.bf16.mxu0 0
      %2239 = vmatpush1.bf16.xpose.msra.mxu0 0
      %2240 = vmatprep.subr.bf16.mxu0 0
      %2241 = vmatpush1.bf16.xpose.msra.mxu0 0
      %2242 = vmatprep.subr.bf16.mxu0 0
      %2243 = vmatpush1.bf16.xpose.msra.mxu0 0
      %2244 = vmatprep.subr.bf16.mxu0 0
      %2245 = vmatpush1.bf16.xpose.msra.mxu0 0
      %2246 = vmatprep.mubr.bf16.mxu0 0
      %2247 = vmatmul.mubr.bf16.gmra.mrb[0].mxu0 %v2209
      %v2248 = vpop.f32.mrb[0].mxu0
      %v2249 = vadd.f32 0.0, %v2248
      %v2250 = vpop.f32.mrb[0].mxu0
      %v2251 = vpop.f32.mrb[0].mxu0
      %v2252 = vadd.f32 0.0, %v2251
      %v2253 = vpop.f32.mrb[0].mxu0
      %2254 = vdwg.mxu0
      %v2255 = vld [vmem:[%s5] sm:$0xff]
      %v2256 = vld [vmem:[%s5 + $0x8] sm:$0xff]
      %v2257 = vld [vmem:[%s5 + $0x10] sm:$0xff]
      %v2258 = vld [vmem:[%s5 + $0x18] sm:$0xff]
      %v2259 = vld [vmem:[%s5 + $0x20] sm:$0xff]
      %v2260 = vld [vmem:[%s5 + $0x28] sm:$0xff]
      %v2261 = vld [vmem:[%s5 + $0x30] sm:$0xff]
      %v2262 = vld [vmem:[%s5 + $0x38] sm:$0xff]
      %v2263 = vadd.f32 %v699, %v2255
      %v2264 = vadd.f32 %v702, %v2256
      %v2265 = vadd.f32 %v749, %v2255
      %v2266 = vadd.f32 %v752, %v2256
      %v2267 = vadd.f32 %v799, %v2255
      %v2268 = vadd.f32 %v802, %v2256
      %v2269 = vadd.f32 %v849, %v2255
      %v2270 = vadd.f32 %v852, %v2256
      %v2271 = vadd.f32 %v899, %v2255
      %v2272 = vadd.f32 %v902, %v2256
      %v2273 = vadd.f32 %v949, %v2255
      %v2274 = vadd.f32 %v952, %v2256
      %v2275 = vadd.f32 %v999, %v2255
      %v2276 = vadd.f32 %v1002, %v2256
      %v2277 = vadd.f32 %v1049, %v2255
      %v2278 = vadd.f32 %v1052, %v2256
      %v2279 = vadd.f32 %v1099, %v2257
      %v2280 = vadd.f32 %v1102, %v2258
      %v2281 = vadd.f32 %v1149, %v2257
      %v2282 = vadd.f32 %v1152, %v2258
      %v2283 = vadd.f32 %v1199, %v2257
      %v2284 = vadd.f32 %v1202, %v2258
      %v2285 = vadd.f32 %v1249, %v2257
      %v2286 = vadd.f32 %v1252, %v2258
      %v2287 = vadd.f32 %v1299, %v2257
      %v2288 = vadd.f32 %v1302, %v2258
      %v2289 = vadd.f32 %v1349, %v2257
      %v2290 = vadd.f32 %v1352, %v2258
      %v2291 = vadd.f32 %v1399, %v2257
      %v2292 = vadd.f32 %v1402, %v2258
      %v2293 = vadd.f32 %v1449, %v2257
      %v2294 = vadd.f32 %v1452, %v2258
      %v2295 = vadd.f32 %v1499, %v2259
      %v2296 = vadd.f32 %v1502, %v2260
      %v2297 = vadd.f32 %v1549, %v2259
      %v2298 = vadd.f32 %v1552, %v2260
      %v2299 = vadd.f32 %v1599, %v2259
      %v2300 = vadd.f32 %v1602, %v2260
      %v2301 = vadd.f32 %v1649, %v2259
      %v2302 = vadd.f32 %v1652, %v2260
      %v2303 = vadd.f32 %v1699, %v2259
      %v2304 = vadd.f32 %v1702, %v2260
      %v2305 = vadd.f32 %v1749, %v2259
      %v2306 = vadd.f32 %v1752, %v2260
      %v2307 = vadd.f32 %v1799, %v2259
      %v2308 = vadd.f32 %v1802, %v2260
      %v2309 = vadd.f32 %v1849, %v2259
      %v2310 = vadd.f32 %v1852, %v2260
      %v2311 = vadd.f32 %v1899, %v2261
      %v2312 = vadd.f32 %v1902, %v2262
      %v2313 = vadd.f32 %v1949, %v2261
      %v2314 = vadd.f32 %v1952, %v2262
      %v2315 = vadd.f32 %v1999, %v2261
      %v2316 = vadd.f32 %v2002, %v2262
      %v2317 = vadd.f32 %v2049, %v2261
      %v2318 = vadd.f32 %v2052, %v2262
      %v2319 = vadd.f32 %v2099, %v2261
      %v2320 = vadd.f32 %v2102, %v2262
      %v2321 = vadd.f32 %v2149, %v2261
      %v2322 = vadd.f32 %v2152, %v2262
      %v2323 = vadd.f32 %v2199, %v2261
      %v2324 = vadd.f32 %v2202, %v2262
      %v2325 = vadd.f32 %v2249, %v2261
      %v2326 = vadd.f32 %v2252, %v2262
      %vm2327 = vcmask 130048
      %v2328 = vsel %vm2327, %v2263, -inf
      %2329 = vmax.xlane.f32.xlu0 %v2328
      %v2330 = vpop.xlane.xlu0 %2329
      %v2331 = vsel %vm2327, %v2264, -inf
      %2332 = vmax.xlane.f32.xlu0 %v2331
      %v2333 = vpop.xlane.xlu0 %2332
      %v2334 = vsel %vm2327, %v2265, -inf
      %2335 = vmax.xlane.f32.xlu0 %v2334
      %v2336 = vpop.xlane.xlu0 %2335
      %v2337 = vsel %vm2327, %v2266, -inf
      %2338 = vmax.xlane.f32.xlu0 %v2337
      %v2339 = vpop.xlane.xlu0 %2338
      %v2340 = vsel %vm2327, %v2267, -inf
      %2341 = vmax.xlane.f32.xlu0 %v2340
      %v2342 = vpop.xlane.xlu0 %2341
      %v2343 = vsel %vm2327, %v2268, -inf
      %2344 = vmax.xlane.f32.xlu0 %v2343
      %v2345 = vpop.xlane.xlu0 %2344
      %v2346 = vsel %vm2327, %v2269, -inf
      %2347 = vmax.xlane.f32.xlu0 %v2346
      %v2348 = vpop.xlane.xlu0 %2347
      %v2349 = vsel %vm2327, %v2270, -inf
      %2350 = vmax.xlane.f32.xlu0 %v2349
      %v2351 = vpop.xlane.xlu0 %2350
      %v2352 = vsel %vm2327, %v2271, -inf
      %2353 = vmax.xlane.f32.xlu0 %v2352
      %v2354 = vpop.xlane.xlu0 %2353
      %v2355 = vsel %vm2327, %v2272, -inf
      %2356 = vmax.xlane.f32.xlu0 %v2355
      %v2357 = vpop.xlane.xlu0 %2356
      %v2358 = vsel %vm2327, %v2273, -inf
      %2359 = vmax.xlane.f32.xlu0 %v2358
      %v2360 = vpop.xlane.xlu0 %2359
      %v2361 = vsel %vm2327, %v2274, -inf
      %2362 = vmax.xlane.f32.xlu0 %v2361
      %v2363 = vpop.xlane.xlu0 %2362
      %v2364 = vsel %vm2327, %v2275, -inf
      %2365 = vmax.xlane.f32.xlu0 %v2364
      %v2366 = vpop.xlane.xlu0 %2365
      %v2367 = vsel %vm2327, %v2276, -inf
      %2368 = vmax.xlane.f32.xlu0 %v2367
      %v2369 = vpop.xlane.xlu0 %2368
      %v2370 = vsel %vm2327, %v2277, -inf
      %2371 = vmax.xlane.f32.xlu0 %v2370
      %v2372 = vpop.xlane.xlu0 %2371
      %v2373 = vsel %vm2327, %v2278, -inf
      %2374 = vmax.xlane.f32.xlu0 %v2373
      %v2375 = vpop.xlane.xlu0 %2374
      %v2376 = vsel %vm2327, %v2279, -inf
      %2377 = vmax.xlane.f32.xlu0 %v2376
      %v2378 = vpop.xlane.xlu0 %2377
      %v2379 = vsel %vm2327, %v2280, -inf
      %2380 = vmax.xlane.f32.xlu0 %v2379
      %v2381 = vpop.xlane.xlu0 %2380
      %v2382 = vsel %vm2327, %v2281, -inf
      %2383 = vmax.xlane.f32.xlu0 %v2382
      %v2384 = vpop.xlane.xlu0 %2383
      %v2385 = vsel %vm2327, %v2282, -inf
      %2386 = vmax.xlane.f32.xlu0 %v2385
      %v2387 = vpop.xlane.xlu0 %2386
      %v2388 = vsel %vm2327, %v2283, -inf
      %2389 = vmax.xlane.f32.xlu0 %v2388
      %v2390 = vpop.xlane.xlu0 %2389
      %v2391 = vsel %vm2327, %v2284, -inf
      %2392 = vmax.xlane.f32.xlu0 %v2391
      %v2393 = vpop.xlane.xlu0 %2392
      %v2394 = vsel %vm2327, %v2285, -inf
      %2395 = vmax.xlane.f32.xlu0 %v2394
      %v2396 = vpop.xlane.xlu0 %2395
      %v2397 = vsel %vm2327, %v2286, -inf
      %2398 = vmax.xlane.f32.xlu0 %v2397
      %v2399 = vpop.xlane.xlu0 %2398
      %v2400 = vsel %vm2327, %v2287, -inf
      %2401 = vmax.xlane.f32.xlu0 %v2400
      %v2402 = vpop.xlane.xlu0 %2401
      %v2403 = vsel %vm2327, %v2288, -inf
      %2404 = vmax.xlane.f32.xlu0 %v2403
      %v2405 = vpop.xlane.xlu0 %2404
      %v2406 = vsel %vm2327, %v2289, -inf
      %2407 = vmax.xlane.f32.xlu0 %v2406
      %v2408 = vpop.xlane.xlu0 %2407
      %v2409 = vsel %vm2327, %v2290, -inf
      %2410 = vmax.xlane.f32.xlu0 %v2409
      %v2411 = vpop.xlane.xlu0 %2410
      %v2412 = vsel %vm2327, %v2291, -inf
      %2413 = vmax.xlane.f32.xlu0 %v2412
      %v2414 = vpop.xlane.xlu0 %2413
      %v2415 = vsel %vm2327, %v2292, -inf
      %2416 = vmax.xlane.f32.xlu0 %v2415
      %v2417 = vpop.xlane.xlu0 %2416
      %v2418 = vsel %vm2327, %v2293, -inf
      %2419 = vmax.xlane.f32.xlu0 %v2418
      %v2420 = vpop.xlane.xlu0 %2419
      %v2421 = vsel %vm2327, %v2294, -inf
      %2422 = vmax.xlane.f32.xlu0 %v2421
      %v2423 = vpop.xlane.xlu0 %2422
      %v2424 = vsel %vm2327, %v2295, -inf
      %2425 = vmax.xlane.f32.xlu0 %v2424
      %v2426 = vpop.xlane.xlu0 %2425
      %v2427 = vsel %vm2327, %v2296, -inf
      %2428 = vmax.xlane.f32.xlu0 %v2427
      %v2429 = vpop.xlane.xlu0 %2428
      %v2430 = vsel %vm2327, %v2297, -inf
      %2431 = vmax.xlane.f32.xlu0 %v2430
      %v2432 = vpop.xlane.xlu0 %2431
      %v2433 = vsel %vm2327, %v2298, -inf
      %2434 = vmax.xlane.f32.xlu0 %v2433
      %v2435 = vpop.xlane.xlu0 %2434
      %v2436 = vsel %vm2327, %v2299, -inf
      %2437 = vmax.xlane.f32.xlu0 %v2436
      %v2438 = vpop.xlane.xlu0 %2437
      %v2439 = vsel %vm2327, %v2300, -inf
      %2440 = vmax.xlane.f32.xlu0 %v2439
      %v2441 = vpop.xlane.xlu0 %2440
      %v2442 = vsel %vm2327, %v2301, -inf
      %2443 = vmax.xlane.f32.xlu0 %v2442
      %v2444 = vpop.xlane.xlu0 %2443
      %v2445 = vsel %vm2327, %v2302, -inf
      %2446 = vmax.xlane.f32.xlu0 %v2445
      %v2447 = vpop.xlane.xlu0 %2446
      %v2448 = vsel %vm2327, %v2303, -inf
      %2449 = vmax.xlane.f32.xlu0 %v2448
      %v2450 = vpop.xlane.xlu0 %2449
      %v2451 = vsel %vm2327, %v2304, -inf
      %2452 = vmax.xlane.f32.xlu0 %v2451
      %v2453 = vpop.xlane.xlu0 %2452
      %v2454 = vsel %vm2327, %v2305, -inf
      %2455 = vmax.xlane.f32.xlu0 %v2454
      %v2456 = vpop.xlane.xlu0 %2455
      %v2457 = vsel %vm2327, %v2306, -inf
      %2458 = vmax.xlane.f32.xlu0 %v2457
      %v2459 = vpop.xlane.xlu0 %2458
      %v2460 = vsel %vm2327, %v2307, -inf
      %2461 = vmax.xlane.f32.xlu0 %v2460
      %v2462 = vpop.xlane.xlu0 %2461
      %v2463 = vsel %vm2327, %v2308, -inf
      %2464 = vmax.xlane.f32.xlu0 %v2463
      %v2465 = vpop.xlane.xlu0 %2464
      %v2466 = vsel %vm2327, %v2309, -inf
      %2467 = vmax.xlane.f32.xlu0 %v2466
      %v2468 = vpop.xlane.xlu0 %2467
      %v2469 = vsel %vm2327, %v2310, -inf
      %2470 = vmax.xlane.f32.xlu0 %v2469
      %v2471 = vpop.xlane.xlu0 %2470
      %v2472 = vsel %vm2327, %v2311, -inf
      %2473 = vmax.xlane.f32.xlu0 %v2472
      %v2474 = vpop.xlane.xlu0 %2473
      %v2475 = vsel %vm2327, %v2312, -inf
      %2476 = vmax.xlane.f32.xlu0 %v2475
      %v2477 = vpop.xlane.xlu0 %2476
      %v2478 = vsel %vm2327, %v2313, -inf
      %2479 = vmax.xlane.f32.xlu0 %v2478
      %v2480 = vpop.xlane.xlu0 %2479
      %v2481 = vsel %vm2327, %v2314, -inf
      %2482 = vmax.xlane.f32.xlu0 %v2481
      %v2483 = vpop.xlane.xlu0 %2482
      %v2484 = vsel %vm2327, %v2315, -inf
      %2485 = vmax.xlane.f32.xlu0 %v2484
      %v2486 = vpop.xlane.xlu0 %2485
      %v2487 = vsel %vm2327, %v2316, -inf
      %2488 = vmax.xlane.f32.xlu0 %v2487
      %v2489 = vpop.xlane.xlu0 %2488
      %v2490 = vsel %vm2327, %v2317, -inf
      %2491 = vmax.xlane.f32.xlu0 %v2490
      %v2492 = vpop.xlane.xlu0 %2491
      %v2493 = vsel %vm2327, %v2318, -inf
      %2494 = vmax.xlane.f32.xlu0 %v2493
      %v2495 = vpop.xlane.xlu0 %2494
      %v2496 = vsel %vm2327, %v2319, -inf
      %2497 = vmax.xlane.f32.xlu0 %v2496
      %v2498 = vpop.xlane.xlu0 %2497
      %v2499 = vsel %vm2327, %v2320, -inf
      %2500 = vmax.xlane.f32.xlu0 %v2499
      %v2501 = vpop.xlane.xlu0 %2500
      %v2502 = vsel %vm2327, %v2321, -inf
      %2503 = vmax.xlane.f32.xlu0 %v2502
      %v2504 = vpop.xlane.xlu0 %2503
      %v2505 = vsel %vm2327, %v2322, -inf
      %2506 = vmax.xlane.f32.xlu0 %v2505
      %v2507 = vpop.xlane.xlu0 %2506
      %v2508 = vsel %vm2327, %v2323, -inf
      %2509 = vmax.xlane.f32.xlu0 %v2508
      %v2510 = vpop.xlane.xlu0 %2509
      %v2511 = vsel %vm2327, %v2324, -inf
      %2512 = vmax.xlane.f32.xlu0 %v2511
      %v2513 = vpop.xlane.xlu0 %2512
      %v2514 = vsel %vm2327, %v2325, -inf
      %2515 = vmax.xlane.f32.xlu0 %v2514
      %v2516 = vpop.xlane.xlu0 %2515
      %v2517 = vsel %vm2327, %v2326, -inf
      %2518 = vmax.xlane.f32.xlu0 %v2517
      %v2519 = vpop.xlane.xlu0 %2518
      %v2520 = vsub.f32 %v2263, %v2330
      %v2521 = vsub.f32 %v2264, %v2333
      %v2522 = vsub.f32 %v2265, %v2336
      %v2523 = vsub.f32 %v2266, %v2339
      %v2524 = vsub.f32 %v2267, %v2342
      %v2525 = vsub.f32 %v2268, %v2345
      %v2526 = vsub.f32 %v2269, %v2348
      %v2527 = vsub.f32 %v2270, %v2351
      %v2528 = vsub.f32 %v2271, %v2354
      %v2529 = vsub.f32 %v2272, %v2357
      %v2530 = vsub.f32 %v2273, %v2360
      %v2531 = vsub.f32 %v2274, %v2363
      %v2532 = vsub.f32 %v2275, %v2366
      %v2533 = vsub.f32 %v2276, %v2369
      %v2534 = vsub.f32 %v2277, %v2372
      %v2535 = vsub.f32 %v2278, %v2375
      %v2536 = vsub.f32 %v2279, %v2378
      %v2537 = vsub.f32 %v2280, %v2381
      %v2538 = vsub.f32 %v2281, %v2384
      %v2539 = vsub.f32 %v2282, %v2387
      %v2540 = vsub.f32 %v2283, %v2390
      %v2541 = vsub.f32 %v2284, %v2393
      %v2542 = vsub.f32 %v2285, %v2396
      %v2543 = vsub.f32 %v2286, %v2399
      %v2544 = vsub.f32 %v2287, %v2402
      %v2545 = vsub.f32 %v2288, %v2405
      %v2546 = vsub.f32 %v2289, %v2408
      %v2547 = vsub.f32 %v2290, %v2411
      %v2548 = vsub.f32 %v2291, %v2414
      %v2549 = vsub.f32 %v2292, %v2417
      %v2550 = vsub.f32 %v2293, %v2420
      %v2551 = vsub.f32 %v2294, %v2423
      %v2552 = vsub.f32 %v2295, %v2426
      %v2553 = vsub.f32 %v2296, %v2429
      %v2554 = vsub.f32 %v2297, %v2432
      %v2555 = vsub.f32 %v2298, %v2435
      %v2556 = vsub.f32 %v2299, %v2438
      %v2557 = vsub.f32 %v2300, %v2441
      %v2558 = vsub.f32 %v2301, %v2444
      %v2559 = vsub.f32 %v2302, %v2447
      %v2560 = vsub.f32 %v2303, %v2450
      %v2561 = vsub.f32 %v2304, %v2453
      %v2562 = vsub.f32 %v2305, %v2456
      %v2563 = vsub.f32 %v2306, %v2459
      %v2564 = vsub.f32 %v2307, %v2462
      %v2565 = vsub.f32 %v2308, %v2465
      %v2566 = vsub.f32 %v2309, %v2468
      %v2567 = vsub.f32 %v2310, %v2471
      %v2568 = vsub.f32 %v2311, %v2474
      %v2569 = vsub.f32 %v2312, %v2477
      %v2570 = vsub.f32 %v2313, %v2480
      %v2571 = vsub.f32 %v2314, %v2483
      %v2572 = vsub.f32 %v2315, %v2486
      %v2573 = vsub.f32 %v2316, %v2489
      %v2574 = vsub.f32 %v2317, %v2492
      %v2575 = vsub.f32 %v2318, %v2495
      %v2576 = vsub.f32 %v2319, %v2498
      %v2577 = vsub.f32 %v2320, %v2501
      %v2578 = vsub.f32 %v2321, %v2504
      %v2579 = vsub.f32 %v2322, %v2507
      %v2580 = vsub.f32 %v2323, %v2510
      %v2581 = vsub.f32 %v2324, %v2513
      %v2582 = vsub.f32 %v2325, %v2516
      %v2583 = vsub.f32 %v2326, %v2519
      %v2584 = vmul.f32 %v2520, 1.442695
      %v2585 = vpow.pop %v2584
      %v2586 = vmul.f32 %v2521, 1.442695
      %v2587 = vpow.pop %v2586
      %v2588 = vmul.f32 %v2522, 1.442695
      %v2589 = vpow.pop %v2588
      %v2590 = vmul.f32 %v2523, 1.442695
      %v2591 = vpow.pop %v2590
      %v2592 = vmul.f32 %v2524, 1.442695
      %v2593 = vpow.pop %v2592
      %v2594 = vmul.f32 %v2525, 1.442695
      %v2595 = vpow.pop %v2594
      %v2596 = vmul.f32 %v2526, 1.442695
      %v2597 = vpow.pop %v2596
      %v2598 = vmul.f32 %v2527, 1.442695
      %v2599 = vpow.pop %v2598
      %v2600 = vmul.f32 %v2528, 1.442695
      %v2601 = vpow.pop %v2600
      %v2602 = vmul.f32 %v2529, 1.442695
      %v2603 = vpow.pop %v2602
      %v2604 = vmul.f32 %v2530, 1.442695
      %v2605 = vpow.pop %v2604
      %v2606 = vmul.f32 %v2531, 1.442695
      %v2607 = vpow.pop %v2606
      %v2608 = vmul.f32 %v2532, 1.442695
      %v2609 = vpow.pop %v2608
      %v2610 = vmul.f32 %v2533, 1.442695
      %v2611 = vpow.pop %v2610
      %v2612 = vmul.f32 %v2534, 1.442695
      %v2613 = vpow.pop %v2612
      %v2614 = vmul.f32 %v2535, 1.442695
      %v2615 = vpow.pop %v2614
      %v2616 = vmul.f32 %v2536, 1.442695
      %v2617 = vpow.pop %v2616
      %v2618 = vmul.f32 %v2537, 1.442695
      %v2619 = vpow.pop %v2618
      %v2620 = vmul.f32 %v2538, 1.442695
      %v2621 = vpow.pop %v2620
      %v2622 = vmul.f32 %v2539, 1.442695
      %v2623 = vpow.pop %v2622
      %v2624 = vmul.f32 %v2540, 1.442695
      %v2625 = vpow.pop %v2624
      %v2626 = vmul.f32 %v2541, 1.442695
      %v2627 = vpow.pop %v2626
      %v2628 = vmul.f32 %v2542, 1.442695
      %v2629 = vpow.pop %v2628
      %v2630 = vmul.f32 %v2543, 1.442695
      %v2631 = vpow.pop %v2630
      %v2632 = vmul.f32 %v2544, 1.442695
      %v2633 = vpow.pop %v2632
      %v2634 = vmul.f32 %v2545, 1.442695
      %v2635 = vpow.pop %v2634
      %v2636 = vmul.f32 %v2546, 1.442695
      %v2637 = vpow.pop %v2636
      %v2638 = vmul.f32 %v2547, 1.442695
      %v2639 = vpow.pop %v2638
      %v2640 = vmul.f32 %v2548, 1.442695
      %v2641 = vpow.pop %v2640
      %v2642 = vmul.f32 %v2549, 1.442695
      %v2643 = vpow.pop %v2642
      %v2644 = vmul.f32 %v2550, 1.442695
      %v2645 = vpow.pop %v2644
      %v2646 = vmul.f32 %v2551, 1.442695
      %v2647 = vpow.pop %v2646
      %v2648 = vmul.f32 %v2552, 1.442695
      %v2649 = vpow.pop %v2648
      %v2650 = vmul.f32 %v2553, 1.442695
      %v2651 = vpow.pop %v2650
      %v2652 = vmul.f32 %v2554, 1.442695
      %v2653 = vpow.pop %v2652
      %v2654 = vmul.f32 %v2555, 1.442695
      %v2655 = vpow.pop %v2654
      %v2656 = vmul.f32 %v2556, 1.442695
      %v2657 = vpow.pop %v2656
      %v2658 = vmul.f32 %v2557, 1.442695
      %v2659 = vpow.pop %v2658
      %v2660 = vmul.f32 %v2558, 1.442695
      %v2661 = vpow.pop %v2660
      %v2662 = vmul.f32 %v2559, 1.442695
      %v2663 = vpow.pop %v2662
      %v2664 = vmul.f32 %v2560, 1.442695
      %v2665 = vpow.pop %v2664
      %v2666 = vmul.f32 %v2561, 1.442695
      %v2667 = vpow.pop %v2666
      %v2668 = vmul.f32 %v2562, 1.442695
      %v2669 = vpow.pop %v2668
      %v2670 = vmul.f32 %v2563, 1.442695
      %v2671 = vpow.pop %v2670
      %v2672 = vmul.f32 %v2564, 1.442695
      %v2673 = vpow.pop %v2672
      %v2674 = vmul.f32 %v2565, 1.442695
      %v2675 = vpow.pop %v2674
      %v2676 = vmul.f32 %v2566, 1.442695
      %v2677 = vpow.pop %v2676
      %v2678 = vmul.f32 %v2567, 1.442695
      %v2679 = vpow.pop %v2678
      %v2680 = vmul.f32 %v2568, 1.442695
      %v2681 = vpow.pop %v2680
      %v2682 = vmul.f32 %v2569, 1.442695
      %v2683 = vpow.pop %v2682
      %v2684 = vmul.f32 %v2570, 1.442695
      %v2685 = vpow.pop %v2684
      %v2686 = vmul.f32 %v2571, 1.442695
      %v2687 = vpow.pop %v2686
      %v2688 = vmul.f32 %v2572, 1.442695
      %v2689 = vpow.pop %v2688
      %v2690 = vmul.f32 %v2573, 1.442695
      %v2691 = vpow.pop %v2690
      %v2692 = vmul.f32 %v2574, 1.442695
      %v2693 = vpow.pop %v2692
      %v2694 = vmul.f32 %v2575, 1.442695
      %v2695 = vpow.pop %v2694
      %v2696 = vmul.f32 %v2576, 1.442695
      %v2697 = vpow.pop %v2696
      %v2698 = vmul.f32 %v2577, 1.442695
      %v2699 = vpow.pop %v2698
      %v2700 = vmul.f32 %v2578, 1.442695
      %v2701 = vpow.pop %v2700
      %v2702 = vmul.f32 %v2579, 1.442695
      %v2703 = vpow.pop %v2702
      %v2704 = vmul.f32 %v2580, 1.442695
      %v2705 = vpow.pop %v2704
      %v2706 = vmul.f32 %v2581, 1.442695
      %v2707 = vpow.pop %v2706
      %v2708 = vmul.f32 %v2582, 1.442695
      %v2709 = vpow.pop %v2708
      %v2710 = vmul.f32 %v2583, 1.442695
      %v2711 = vpow.pop %v2710
      %v2712 = vsel %vm2327, %v2585, 0.0
      %2713 = vadd.xlane.f32.xlu0 %v2712
      %v2714 = vpop.xlane.xlu0 %2713
      %v2715 = vsel %vm2327, %v2587, 0.0
      %2716 = vadd.xlane.f32.xlu0 %v2715
      %v2717 = vpop.xlane.xlu0 %2716
      %v2718 = vsel %vm2327, %v2589, 0.0
      %2719 = vadd.xlane.f32.xlu0 %v2718
      %v2720 = vpop.xlane.xlu0 %2719
      %v2721 = vsel %vm2327, %v2591, 0.0
      %2722 = vadd.xlane.f32.xlu0 %v2721
      %v2723 = vpop.xlane.xlu0 %2722
      %v2724 = vsel %vm2327, %v2593, 0.0
      %2725 = vadd.xlane.f32.xlu0 %v2724
      %v2726 = vpop.xlane.xlu0 %2725
      %v2727 = vsel %vm2327, %v2595, 0.0
      %2728 = vadd.xlane.f32.xlu0 %v2727
      %v2729 = vpop.xlane.xlu0 %2728
      %v2730 = vsel %vm2327, %v2597, 0.0
      %2731 = vadd.xlane.f32.xlu0 %v2730
      %v2732 = vpop.xlane.xlu0 %2731
      %v2733 = vsel %vm2327, %v2599, 0.0
      %2734 = vadd.xlane.f32.xlu0 %v2733
      %v2735 = vpop.xlane.xlu0 %2734
      %v2736 = vsel %vm2327, %v2601, 0.0
      %2737 = vadd.xlane.f32.xlu0 %v2736
      %v2738 = vpop.xlane.xlu0 %2737
      %v2739 = vsel %vm2327, %v2603, 0.0
      %2740 = vadd.xlane.f32.xlu0 %v2739
      %v2741 = vpop.xlane.xlu0 %2740
      %v2742 = vsel %vm2327, %v2605, 0.0
      %2743 = vadd.xlane.f32.xlu0 %v2742
      %v2744 = vpop.xlane.xlu0 %2743
      %v2745 = vsel %vm2327, %v2607, 0.0
      %2746 = vadd.xlane.f32.xlu0 %v2745
      %v2747 = vpop.xlane.xlu0 %2746
      %v2748 = vsel %vm2327, %v2609, 0.0
      %2749 = vadd.xlane.f32.xlu0 %v2748
      %v2750 = vpop.xlane.xlu0 %2749
      %v2751 = vsel %vm2327, %v2611, 0.0
      %2752 = vadd.xlane.f32.xlu0 %v2751
      %v2753 = vpop.xlane.xlu0 %2752
      %v2754 = vsel %vm2327, %v2613, 0.0
      %2755 = vadd.xlane.f32.xlu0 %v2754
      %v2756 = vpop.xlane.xlu0 %2755
      %v2757 = vsel %vm2327, %v2615, 0.0
      %2758 = vadd.xlane.f32.xlu0 %v2757
      %v2759 = vpop.xlane.xlu0 %2758
      %v2760 = vsel %vm2327, %v2617, 0.0
      %2761 = vadd.xlane.f32.xlu0 %v2760
      %v2762 = vpop.xlane.xlu0 %2761
      %v2763 = vsel %vm2327, %v2619, 0.0
      %2764 = vadd.xlane.f32.xlu0 %v2763
      %v2765 = vpop.xlane.xlu0 %2764
      %v2766 = vsel %vm2327, %v2621, 0.0
      %2767 = vadd.xlane.f32.xlu0 %v2766
      %v2768 = vpop.xlane.xlu0 %2767
      %v2769 = vsel %vm2327, %v2623, 0.0
      %2770 = vadd.xlane.f32.xlu0 %v2769
      %v2771 = vpop.xlane.xlu0 %2770
      %v2772 = vsel %vm2327, %v2625, 0.0
      %2773 = vadd.xlane.f32.xlu0 %v2772
      %v2774 = vpop.xlane.xlu0 %2773
      %v2775 = vsel %vm2327, %v2627, 0.0
      %2776 = vadd.xlane.f32.xlu0 %v2775
      %v2777 = vpop.xlane.xlu0 %2776
      %v2778 = vsel %vm2327, %v2629, 0.0
      %2779 = vadd.xlane.f32.xlu0 %v2778
      %v2780 = vpop.xlane.xlu0 %2779
      %v2781 = vsel %vm2327, %v2631, 0.0
      %2782 = vadd.xlane.f32.xlu0 %v2781
      %v2783 = vpop.xlane.xlu0 %2782
      %v2784 = vsel %vm2327, %v2633, 0.0
      %2785 = vadd.xlane.f32.xlu0 %v2784
      %v2786 = vpop.xlane.xlu0 %2785
      %v2787 = vsel %vm2327, %v2635, 0.0
      %2788 = vadd.xlane.f32.xlu0 %v2787
      %v2789 = vpop.xlane.xlu0 %2788
      %v2790 = vsel %vm2327, %v2637, 0.0
      %2791 = vadd.xlane.f32.xlu0 %v2790
      %v2792 = vpop.xlane.xlu0 %2791
      %v2793 = vsel %vm2327, %v2639, 0.0
      %2794 = vadd.xlane.f32.xlu0 %v2793
      %v2795 = vpop.xlane.xlu0 %2794
      %v2796 = vsel %vm2327, %v2641, 0.0
      %2797 = vadd.xlane.f32.xlu0 %v2796
      %v2798 = vpop.xlane.xlu0 %2797
      %v2799 = vsel %vm2327, %v2643, 0.0
      %2800 = vadd.xlane.f32.xlu0 %v2799
      %v2801 = vpop.xlane.xlu0 %2800
      %v2802 = vsel %vm2327, %v2645, 0.0
      %2803 = vadd.xlane.f32.xlu0 %v2802
      %v2804 = vpop.xlane.xlu0 %2803
      %v2805 = vsel %vm2327, %v2647, 0.0
      %2806 = vadd.xlane.f32.xlu0 %v2805
      %v2807 = vpop.xlane.xlu0 %2806
      %v2808 = vsel %vm2327, %v2649, 0.0
      %2809 = vadd.xlane.f32.xlu0 %v2808
      %v2810 = vpop.xlane.xlu0 %2809
      %v2811 = vsel %vm2327, %v2651, 0.0
      %2812 = vadd.xlane.f32.xlu0 %v2811
      %v2813 = vpop.xlane.xlu0 %2812
      %v2814 = vsel %vm2327, %v2653, 0.0
      %2815 = vadd.xlane.f32.xlu0 %v2814
      %v2816 = vpop.xlane.xlu0 %2815
      %v2817 = vsel %vm2327, %v2655, 0.0
      %2818 = vadd.xlane.f32.xlu0 %v2817
      %v2819 = vpop.xlane.xlu0 %2818
      %v2820 = vsel %vm2327, %v2657, 0.0
      %2821 = vadd.xlane.f32.xlu0 %v2820
      %v2822 = vpop.xlane.xlu0 %2821
      %v2823 = vsel %vm2327, %v2659, 0.0
      %2824 = vadd.xlane.f32.xlu0 %v2823
      %v2825 = vpop.xlane.xlu0 %2824
      %v2826 = vsel %vm2327, %v2661, 0.0
      %2827 = vadd.xlane.f32.xlu0 %v2826
      %v2828 = vpop.xlane.xlu0 %2827
      %v2829 = vsel %vm2327, %v2663, 0.0
      %2830 = vadd.xlane.f32.xlu0 %v2829
      %v2831 = vpop.xlane.xlu0 %2830
      %v2832 = vsel %vm2327, %v2665, 0.0
      %2833 = vadd.xlane.f32.xlu0 %v2832
      %v2834 = vpop.xlane.xlu0 %2833
      %v2835 = vsel %vm2327, %v2667, 0.0
      %2836 = vadd.xlane.f32.xlu0 %v2835
      %v2837 = vpop.xlane.xlu0 %2836
      %v2838 = vsel %vm2327, %v2669, 0.0
      %2839 = vadd.xlane.f32.xlu0 %v2838
      %v2840 = vpop.xlane.xlu0 %2839
      %v2841 = vsel %vm2327, %v2671, 0.0
      %2842 = vadd.xlane.f32.xlu0 %v2841
      %v2843 = vpop.xlane.xlu0 %2842
      %v2844 = vsel %vm2327, %v2673, 0.0
      %2845 = vadd.xlane.f32.xlu0 %v2844
      %v2846 = vpop.xlane.xlu0 %2845
      %v2847 = vsel %vm2327, %v2675, 0.0
      %2848 = vadd.xlane.f32.xlu0 %v2847
      %v2849 = vpop.xlane.xlu0 %2848
      %v2850 = vsel %vm2327, %v2677, 0.0
      %2851 = vadd.xlane.f32.xlu0 %v2850
      %v2852 = vpop.xlane.xlu0 %2851
      %v2853 = vsel %vm2327, %v2679, 0.0
      %2854 = vadd.xlane.f32.xlu0 %v2853
      %v2855 = vpop.xlane.xlu0 %2854
      %v2856 = vsel %vm2327, %v2681, 0.0
      %2857 = vadd.xlane.f32.xlu0 %v2856
      %v2858 = vpop.xlane.xlu0 %2857
      %v2859 = vsel %vm2327, %v2683, 0.0
      %2860 = vadd.xlane.f32.xlu0 %v2859
      %v2861 = vpop.xlane.xlu0 %2860
      %v2862 = vsel %vm2327, %v2685, 0.0
      %2863 = vadd.xlane.f32.xlu0 %v2862
      %v2864 = vpop.xlane.xlu0 %2863
      %v2865 = vsel %vm2327, %v2687, 0.0
      %2866 = vadd.xlane.f32.xlu0 %v2865
      %v2867 = vpop.xlane.xlu0 %2866
      %v2868 = vsel %vm2327, %v2689, 0.0
      %2869 = vadd.xlane.f32.xlu0 %v2868
      %v2870 = vpop.xlane.xlu0 %2869
      %v2871 = vsel %vm2327, %v2691, 0.0
      %2872 = vadd.xlane.f32.xlu0 %v2871
      %v2873 = vpop.xlane.xlu0 %2872
      %v2874 = vsel %vm2327, %v2693, 0.0
      %2875 = vadd.xlane.f32.xlu0 %v2874
      %v2876 = vpop.xlane.xlu0 %2875
      %v2877 = vsel %vm2327, %v2695, 0.0
      %2878 = vadd.xlane.f32.xlu0 %v2877
      %v2879 = vpop.xlane.xlu0 %2878
      %v2880 = vsel %vm2327, %v2697, 0.0
      %2881 = vadd.xlane.f32.xlu0 %v2880
      %v2882 = vpop.xlane.xlu0 %2881
      %v2883 = vsel %vm2327, %v2699, 0.0
      %2884 = vadd.xlane.f32.xlu0 %v2883
      %v2885 = vpop.xlane.xlu0 %2884
      %v2886 = vsel %vm2327, %v2701, 0.0
      %2887 = vadd.xlane.f32.xlu0 %v2886
      %v2888 = vpop.xlane.xlu0 %2887
      %v2889 = vsel %vm2327, %v2703, 0.0
      %2890 = vadd.xlane.f32.xlu0 %v2889
      %v2891 = vpop.xlane.xlu0 %2890
      %v2892 = vsel %vm2327, %v2705, 0.0
      %2893 = vadd.xlane.f32.xlu0 %v2892
      %v2894 = vpop.xlane.xlu0 %2893
      %v2895 = vsel %vm2327, %v2707, 0.0
      %2896 = vadd.xlane.f32.xlu0 %v2895
      %v2897 = vpop.xlane.xlu0 %2896
      %v2898 = vsel %vm2327, %v2709, 0.0
      %2899 = vadd.xlane.f32.xlu0 %v2898
      %v2900 = vpop.xlane.xlu0 %2899
      %v2901 = vsel %vm2327, %v2711, 0.0
      %2902 = vadd.xlane.f32.xlu0 %v2901
      %v2903 = vpop.xlane.xlu0 %2902
      %v2904 = vrcp.pop %v2714
      %v2905 = vrcp.pop %v2717
      %v2906 = vrcp.pop %v2720
      %v2907 = vrcp.pop %v2723
      %v2908 = vrcp.pop %v2726
      %v2909 = vrcp.pop %v2729
      %v2910 = vrcp.pop %v2732
      %v2911 = vrcp.pop %v2735
      %v2912 = vrcp.pop %v2738
      %v2913 = vrcp.pop %v2741
      %v2914 = vrcp.pop %v2744
      %v2915 = vrcp.pop %v2747
      %v2916 = vrcp.pop %v2750
      %v2917 = vrcp.pop %v2753
      %v2918 = vrcp.pop %v2756
      %v2919 = vrcp.pop %v2759
      %v2920 = vrcp.pop %v2762
      %v2921 = vrcp.pop %v2765
      %v2922 = vrcp.pop %v2768
      %v2923 = vrcp.pop %v2771
      %v2924 = vrcp.pop %v2774
      %v2925 = vrcp.pop %v2777
      %v2926 = vrcp.pop %v2780
      %v2927 = vrcp.pop %v2783
      %v2928 = vrcp.pop %v2786
      %v2929 = vrcp.pop %v2789
      %v2930 = vrcp.pop %v2792
      %v2931 = vrcp.pop %v2795
      %v2932 = vrcp.pop %v2798
      %v2933 = vrcp.pop %v2801
      %v2934 = vrcp.pop %v2804
      %v2935 = vrcp.pop %v2807
      %v2936 = vrcp.pop %v2810
      %v2937 = vrcp.pop %v2813
      %v2938 = vrcp.pop %v2816
      %v2939 = vrcp.pop %v2819
      %v2940 = vrcp.pop %v2822
      %v2941 = vrcp.pop %v2825
      %v2942 = vrcp.pop %v2828
      %v2943 = vrcp.pop %v2831
      %v2944 = vrcp.pop %v2834
      %v2945 = vrcp.pop %v2837
      %v2946 = vrcp.pop %v2840
      %v2947 = vrcp.pop %v2843
      %v2948 = vrcp.pop %v2846
      %v2949 = vrcp.pop %v2849
      %v2950 = vrcp.pop %v2852
      %v2951 = vrcp.pop %v2855
      %v2952 = vrcp.pop %v2858
      %v2953 = vrcp.pop %v2861
      %v2954 = vrcp.pop %v2864
      %v2955 = vrcp.pop %v2867
      %v2956 = vrcp.pop %v2870
      %v2957 = vrcp.pop %v2873
      %v2958 = vrcp.pop %v2876
      %v2959 = vrcp.pop %v2879
      %v2960 = vrcp.pop %v2882
      %v2961 = vrcp.pop %v2885
      %v2962 = vrcp.pop %v2888
      %v2963 = vrcp.pop %v2891
      %v2964 = vrcp.pop %v2894
      %v2965 = vrcp.pop %v2897
      %v2966 = vrcp.pop %v2900
      %v2967 = vrcp.pop %v2903
      %v2968 = vmul.f32 %v2585, %v2904
      %v2969 = vmul.f32 %v2587, %v2905
      %v2970 = vmul.f32 %v2589, %v2906
      %v2971 = vmul.f32 %v2591, %v2907
      %v2972 = vmul.f32 %v2593, %v2908
      %v2973 = vmul.f32 %v2595, %v2909
      %v2974 = vmul.f32 %v2597, %v2910
      %v2975 = vmul.f32 %v2599, %v2911
      %v2976 = vmul.f32 %v2601, %v2912
      %v2977 = vmul.f32 %v2603, %v2913
      %v2978 = vmul.f32 %v2605, %v2914
      %v2979 = vmul.f32 %v2607, %v2915
      %v2980 = vmul.f32 %v2609, %v2916
      %v2981 = vmul.f32 %v2611, %v2917
      %v2982 = vmul.f32 %v2613, %v2918
      %v2983 = vmul.f32 %v2615, %v2919
      %v2984 = vmul.f32 %v2617, %v2920
      %v2985 = vmul.f32 %v2619, %v2921
      %v2986 = vmul.f32 %v2621, %v2922
      %v2987 = vmul.f32 %v2623, %v2923
      %v2988 = vmul.f32 %v2625, %v2924
      %v2989 = vmul.f32 %v2627, %v2925
      %v2990 = vmul.f32 %v2629, %v2926
      %v2991 = vmul.f32 %v2631, %v2927
      %v2992 = vmul.f32 %v2633, %v2928
      %v2993 = vmul.f32 %v2635, %v2929
      %v2994 = vmul.f32 %v2637, %v2930
      %v2995 = vmul.f32 %v2639, %v2931
      %v2996 = vmul.f32 %v2641, %v2932
      %v2997 = vmul.f32 %v2643, %v2933
      %v2998 = vmul.f32 %v2645, %v2934
      %v2999 = vmul.f32 %v2647, %v2935
      %v3000 = vmul.f32 %v2649, %v2936
      %v3001 = vmul.f32 %v2651, %v2937
      %v3002 = vmul.f32 %v2653, %v2938
      %v3003 = vmul.f32 %v2655, %v2939
      %v3004 = vmul.f32 %v2657, %v2940
      %v3005 = vmul.f32 %v2659, %v2941
      %v3006 = vmul.f32 %v2661, %v2942
      %v3007 = vmul.f32 %v2663, %v2943
      %v3008 = vmul.f32 %v2665, %v2944
      %v3009 = vmul.f32 %v2667, %v2945
      %v3010 = vmul.f32 %v2669, %v2946
      %v3011 = vmul.f32 %v2671, %v2947
      %v3012 = vmul.f32 %v2673, %v2948
      %v3013 = vmul.f32 %v2675, %v2949
      %v3014 = vmul.f32 %v2677, %v2950
      %v3015 = vmul.f32 %v2679, %v2951
      %v3016 = vmul.f32 %v2681, %v2952
      %v3017 = vmul.f32 %v2683, %v2953
      %v3018 = vmul.f32 %v2685, %v2954
      %v3019 = vmul.f32 %v2687, %v2955
      %v3020 = vmul.f32 %v2689, %v2956
      %v3021 = vmul.f32 %v2691, %v2957
      %v3022 = vmul.f32 %v2693, %v2958
      %v3023 = vmul.f32 %v2695, %v2959
      %v3024 = vmul.f32 %v2697, %v2960
      %v3025 = vmul.f32 %v2699, %v2961
      %v3026 = vmul.f32 %v2701, %v2962
      %v3027 = vmul.f32 %v2703, %v2963
      %v3028 = vmul.f32 %v2705, %v2964
      %v3029 = vmul.f32 %v2707, %v2965
      %v3030 = vmul.f32 %v2709, %v2966
      %v3031 = vmul.f32 %v2711, %v2967
      %v3032 = vpack.c.bf16 %v2969, %v2968
      %v3033 = vpack.c.bf16 %v2971, %v2970
      %v3034 = vpack.c.bf16 %v2973, %v2972
      %v3035 = vpack.c.bf16 %v2975, %v2974
      %v3036 = vpack.c.bf16 %v2977, %v2976
      %v3037 = vpack.c.bf16 %v2979, %v2978
      %v3038 = vpack.c.bf16 %v2981, %v2980
      %v3039 = vpack.c.bf16 %v2983, %v2982
      %v3040 = vpack.c.bf16 %v2985, %v2984
      %v3041 = vpack.c.bf16 %v2987, %v2986
      %v3042 = vpack.c.bf16 %v2989, %v2988
      %v3043 = vpack.c.bf16 %v2991, %v2990
      %v3044 = vpack.c.bf16 %v2993, %v2992
      %v3045 = vpack.c.bf16 %v2995, %v2994
      %v3046 = vpack.c.bf16 %v2997, %v2996
      %v3047 = vpack.c.bf16 %v2999, %v2998
      %v3048 = vpack.c.bf16 %v3001, %v3000
      %v3049 = vpack.c.bf16 %v3003, %v3002
      %v3050 = vpack.c.bf16 %v3005, %v3004
      %v3051 = vpack.c.bf16 %v3007, %v3006
      %v3052 = vpack.c.bf16 %v3009, %v3008
      %v3053 = vpack.c.bf16 %v3011, %v3010
      %v3054 = vpack.c.bf16 %v3013, %v3012
      %v3055 = vpack.c.bf16 %v3015, %v3014
      %v3056 = vpack.c.bf16 %v3017, %v3016
      %v3057 = vpack.c.bf16 %v3019, %v3018
      %v3058 = vpack.c.bf16 %v3021, %v3020
      %v3059 = vpack.c.bf16 %v3023, %v3022
      %v3060 = vpack.c.bf16 %v3025, %v3024
      %v3061 = vpack.c.bf16 %v3027, %v3026
      %v3062 = vpack.c.bf16 %v3029, %v3028
      %v3063 = vpack.c.bf16 %v3031, %v3030
      %3064 = vrot.lane.b32.xlu0 %v622, 64
      %v3065 = vpop.permute.xlu0 %3064
      %v3068 = vsel %vm2327, %v3032, 0
      %3070 = vmatprep.subr.bf16.mxu0 0
      %3071 = vmatpush1.bf16.msra.mxu0 %v3065
      %3072 = vmatprep.subr.bf16.mxu0 0
      %3073 = vmatpush1.bf16.msra.mxu0 0
      %3074 = vmatprep.subr.bf16.mxu0 0
      %3075 = vmatpush1.bf16.msra.mxu0 0
      %3076 = vmatprep.subr.bf16.mxu0 0
      %3077 = vmatpush1.bf16.msra.mxu0 0
      %3078 = vmatprep.subr.bf16.mxu0 0
      %3079 = vmatpush1.bf16.msra.mxu0 0
      %3080 = vmatprep.subr.bf16.mxu0 0
      %3081 = vmatpush1.bf16.msra.mxu0 0
      %3082 = vmatprep.subr.bf16.mxu0 0
      %3083 = vmatpush1.bf16.msra.mxu0 0
      %3084 = vmatprep.subr.bf16.mxu0 0
      %3085 = vmatpush1.bf16.msra.mxu0 0
      %3086 = vmatprep.subr.bf16.mxu0 0
      %3087 = vmatpush1.bf16.msra.mxu0 0
      %3088 = vmatprep.subr.bf16.mxu0 0
      %3089 = vmatpush1.bf16.msra.mxu0 0
      %3090 = vmatprep.subr.bf16.mxu0 0
      %3091 = vmatpush1.bf16.msra.mxu0 0
      %3092 = vmatprep.subr.bf16.mxu0 0
      %3093 = vmatpush1.bf16.msra.mxu0 0
      %3094 = vmatprep.subr.bf16.mxu0 0
      %3095 = vmatpush1.bf16.msra.mxu0 0
      %3096 = vmatprep.subr.bf16.mxu0 0
      %3097 = vmatpush1.bf16.msra.mxu0 0
      %3098 = vmatprep.subr.bf16.mxu0 0
      %3099 = vmatpush1.bf16.msra.mxu0 0
      %3100 = vmatprep.subr.bf16.mxu0 0
      %3101 = vmatpush1.bf16.msra.mxu0 0
      %3102 = vmatprep.mubr.bf16.mxu0 0
      %3103 = vmatmul.mubr.bf16.gmra.mrb[0].mxu0 %v3068
      %v3104 = vpop.f32.mrb[0].mxu0
      %v3105 = vadd.f32 0.0, %v3104
      %v3106 = vpop.f32.mrb[0].mxu0
      %v3107 = vpop.f32.mrb[0].mxu0
      %v3108 = vadd.f32 0.0, %v3107
      %v3109 = vpop.f32.mrb[0].mxu0
      %3110 = vdwg.mxu0
      %3111 = vrot.lane.b32.xlu0 %v623, 64
      %v3112 = vpop.permute.xlu0 %3111
      %v3115 = vsel %vm2327, %v3033, 0
      %3117 = vmatprep.subr.bf16.mxu0 0
      %3118 = vmatpush1.bf16.msra.mxu0 %v3112
      %3119 = vmatprep.subr.bf16.mxu0 0
      %3120 = vmatpush1.bf16.msra.mxu0 0
      %3121 = vmatprep.subr.bf16.mxu0 0
      %3122 = vmatpush1.bf16.msra.mxu0 0
      %3123 = vmatprep.subr.bf16.mxu0 0
      %3124 = vmatpush1.bf16.msra.mxu0 0
      %3125 = vmatprep.subr.bf16.mxu0 0
      %3126 = vmatpush1.bf16.msra.mxu0 0
      %3127 = vmatprep.subr.bf16.mxu0 0
      %3128 = vmatpush1.bf16.msra.mxu0 0
      %3129 = vmatprep.subr.bf16.mxu0 0
      %3130 = vmatpush1.bf16.msra.mxu0 0
      %3131 = vmatprep.subr.bf16.mxu0 0
      %3132 = vmatpush1.bf16.msra.mxu0 0
      %3133 = vmatprep.subr.bf16.mxu0 0
      %3134 = vmatpush1.bf16.msra.mxu0 0
      %3135 = vmatprep.subr.bf16.mxu0 0
      %3136 = vmatpush1.bf16.msra.mxu0 0
      %3137 = vmatprep.subr.bf16.mxu0 0
      %3138 = vmatpush1.bf16.msra.mxu0 0
      %3139 = vmatprep.subr.bf16.mxu0 0
      %3140 = vmatpush1.bf16.msra.mxu0 0
      %3141 = vmatprep.subr.bf16.mxu0 0
      %3142 = vmatpush1.bf16.msra.mxu0 0
      %3143 = vmatprep.subr.bf16.mxu0 0
      %3144 = vmatpush1.bf16.msra.mxu0 0
      %3145 = vmatprep.subr.bf16.mxu0 0
      %3146 = vmatpush1.bf16.msra.mxu0 0
      %3147 = vmatprep.subr.bf16.mxu0 0
      %3148 = vmatpush1.bf16.msra.mxu0 0
      %3149 = vmatprep.mubr.bf16.mxu0 0
      %3150 = vmatmul.mubr.bf16.gmra.mrb[0].mxu0 %v3115
      %v3151 = vpop.f32.mrb[0].mxu0
      %v3152 = vadd.f32 0.0, %v3151
      %v3153 = vpop.f32.mrb[0].mxu0
      %v3154 = vpop.f32.mrb[0].mxu0
      %v3155 = vadd.f32 0.0, %v3154
      %v3156 = vpop.f32.mrb[0].mxu0
      %3157 = vdwg.mxu0
      %3158 = vrot.lane.b32.xlu0 %v624, 64
      %v3159 = vpop.permute.xlu0 %3158
      %v3162 = vsel %vm2327, %v3034, 0
      %3164 = vmatprep.subr.bf16.mxu0 0
      %3165 = vmatpush1.bf16.msra.mxu0 %v3159
      %3166 = vmatprep.subr.bf16.mxu0 0
      %3167 = vmatpush1.bf16.msra.mxu0 0
      %3168 = vmatprep.subr.bf16.mxu0 0
      %3169 = vmatpush1.bf16.msra.mxu0 0
      %3170 = vmatprep.subr.bf16.mxu0 0
      %3171 = vmatpush1.bf16.msra.mxu0 0
      %3172 = vmatprep.subr.bf16.mxu0 0
      %3173 = vmatpush1.bf16.msra.mxu0 0
      %3174 = vmatprep.subr.bf16.mxu0 0
      %3175 = vmatpush1.bf16.msra.mxu0 0
      %3176 = vmatprep.subr.bf16.mxu0 0
      %3177 = vmatpush1.bf16.msra.mxu0 0
      %3178 = vmatprep.subr.bf16.mxu0 0
      %3179 = vmatpush1.bf16.msra.mxu0 0
      %3180 = vmatprep.subr.bf16.mxu0 0
      %3181 = vmatpush1.bf16.msra.mxu0 0
      %3182 = vmatprep.subr.bf16.mxu0 0
      %3183 = vmatpush1.bf16.msra.mxu0 0
      %3184 = vmatprep.subr.bf16.mxu0 0
      %3185 = vmatpush1.bf16.msra.mxu0 0
      %3186 = vmatprep.subr.bf16.mxu0 0
      %3187 = vmatpush1.bf16.msra.mxu0 0
      %3188 = vmatprep.subr.bf16.mxu0 0
      %3189 = vmatpush1.bf16.msra.mxu0 0
      %3190 = vmatprep.subr.bf16.mxu0 0
      %3191 = vmatpush1.bf16.msra.mxu0 0
      %3192 = vmatprep.subr.bf16.mxu0 0
      %3193 = vmatpush1.bf16.msra.mxu0 0
      %3194 = vmatprep.subr.bf16.mxu0 0
      %3195 = vmatpush1.bf16.msra.mxu0 0
      %3196 = vmatprep.mubr.bf16.mxu0 0
      %3197 = vmatmul.mubr.bf16.gmra.mrb[0].mxu0 %v3162
      %v3198 = vpop.f32.mrb[0].mxu0
      %v3199 = vadd.f32 0.0, %v3198
      %v3200 = vpop.f32.mrb[0].mxu0
      %v3201 = vpop.f32.mrb[0].mxu0
      %v3202 = vadd.f32 0.0, %v3201
      %v3203 = vpop.f32.mrb[0].mxu0
      %3204 = vdwg.mxu0
      %3205 = vrot.lane.b32.xlu0 %v625, 64
      %v3206 = vpop.permute.xlu0 %3205
      %v3209 = vsel %vm2327, %v3035, 0
      %3211 = vmatprep.subr.bf16.mxu0 0
      %3212 = vmatpush1.bf16.msra.mxu0 %v3206
      %3213 = vmatprep.subr.bf16.mxu0 0
      %3214 = vmatpush1.bf16.msra.mxu0 0
      %3215 = vmatprep.subr.bf16.mxu0 0
      %3216 = vmatpush1.bf16.msra.mxu0 0
      %3217 = vmatprep.subr.bf16.mxu0 0
      %3218 = vmatpush1.bf16.msra.mxu0 0
      %3219 = vmatprep.subr.bf16.mxu0 0
      %3220 = vmatpush1.bf16.msra.mxu0 0
      %3221 = vmatprep.subr.bf16.mxu0 0
      %3222 = vmatpush1.bf16.msra.mxu0 0
      %3223 = vmatprep.subr.bf16.mxu0 0
      %3224 = vmatpush1.bf16.msra.mxu0 0
      %3225 = vmatprep.subr.bf16.mxu0 0
      %3226 = vmatpush1.bf16.msra.mxu0 0
      %3227 = vmatprep.subr.bf16.mxu0 0
      %3228 = vmatpush1.bf16.msra.mxu0 0
      %3229 = vmatprep.subr.bf16.mxu0 0
      %3230 = vmatpush1.bf16.msra.mxu0 0
      %3231 = vmatprep.subr.bf16.mxu0 0
      %3232 = vmatpush1.bf16.msra.mxu0 0
      %3233 = vmatprep.subr.bf16.mxu0 0
      %3234 = vmatpush1.bf16.msra.mxu0 0
      %3235 = vmatprep.subr.bf16.mxu0 0
      %3236 = vmatpush1.bf16.msra.mxu0 0
      %3237 = vmatprep.subr.bf16.mxu0 0
      %3238 = vmatpush1.bf16.msra.mxu0 0
      %3239 = vmatprep.subr.bf16.mxu0 0
      %3240 = vmatpush1.bf16.msra.mxu0 0
      %3241 = vmatprep.subr.bf16.mxu0 0
      %3242 = vmatpush1.bf16.msra.mxu0 0
      %3243 = vmatprep.mubr.bf16.mxu0 0
      %3244 = vmatmul.mubr.bf16.gmra.mrb[0].mxu0 %v3209
      %v3245 = vpop.f32.mrb[0].mxu0
      %v3246 = vadd.f32 0.0, %v3245
      %v3247 = vpop.f32.mrb[0].mxu0
      %v3248 = vpop.f32.mrb[0].mxu0
      %v3249 = vadd.f32 0.0, %v3248
      %v3250 = vpop.f32.mrb[0].mxu0
      %3251 = vdwg.mxu0
      %3252 = vrot.lane.b32.xlu0 %v626, 64
      %v3253 = vpop.permute.xlu0 %3252
      %v3256 = vsel %vm2327, %v3036, 0
      %3258 = vmatprep.subr.bf16.mxu0 0
      %3259 = vmatpush1.bf16.msra.mxu0 %v3253
      %3260 = vmatprep.subr.bf16.mxu0 0
      %3261 = vmatpush1.bf16.msra.mxu0 0
      %3262 = vmatprep.subr.bf16.mxu0 0
      %3263 = vmatpush1.bf16.msra.mxu0 0
      %3264 = vmatprep.subr.bf16.mxu0 0
      %3265 = vmatpush1.bf16.msra.mxu0 0
      %3266 = vmatprep.subr.bf16.mxu0 0
      %3267 = vmatpush1.bf16.msra.mxu0 0
      %3268 = vmatprep.subr.bf16.mxu0 0
      %3269 = vmatpush1.bf16.msra.mxu0 0
      %3270 = vmatprep.subr.bf16.mxu0 0
      %3271 = vmatpush1.bf16.msra.mxu0 0
      %3272 = vmatprep.subr.bf16.mxu0 0
      %3273 = vmatpush1.bf16.msra.mxu0 0
      %3274 = vmatprep.subr.bf16.mxu0 0
      %3275 = vmatpush1.bf16.msra.mxu0 0
      %3276 = vmatprep.subr.bf16.mxu0 0
      %3277 = vmatpush1.bf16.msra.mxu0 0
      %3278 = vmatprep.subr.bf16.mxu0 0
      %3279 = vmatpush1.bf16.msra.mxu0 0
      %3280 = vmatprep.subr.bf16.mxu0 0
      %3281 = vmatpush1.bf16.msra.mxu0 0
      %3282 = vmatprep.subr.bf16.mxu0 0
      %3283 = vmatpush1.bf16.msra.mxu0 0
      %3284 = vmatprep.subr.bf16.mxu0 0
      %3285 = vmatpush1.bf16.msra.mxu0 0
      %3286 = vmatprep.subr.bf16.mxu0 0
      %3287 = vmatpush1.bf16.msra.mxu0 0
      %3288 = vmatprep.subr.bf16.mxu0 0
      %3289 = vmatpush1.bf16.msra.mxu0 0
      %3290 = vmatprep.mubr.bf16.mxu0 0
      %3291 = vmatmul.mubr.bf16.gmra.mrb[0].mxu0 %v3256
      %v3292 = vpop.f32.mrb[0].mxu0
      %v3293 = vadd.f32 0.0, %v3292
      %v3294 = vpop.f32.mrb[0].mxu0
      %v3295 = vpop.f32.mrb[0].mxu0
      %v3296 = vadd.f32 0.0, %v3295
      %v3297 = vpop.f32.mrb[0].mxu0
      %3298 = vdwg.mxu0
      %3299 = vrot.lane.b32.xlu0 %v627, 64
      %v3300 = vpop.permute.xlu0 %3299
      %v3303 = vsel %vm2327, %v3037, 0
      %3305 = vmatprep.subr.bf16.mxu0 0
      %3306 = vmatpush1.bf16.msra.mxu0 %v3300
      %3307 = vmatprep.subr.bf16.mxu0 0
      %3308 = vmatpush1.bf16.msra.mxu0 0
      %3309 = vmatprep.subr.bf16.mxu0 0
      %3310 = vmatpush1.bf16.msra.mxu0 0
      %3311 = vmatprep.subr.bf16.mxu0 0
      %3312 = vmatpush1.bf16.msra.mxu0 0
      %3313 = vmatprep.subr.bf16.mxu0 0
      %3314 = vmatpush1.bf16.msra.mxu0 0
      %3315 = vmatprep.subr.bf16.mxu0 0
      %3316 = vmatpush1.bf16.msra.mxu0 0
      %3317 = vmatprep.subr.bf16.mxu0 0
      %3318 = vmatpush1.bf16.msra.mxu0 0
      %3319 = vmatprep.subr.bf16.mxu0 0
      %3320 = vmatpush1.bf16.msra.mxu0 0
      %3321 = vmatprep.subr.bf16.mxu0 0
      %3322 = vmatpush1.bf16.msra.mxu0 0
      %3323 = vmatprep.subr.bf16.mxu0 0
      %3324 = vmatpush1.bf16.msra.mxu0 0
      %3325 = vmatprep.subr.bf16.mxu0 0
      %3326 = vmatpush1.bf16.msra.mxu0 0
      %3327 = vmatprep.subr.bf16.mxu0 0
      %3328 = vmatpush1.bf16.msra.mxu0 0
      %3329 = vmatprep.subr.bf16.mxu0 0
      %3330 = vmatpush1.bf16.msra.mxu0 0
      %3331 = vmatprep.subr.bf16.mxu0 0
      %3332 = vmatpush1.bf16.msra.mxu0 0
      %3333 = vmatprep.subr.bf16.mxu0 0
      %3334 = vmatpush1.bf16.msra.mxu0 0
      %3335 = vmatprep.subr.bf16.mxu0 0
      %3336 = vmatpush1.bf16.msra.mxu0 0
      %3337 = vmatprep.mubr.bf16.mxu0 0
      %3338 = vmatmul.mubr.bf16.gmra.mrb[0].mxu0 %v3303
      %v3339 = vpop.f32.mrb[0].mxu0
      %v3340 = vadd.f32 0.0, %v3339
      %v3341 = vpop.f32.mrb[0].mxu0
      %v3342 = vpop.f32.mrb[0].mxu0
      %v3343 = vadd.f32 0.0, %v3342
      %v3344 = vpop.f32.mrb[0].mxu0
      %3345 = vdwg.mxu0
      %3346 = vrot.lane.b32.xlu0 %v628, 64
      %v3347 = vpop.permute.xlu0 %3346
      %v3350 = vsel %vm2327, %v3038, 0
      %3352 = vmatprep.subr.bf16.mxu0 0
      %3353 = vmatpush1.bf16.msra.mxu0 %v3347
      %3354 = vmatprep.subr.bf16.mxu0 0
      %3355 = vmatpush1.bf16.msra.mxu0 0
      %3356 = vmatprep.subr.bf16.mxu0 0
      %3357 = vmatpush1.bf16.msra.mxu0 0
      %3358 = vmatprep.subr.bf16.mxu0 0
      %3359 = vmatpush1.bf16.msra.mxu0 0
      %3360 = vmatprep.subr.bf16.mxu0 0
      %3361 = vmatpush1.bf16.msra.mxu0 0
      %3362 = vmatprep.subr.bf16.mxu0 0
      %3363 = vmatpush1.bf16.msra.mxu0 0
      %3364 = vmatprep.subr.bf16.mxu0 0
      %3365 = vmatpush1.bf16.msra.mxu0 0
      %3366 = vmatprep.subr.bf16.mxu0 0
      %3367 = vmatpush1.bf16.msra.mxu0 0
      %3368 = vmatprep.subr.bf16.mxu0 0
      %3369 = vmatpush1.bf16.msra.mxu0 0
      %3370 = vmatprep.subr.bf16.mxu0 0
      %3371 = vmatpush1.bf16.msra.mxu0 0
      %3372 = vmatprep.subr.bf16.mxu0 0
      %3373 = vmatpush1.bf16.msra.mxu0 0
      %3374 = vmatprep.subr.bf16.mxu0 0
      %3375 = vmatpush1.bf16.msra.mxu0 0
      %3376 = vmatprep.subr.bf16.mxu0 0
      %3377 = vmatpush1.bf16.msra.mxu0 0
      %3378 = vmatprep.subr.bf16.mxu0 0
      %3379 = vmatpush1.bf16.msra.mxu0 0
      %3380 = vmatprep.subr.bf16.mxu0 0
      %3381 = vmatpush1.bf16.msra.mxu0 0
      %3382 = vmatprep.subr.bf16.mxu0 0
      %3383 = vmatpush1.bf16.msra.mxu0 0
      %3384 = vmatprep.mubr.bf16.mxu0 0
      %3385 = vmatmul.mubr.bf16.gmra.mrb[0].mxu0 %v3350
      %v3386 = vpop.f32.mrb[0].mxu0
      %v3387 = vadd.f32 0.0, %v3386
      %v3388 = vpop.f32.mrb[0].mxu0
      %v3389 = vpop.f32.mrb[0].mxu0
      %v3390 = vadd.f32 0.0, %v3389
      %v3391 = vpop.f32.mrb[0].mxu0
      %3392 = vdwg.mxu0
      %3393 = vrot.lane.b32.xlu0 %v629, 64
      %v3394 = vpop.permute.xlu0 %3393
      %v3397 = vsel %vm2327, %v3039, 0
      %3399 = vmatprep.subr.bf16.mxu0 0
      %3400 = vmatpush1.bf16.msra.mxu0 %v3394
      %3401 = vmatprep.subr.bf16.mxu0 0
      %3402 = vmatpush1.bf16.msra.mxu0 0
      %3403 = vmatprep.subr.bf16.mxu0 0
      %3404 = vmatpush1.bf16.msra.mxu0 0
      %3405 = vmatprep.subr.bf16.mxu0 0
      %3406 = vmatpush1.bf16.msra.mxu0 0
      %3407 = vmatprep.subr.bf16.mxu0 0
      %3408 = vmatpush1.bf16.msra.mxu0 0
      %3409 = vmatprep.subr.bf16.mxu0 0
      %3410 = vmatpush1.bf16.msra.mxu0 0
      %3411 = vmatprep.subr.bf16.mxu0 0
      %3412 = vmatpush1.bf16.msra.mxu0 0
      %3413 = vmatprep.subr.bf16.mxu0 0
      %3414 = vmatpush1.bf16.msra.mxu0 0
      %3415 = vmatprep.subr.bf16.mxu0 0
      %3416 = vmatpush1.bf16.msra.mxu0 0
      %3417 = vmatprep.subr.bf16.mxu0 0
      %3418 = vmatpush1.bf16.msra.mxu0 0
      %3419 = vmatprep.subr.bf16.mxu0 0
      %3420 = vmatpush1.bf16.msra.mxu0 0
      %3421 = vmatprep.subr.bf16.mxu0 0
      %3422 = vmatpush1.bf16.msra.mxu0 0
      %3423 = vmatprep.subr.bf16.mxu0 0
      %3424 = vmatpush1.bf16.msra.mxu0 0
      %3425 = vmatprep.subr.bf16.mxu0 0
      %3426 = vmatpush1.bf16.msra.mxu0 0
      %3427 = vmatprep.subr.bf16.mxu0 0
      %3428 = vmatpush1.bf16.msra.mxu0 0
      %3429 = vmatprep.subr.bf16.mxu0 0
      %3430 = vmatpush1.bf16.msra.mxu0 0
      %3431 = vmatprep.mubr.bf16.mxu0 0
      %3432 = vmatmul.mubr.bf16.gmra.mrb[0].mxu0 %v3397
      %v3433 = vpop.f32.mrb[0].mxu0
      %v3434 = vadd.f32 0.0, %v3433
      %v3435 = vpop.f32.mrb[0].mxu0
      %v3436 = vpop.f32.mrb[0].mxu0
      %v3437 = vadd.f32 0.0, %v3436
      %v3438 = vpop.f32.mrb[0].mxu0
      %3439 = vdwg.mxu0
      %3440 = vrot.lane.b32.xlu0 %v630, 64
      %v3441 = vpop.permute.xlu0 %3440
      %v3444 = vsel %vm2327, %v3040, 0
      %3446 = vmatprep.subr.bf16.mxu0 0
      %3447 = vmatpush1.bf16.msra.mxu0 %v3441
      %3448 = vmatprep.subr.bf16.mxu0 0
      %3449 = vmatpush1.bf16.msra.mxu0 0
      %3450 = vmatprep.subr.bf16.mxu0 0
      %3451 = vmatpush1.bf16.msra.mxu0 0
      %3452 = vmatprep.subr.bf16.mxu0 0
      %3453 = vmatpush1.bf16.msra.mxu0 0
      %3454 = vmatprep.subr.bf16.mxu0 0
      %3455 = vmatpush1.bf16.msra.mxu0 0
      %3456 = vmatprep.subr.bf16.mxu0 0
      %3457 = vmatpush1.bf16.msra.mxu0 0
      %3458 = vmatprep.subr.bf16.mxu0 0
      %3459 = vmatpush1.bf16.msra.mxu0 0
      %3460 = vmatprep.subr.bf16.mxu0 0
      %3461 = vmatpush1.bf16.msra.mxu0 0
      %3462 = vmatprep.subr.bf16.mxu0 0
      %3463 = vmatpush1.bf16.msra.mxu0 0
      %3464 = vmatprep.subr.bf16.mxu0 0
      %3465 = vmatpush1.bf16.msra.mxu0 0
      %3466 = vmatprep.subr.bf16.mxu0 0
      %3467 = vmatpush1.bf16.msra.mxu0 0
      %3468 = vmatprep.subr.bf16.mxu0 0
      %3469 = vmatpush1.bf16.msra.mxu0 0
      %3470 = vmatprep.subr.bf16.mxu0 0
      %3471 = vmatpush1.bf16.msra.mxu0 0
      %3472 = vmatprep.subr.bf16.mxu0 0
      %3473 = vmatpush1.bf16.msra.mxu0 0
      %3474 = vmatprep.subr.bf16.mxu0 0
      %3475 = vmatpush1.bf16.msra.mxu0 0
      %3476 = vmatprep.subr.bf16.mxu0 0
      %3477 = vmatpush1.bf16.msra.mxu0 0
      %3478 = vmatprep.mubr.bf16.mxu0 0
      %3479 = vmatmul.mubr.bf16.gmra.mrb[0].mxu0 %v3444
      %v3480 = vpop.f32.mrb[0].mxu0
      %v3481 = vadd.f32 0.0, %v3480
      %v3482 = vpop.f32.mrb[0].mxu0
      %v3483 = vpop.f32.mrb[0].mxu0
      %v3484 = vadd.f32 0.0, %v3483
      %v3485 = vpop.f32.mrb[0].mxu0
      %3486 = vdwg.mxu0
      %3487 = vrot.lane.b32.xlu0 %v631, 64
      %v3488 = vpop.permute.xlu0 %3487
      %v3491 = vsel %vm2327, %v3041, 0
      %3493 = vmatprep.subr.bf16.mxu0 0
      %3494 = vmatpush1.bf16.msra.mxu0 %v3488
      %3495 = vmatprep.subr.bf16.mxu0 0
      %3496 = vmatpush1.bf16.msra.mxu0 0
      %3497 = vmatprep.subr.bf16.mxu0 0
      %3498 = vmatpush1.bf16.msra.mxu0 0
      %3499 = vmatprep.subr.bf16.mxu0 0
      %3500 = vmatpush1.bf16.msra.mxu0 0
      %3501 = vmatprep.subr.bf16.mxu0 0
      %3502 = vmatpush1.bf16.msra.mxu0 0
      %3503 = vmatprep.subr.bf16.mxu0 0
      %3504 = vmatpush1.bf16.msra.mxu0 0
      %3505 = vmatprep.subr.bf16.mxu0 0
      %3506 = vmatpush1.bf16.msra.mxu0 0
      %3507 = vmatprep.subr.bf16.mxu0 0
      %3508 = vmatpush1.bf16.msra.mxu0 0
      %3509 = vmatprep.subr.bf16.mxu0 0
      %3510 = vmatpush1.bf16.msra.mxu0 0
      %3511 = vmatprep.subr.bf16.mxu0 0
      %3512 = vmatpush1.bf16.msra.mxu0 0
      %3513 = vmatprep.subr.bf16.mxu0 0
      %3514 = vmatpush1.bf16.msra.mxu0 0
      %3515 = vmatprep.subr.bf16.mxu0 0
      %3516 = vmatpush1.bf16.msra.mxu0 0
      %3517 = vmatprep.subr.bf16.mxu0 0
      %3518 = vmatpush1.bf16.msra.mxu0 0
      %3519 = vmatprep.subr.bf16.mxu0 0
      %3520 = vmatpush1.bf16.msra.mxu0 0
      %3521 = vmatprep.subr.bf16.mxu0 0
      %3522 = vmatpush1.bf16.msra.mxu0 0
      %3523 = vmatprep.subr.bf16.mxu0 0
      %3524 = vmatpush1.bf16.msra.mxu0 0
      %3525 = vmatprep.mubr.bf16.mxu0 0
      %3526 = vmatmul.mubr.bf16.gmra.mrb[0].mxu0 %v3491
      %v3527 = vpop.f32.mrb[0].mxu0
      %v3528 = vadd.f32 0.0, %v3527
      %v3529 = vpop.f32.mrb[0].mxu0
      %v3530 = vpop.f32.mrb[0].mxu0
      %v3531 = vadd.f32 0.0, %v3530
      %v3532 = vpop.f32.mrb[0].mxu0
      %3533 = vdwg.mxu0
      %3534 = vrot.lane.b32.xlu0 %v632, 64
      %v3535 = vpop.permute.xlu0 %3534
      %v3538 = vsel %vm2327, %v3042, 0
      %3540 = vmatprep.subr.bf16.mxu0 0
      %3541 = vmatpush1.bf16.msra.mxu0 %v3535
      %3542 = vmatprep.subr.bf16.mxu0 0
      %3543 = vmatpush1.bf16.msra.mxu0 0
      %3544 = vmatprep.subr.bf16.mxu0 0
      %3545 = vmatpush1.bf16.msra.mxu0 0
      %3546 = vmatprep.subr.bf16.mxu0 0
      %3547 = vmatpush1.bf16.msra.mxu0 0
      %3548 = vmatprep.subr.bf16.mxu0 0
      %3549 = vmatpush1.bf16.msra.mxu0 0
      %3550 = vmatprep.subr.bf16.mxu0 0
      %3551 = vmatpush1.bf16.msra.mxu0 0
      %3552 = vmatprep.subr.bf16.mxu0 0
      %3553 = vmatpush1.bf16.msra.mxu0 0
      %3554 = vmatprep.subr.bf16.mxu0 0
      %3555 = vmatpush1.bf16.msra.mxu0 0
      %3556 = vmatprep.subr.bf16.mxu0 0
      %3557 = vmatpush1.bf16.msra.mxu0 0
      %3558 = vmatprep.subr.bf16.mxu0 0
      %3559 = vmatpush1.bf16.msra.mxu0 0
      %3560 = vmatprep.subr.bf16.mxu0 0
      %3561 = vmatpush1.bf16.msra.mxu0 0
      %3562 = vmatprep.subr.bf16.mxu0 0
      %3563 = vmatpush1.bf16.msra.mxu0 0
      %3564 = vmatprep.subr.bf16.mxu0 0
      %3565 = vmatpush1.bf16.msra.mxu0 0
      %3566 = vmatprep.subr.bf16.mxu0 0
      %3567 = vmatpush1.bf16.msra.mxu0 0
      %3568 = vmatprep.subr.bf16.mxu0 0
      %3569 = vmatpush1.bf16.msra.mxu0 0
      %3570 = vmatprep.subr.bf16.mxu0 0
      %3571 = vmatpush1.bf16.msra.mxu0 0
      %3572 = vmatprep.mubr.bf16.mxu0 0
      %3573 = vmatmul.mubr.bf16.gmra.mrb[0].mxu0 %v3538
      %v3574 = vpop.f32.mrb[0].mxu0
      %v3575 = vadd.f32 0.0, %v3574
      %v3576 = vpop.f32.mrb[0].mxu0
      %v3577 = vpop.f32.mrb[0].mxu0
      %v3578 = vadd.f32 0.0, %v3577
      %v3579 = vpop.f32.mrb[0].mxu0
      %3580 = vdwg.mxu0
      %3581 = vrot.lane.b32.xlu0 %v633, 64
      %v3582 = vpop.permute.xlu0 %3581
      %v3585 = vsel %vm2327, %v3043, 0
      %3587 = vmatprep.subr.bf16.mxu0 0
      %3588 = vmatpush1.bf16.msra.mxu0 %v3582
      %3589 = vmatprep.subr.bf16.mxu0 0
      %3590 = vmatpush1.bf16.msra.mxu0 0
      %3591 = vmatprep.subr.bf16.mxu0 0
      %3592 = vmatpush1.bf16.msra.mxu0 0
      %3593 = vmatprep.subr.bf16.mxu0 0
      %3594 = vmatpush1.bf16.msra.mxu0 0
      %3595 = vmatprep.subr.bf16.mxu0 0
      %3596 = vmatpush1.bf16.msra.mxu0 0
      %3597 = vmatprep.subr.bf16.mxu0 0
      %3598 = vmatpush1.bf16.msra.mxu0 0
      %3599 = vmatprep.subr.bf16.mxu0 0
      %3600 = vmatpush1.bf16.msra.mxu0 0
      %3601 = vmatprep.subr.bf16.mxu0 0
      %3602 = vmatpush1.bf16.msra.mxu0 0
      %3603 = vmatprep.subr.bf16.mxu0 0
      %3604 = vmatpush1.bf16.msra.mxu0 0
      %3605 = vmatprep.subr.bf16.mxu0 0
      %3606 = vmatpush1.bf16.msra.mxu0 0
      %3607 = vmatprep.subr.bf16.mxu0 0
      %3608 = vmatpush1.bf16.msra.mxu0 0
      %3609 = vmatprep.subr.bf16.mxu0 0
      %3610 = vmatpush1.bf16.msra.mxu0 0
      %3611 = vmatprep.subr.bf16.mxu0 0
      %3612 = vmatpush1.bf16.msra.mxu0 0
      %3613 = vmatprep.subr.bf16.mxu0 0
      %3614 = vmatpush1.bf16.msra.mxu0 0
      %3615 = vmatprep.subr.bf16.mxu0 0
      %3616 = vmatpush1.bf16.msra.mxu0 0
      %3617 = vmatprep.subr.bf16.mxu0 0
      %3618 = vmatpush1.bf16.msra.mxu0 0
      %3619 = vmatprep.mubr.bf16.mxu0 0
      %3620 = vmatmul.mubr.bf16.gmra.mrb[0].mxu0 %v3585
      %v3621 = vpop.f32.mrb[0].mxu0
      %v3622 = vadd.f32 0.0, %v3621
      %v3623 = vpop.f32.mrb[0].mxu0
      %v3624 = vpop.f32.mrb[0].mxu0
      %v3625 = vadd.f32 0.0, %v3624
      %v3626 = vpop.f32.mrb[0].mxu0
      %3627 = vdwg.mxu0
      %3628 = vrot.lane.b32.xlu0 %v634, 64
      %v3629 = vpop.permute.xlu0 %3628
      %v3632 = vsel %vm2327, %v3044, 0
      %3634 = vmatprep.subr.bf16.mxu0 0
      %3635 = vmatpush1.bf16.msra.mxu0 %v3629
      %3636 = vmatprep.subr.bf16.mxu0 0
      %3637 = vmatpush1.bf16.msra.mxu0 0
      %3638 = vmatprep.subr.bf16.mxu0 0
      %3639 = vmatpush1.bf16.msra.mxu0 0
      %3640 = vmatprep.subr.bf16.mxu0 0
      %3641 = vmatpush1.bf16.msra.mxu0 0
      %3642 = vmatprep.subr.bf16.mxu0 0
      %3643 = vmatpush1.bf16.msra.mxu0 0
      %3644 = vmatprep.subr.bf16.mxu0 0
      %3645 = vmatpush1.bf16.msra.mxu0 0
      %3646 = vmatprep.subr.bf16.mxu0 0
      %3647 = vmatpush1.bf16.msra.mxu0 0
      %3648 = vmatprep.subr.bf16.mxu0 0
      %3649 = vmatpush1.bf16.msra.mxu0 0
      %3650 = vmatprep.subr.bf16.mxu0 0
      %3651 = vmatpush1.bf16.msra.mxu0 0
      %3652 = vmatprep.subr.bf16.mxu0 0
      %3653 = vmatpush1.bf16.msra.mxu0 0
      %3654 = vmatprep.subr.bf16.mxu0 0
      %3655 = vmatpush1.bf16.msra.mxu0 0
      %3656 = vmatprep.subr.bf16.mxu0 0
      %3657 = vmatpush1.bf16.msra.mxu0 0
      %3658 = vmatprep.subr.bf16.mxu0 0
      %3659 = vmatpush1.bf16.msra.mxu0 0
      %3660 = vmatprep.subr.bf16.mxu0 0
      %3661 = vmatpush1.bf16.msra.mxu0 0
      %3662 = vmatprep.subr.bf16.mxu0 0
      %3663 = vmatpush1.bf16.msra.mxu0 0
      %3664 = vmatprep.subr.bf16.mxu0 0
      %3665 = vmatpush1.bf16.msra.mxu0 0
      %3666 = vmatprep.mubr.bf16.mxu0 0
      %3667 = vmatmul.mubr.bf16.gmra.mrb[0].mxu0 %v3632
      %v3668 = vpop.f32.mrb[0].mxu0
      %v3669 = vadd.f32 0.0, %v3668
      %v3670 = vpop.f32.mrb[0].mxu0
      %v3671 = vpop.f32.mrb[0].mxu0
      %v3672 = vadd.f32 0.0, %v3671
      %v3673 = vpop.f32.mrb[0].mxu0
      %3674 = vdwg.mxu0
      %3675 = vrot.lane.b32.xlu0 %v635, 64
      %v3676 = vpop.permute.xlu0 %3675
      %v3679 = vsel %vm2327, %v3045, 0
      %3681 = vmatprep.subr.bf16.mxu0 0
      %3682 = vmatpush1.bf16.msra.mxu0 %v3676
      %3683 = vmatprep.subr.bf16.mxu0 0
      %3684 = vmatpush1.bf16.msra.mxu0 0
      %3685 = vmatprep.subr.bf16.mxu0 0
      %3686 = vmatpush1.bf16.msra.mxu0 0
      %3687 = vmatprep.subr.bf16.mxu0 0
      %3688 = vmatpush1.bf16.msra.mxu0 0
      %3689 = vmatprep.subr.bf16.mxu0 0
      %3690 = vmatpush1.bf16.msra.mxu0 0
      %3691 = vmatprep.subr.bf16.mxu0 0
      %3692 = vmatpush1.bf16.msra.mxu0 0
      %3693 = vmatprep.subr.bf16.mxu0 0
      %3694 = vmatpush1.bf16.msra.mxu0 0
      %3695 = vmatprep.subr.bf16.mxu0 0
      %3696 = vmatpush1.bf16.msra.mxu0 0
      %3697 = vmatprep.subr.bf16.mxu0 0
      %3698 = vmatpush1.bf16.msra.mxu0 0
      %3699 = vmatprep.subr.bf16.mxu0 0
      %3700 = vmatpush1.bf16.msra.mxu0 0
      %3701 = vmatprep.subr.bf16.mxu0 0
      %3702 = vmatpush1.bf16.msra.mxu0 0
      %3703 = vmatprep.subr.bf16.mxu0 0
      %3704 = vmatpush1.bf16.msra.mxu0 0
      %3705 = vmatprep.subr.bf16.mxu0 0
      %3706 = vmatpush1.bf16.msra.mxu0 0
      %3707 = vmatprep.subr.bf16.mxu0 0
      %3708 = vmatpush1.bf16.msra.mxu0 0
      %3709 = vmatprep.subr.bf16.mxu0 0
      %3710 = vmatpush1.bf16.msra.mxu0 0
      %3711 = vmatprep.subr.bf16.mxu0 0
      %3712 = vmatpush1.bf16.msra.mxu0 0
      %3713 = vmatprep.mubr.bf16.mxu0 0
      %3714 = vmatmul.mubr.bf16.gmra.mrb[0].mxu0 %v3679
      %v3715 = vpop.f32.mrb[0].mxu0
      %v3716 = vadd.f32 0.0, %v3715
      %v3717 = vpop.f32.mrb[0].mxu0
      %v3718 = vpop.f32.mrb[0].mxu0
      %v3719 = vadd.f32 0.0, %v3718
      %v3720 = vpop.f32.mrb[0].mxu0
      %3721 = vdwg.mxu0
      %3722 = vrot.lane.b32.xlu0 %v636, 64
      %v3723 = vpop.permute.xlu0 %3722
      %v3726 = vsel %vm2327, %v3046, 0
      %3728 = vmatprep.subr.bf16.mxu0 0
      %3729 = vmatpush1.bf16.msra.mxu0 %v3723
      %3730 = vmatprep.subr.bf16.mxu0 0
      %3731 = vmatpush1.bf16.msra.mxu0 0
      %3732 = vmatprep.subr.bf16.mxu0 0
      %3733 = vmatpush1.bf16.msra.mxu0 0
      %3734 = vmatprep.subr.bf16.mxu0 0
      %3735 = vmatpush1.bf16.msra.mxu0 0
      %3736 = vmatprep.subr.bf16.mxu0 0
      %3737 = vmatpush1.bf16.msra.mxu0 0
      %3738 = vmatprep.subr.bf16.mxu0 0
      %3739 = vmatpush1.bf16.msra.mxu0 0
      %3740 = vmatprep.subr.bf16.mxu0 0
      %3741 = vmatpush1.bf16.msra.mxu0 0
      %3742 = vmatprep.subr.bf16.mxu0 0
      %3743 = vmatpush1.bf16.msra.mxu0 0
      %3744 = vmatprep.subr.bf16.mxu0 0
      %3745 = vmatpush1.bf16.msra.mxu0 0
      %3746 = vmatprep.subr.bf16.mxu0 0
      %3747 = vmatpush1.bf16.msra.mxu0 0
      %3748 = vmatprep.subr.bf16.mxu0 0
      %3749 = vmatpush1.bf16.msra.mxu0 0
      %3750 = vmatprep.subr.bf16.mxu0 0
      %3751 = vmatpush1.bf16.msra.mxu0 0
      %3752 = vmatprep.subr.bf16.mxu0 0
      %3753 = vmatpush1.bf16.msra.mxu0 0
      %3754 = vmatprep.subr.bf16.mxu0 0
      %3755 = vmatpush1.bf16.msra.mxu0 0
      %3756 = vmatprep.subr.bf16.mxu0 0
      %3757 = vmatpush1.bf16.msra.mxu0 0
      %3758 = vmatprep.subr.bf16.mxu0 0
      %3759 = vmatpush1.bf16.msra.mxu0 0
      %3760 = vmatprep.mubr.bf16.mxu0 0
      %3761 = vmatmul.mubr.bf16.gmra.mrb[0].mxu0 %v3726
      %v3762 = vpop.f32.mrb[0].mxu0
      %v3763 = vadd.f32 0.0, %v3762
      %v3764 = vpop.f32.mrb[0].mxu0
      %v3765 = vpop.f32.mrb[0].mxu0
      %v3766 = vadd.f32 0.0, %v3765
      %v3767 = vpop.f32.mrb[0].mxu0
      %3768 = vdwg.mxu0
      %3769 = vrot.lane.b32.xlu0 %v637, 64
      %v3770 = vpop.permute.xlu0 %3769
      %v3773 = vsel %vm2327, %v3047, 0
      %3775 = vmatprep.subr.bf16.mxu0 0
      %3776 = vmatpush1.bf16.msra.mxu0 %v3770
      %3777 = vmatprep.subr.bf16.mxu0 0
      %3778 = vmatpush1.bf16.msra.mxu0 0
      %3779 = vmatprep.subr.bf16.mxu0 0
      %3780 = vmatpush1.bf16.msra.mxu0 0
      %3781 = vmatprep.subr.bf16.mxu0 0
      %3782 = vmatpush1.bf16.msra.mxu0 0
      %3783 = vmatprep.subr.bf16.mxu0 0
      %3784 = vmatpush1.bf16.msra.mxu0 0
      %3785 = vmatprep.subr.bf16.mxu0 0
      %3786 = vmatpush1.bf16.msra.mxu0 0
      %3787 = vmatprep.subr.bf16.mxu0 0
      %3788 = vmatpush1.bf16.msra.mxu0 0
      %3789 = vmatprep.subr.bf16.mxu0 0
      %3790 = vmatpush1.bf16.msra.mxu0 0
      %3791 = vmatprep.subr.bf16.mxu0 0
      %3792 = vmatpush1.bf16.msra.mxu0 0
      %3793 = vmatprep.subr.bf16.mxu0 0
      %3794 = vmatpush1.bf16.msra.mxu0 0
      %3795 = vmatprep.subr.bf16.mxu0 0
      %3796 = vmatpush1.bf16.msra.mxu0 0
      %3797 = vmatprep.subr.bf16.mxu0 0
      %3798 = vmatpush1.bf16.msra.mxu0 0
      %3799 = vmatprep.subr.bf16.mxu0 0
      %3800 = vmatpush1.bf16.msra.mxu0 0
      %3801 = vmatprep.subr.bf16.mxu0 0
      %3802 = vmatpush1.bf16.msra.mxu0 0
      %3803 = vmatprep.subr.bf16.mxu0 0
      %3804 = vmatpush1.bf16.msra.mxu0 0
      %3805 = vmatprep.subr.bf16.mxu0 0
      %3806 = vmatpush1.bf16.msra.mxu0 0
      %3807 = vmatprep.mubr.bf16.mxu0 0
      %3808 = vmatmul.mubr.bf16.gmra.mrb[0].mxu0 %v3773
      %v3809 = vpop.f32.mrb[0].mxu0
      %v3810 = vadd.f32 0.0, %v3809
      %v3811 = vpop.f32.mrb[0].mxu0
      %v3812 = vpop.f32.mrb[0].mxu0
      %v3813 = vadd.f32 0.0, %v3812
      %v3814 = vpop.f32.mrb[0].mxu0
      %3815 = vdwg.mxu0
      %3816 = vrot.lane.b32.xlu0 %v638, 64
      %v3817 = vpop.permute.xlu0 %3816
      %v3820 = vsel %vm2327, %v3048, 0
      %3822 = vmatprep.subr.bf16.mxu0 0
      %3823 = vmatpush1.bf16.msra.mxu0 %v3817
      %3824 = vmatprep.subr.bf16.mxu0 0
      %3825 = vmatpush1.bf16.msra.mxu0 0
      %3826 = vmatprep.subr.bf16.mxu0 0
      %3827 = vmatpush1.bf16.msra.mxu0 0
      %3828 = vmatprep.subr.bf16.mxu0 0
      %3829 = vmatpush1.bf16.msra.mxu0 0
      %3830 = vmatprep.subr.bf16.mxu0 0
      %3831 = vmatpush1.bf16.msra.mxu0 0
      %3832 = vmatprep.subr.bf16.mxu0 0
      %3833 = vmatpush1.bf16.msra.mxu0 0
      %3834 = vmatprep.subr.bf16.mxu0 0
      %3835 = vmatpush1.bf16.msra.mxu0 0
      %3836 = vmatprep.subr.bf16.mxu0 0
      %3837 = vmatpush1.bf16.msra.mxu0 0
      %3838 = vmatprep.subr.bf16.mxu0 0
      %3839 = vmatpush1.bf16.msra.mxu0 0
      %3840 = vmatprep.subr.bf16.mxu0 0
      %3841 = vmatpush1.bf16.msra.mxu0 0
      %3842 = vmatprep.subr.bf16.mxu0 0
      %3843 = vmatpush1.bf16.msra.mxu0 0
      %3844 = vmatprep.subr.bf16.mxu0 0
      %3845 = vmatpush1.bf16.msra.mxu0 0
      %3846 = vmatprep.subr.bf16.mxu0 0
      %3847 = vmatpush1.bf16.msra.mxu0 0
      %3848 = vmatprep.subr.bf16.mxu0 0
      %3849 = vmatpush1.bf16.msra.mxu0 0
      %3850 = vmatprep.subr.bf16.mxu0 0
      %3851 = vmatpush1.bf16.msra.mxu0 0
      %3852 = vmatprep.subr.bf16.mxu0 0
      %3853 = vmatpush1.bf16.msra.mxu0 0
      %3854 = vmatprep.mubr.bf16.mxu0 0
      %3855 = vmatmul.mubr.bf16.gmra.mrb[0].mxu0 %v3820
      %v3856 = vpop.f32.mrb[0].mxu0
      %v3857 = vadd.f32 0.0, %v3856
      %v3858 = vpop.f32.mrb[0].mxu0
      %v3859 = vpop.f32.mrb[0].mxu0
      %v3860 = vadd.f32 0.0, %v3859
      %v3861 = vpop.f32.mrb[0].mxu0
      %3862 = vdwg.mxu0
      %3863 = vrot.lane.b32.xlu0 %v639, 64
      %v3864 = vpop.permute.xlu0 %3863
      %v3867 = vsel %vm2327, %v3049, 0
      %3869 = vmatprep.subr.bf16.mxu0 0
      %3870 = vmatpush1.bf16.msra.mxu0 %v3864
      %3871 = vmatprep.subr.bf16.mxu0 0
      %3872 = vmatpush1.bf16.msra.mxu0 0
      %3873 = vmatprep.subr.bf16.mxu0 0
      %3874 = vmatpush1.bf16.msra.mxu0 0
      %3875 = vmatprep.subr.bf16.mxu0 0
      %3876 = vmatpush1.bf16.msra.mxu0 0
      %3877 = vmatprep.subr.bf16.mxu0 0
      %3878 = vmatpush1.bf16.msra.mxu0 0
      %3879 = vmatprep.subr.bf16.mxu0 0
      %3880 = vmatpush1.bf16.msra.mxu0 0
      %3881 = vmatprep.subr.bf16.mxu0 0
      %3882 = vmatpush1.bf16.msra.mxu0 0
      %3883 = vmatprep.subr.bf16.mxu0 0
      %3884 = vmatpush1.bf16.msra.mxu0 0
      %3885 = vmatprep.subr.bf16.mxu0 0
      %3886 = vmatpush1.bf16.msra.mxu0 0
      %3887 = vmatprep.subr.bf16.mxu0 0
      %3888 = vmatpush1.bf16.msra.mxu0 0
      %3889 = vmatprep.subr.bf16.mxu0 0
      %3890 = vmatpush1.bf16.msra.mxu0 0
      %3891 = vmatprep.subr.bf16.mxu0 0
      %3892 = vmatpush1.bf16.msra.mxu0 0
      %3893 = vmatprep.subr.bf16.mxu0 0
      %3894 = vmatpush1.bf16.msra.mxu0 0
      %3895 = vmatprep.subr.bf16.mxu0 0
      %3896 = vmatpush1.bf16.msra.mxu0 0
      %3897 = vmatprep.subr.bf16.mxu0 0
      %3898 = vmatpush1.bf16.msra.mxu0 0
      %3899 = vmatprep.subr.bf16.mxu0 0
      %3900 = vmatpush1.bf16.msra.mxu0 0
      %3901 = vmatprep.mubr.bf16.mxu0 0
      %3902 = vmatmul.mubr.bf16.gmra.mrb[0].mxu0 %v3867
      %v3903 = vpop.f32.mrb[0].mxu0
      %v3904 = vadd.f32 0.0, %v3903
      %v3905 = vpop.f32.mrb[0].mxu0
      %v3906 = vpop.f32.mrb[0].mxu0
      %v3907 = vadd.f32 0.0, %v3906
      %v3908 = vpop.f32.mrb[0].mxu0
      %3909 = vdwg.mxu0
      %3910 = vrot.lane.b32.xlu0 %v640, 64
      %v3911 = vpop.permute.xlu0 %3910
      %v3914 = vsel %vm2327, %v3050, 0
      %3916 = vmatprep.subr.bf16.mxu0 0
      %3917 = vmatpush1.bf16.msra.mxu0 %v3911
      %3918 = vmatprep.subr.bf16.mxu0 0
      %3919 = vmatpush1.bf16.msra.mxu0 0
      %3920 = vmatprep.subr.bf16.mxu0 0
      %3921 = vmatpush1.bf16.msra.mxu0 0
      %3922 = vmatprep.subr.bf16.mxu0 0
      %3923 = vmatpush1.bf16.msra.mxu0 0
      %3924 = vmatprep.subr.bf16.mxu0 0
      %3925 = vmatpush1.bf16.msra.mxu0 0
      %3926 = vmatprep.subr.bf16.mxu0 0
      %3927 = vmatpush1.bf16.msra.mxu0 0
      %3928 = vmatprep.subr.bf16.mxu0 0
      %3929 = vmatpush1.bf16.msra.mxu0 0
      %3930 = vmatprep.subr.bf16.mxu0 0
      %3931 = vmatpush1.bf16.msra.mxu0 0
      %3932 = vmatprep.subr.bf16.mxu0 0
      %3933 = vmatpush1.bf16.msra.mxu0 0
      %3934 = vmatprep.subr.bf16.mxu0 0
      %3935 = vmatpush1.bf16.msra.mxu0 0
      %3936 = vmatprep.subr.bf16.mxu0 0
      %3937 = vmatpush1.bf16.msra.mxu0 0
      %3938 = vmatprep.subr.bf16.mxu0 0
      %3939 = vmatpush1.bf16.msra.mxu0 0
      %3940 = vmatprep.subr.bf16.mxu0 0
      %3941 = vmatpush1.bf16.msra.mxu0 0
      %3942 = vmatprep.subr.bf16.mxu0 0
      %3943 = vmatpush1.bf16.msra.mxu0 0
      %3944 = vmatprep.subr.bf16.mxu0 0
      %3945 = vmatpush1.bf16.msra.mxu0 0
      %3946 = vmatprep.subr.bf16.mxu0 0
      %3947 = vmatpush1.bf16.msra.mxu0 0
      %3948 = vmatprep.mubr.bf16.mxu0 0
      %3949 = vmatmul.mubr.bf16.gmra.mrb[0].mxu0 %v3914
      %v3950 = vpop.f32.mrb[0].mxu0
      %v3951 = vadd.f32 0.0, %v3950
      %v3952 = vpop.f32.mrb[0].mxu0
      %v3953 = vpop.f32.mrb[0].mxu0
      %v3954 = vadd.f32 0.0, %v3953
      %v3955 = vpop.f32.mrb[0].mxu0
      %3956 = vdwg.mxu0
      %3957 = vrot.lane.b32.xlu0 %v641, 64
      %v3958 = vpop.permute.xlu0 %3957
      %v3961 = vsel %vm2327, %v3051, 0
      %3963 = vmatprep.subr.bf16.mxu0 0
      %3964 = vmatpush1.bf16.msra.mxu0 %v3958
      %3965 = vmatprep.subr.bf16.mxu0 0
      %3966 = vmatpush1.bf16.msra.mxu0 0
      %3967 = vmatprep.subr.bf16.mxu0 0
      %3968 = vmatpush1.bf16.msra.mxu0 0
      %3969 = vmatprep.subr.bf16.mxu0 0
      %3970 = vmatpush1.bf16.msra.mxu0 0
      %3971 = vmatprep.subr.bf16.mxu0 0
      %3972 = vmatpush1.bf16.msra.mxu0 0
      %3973 = vmatprep.subr.bf16.mxu0 0
      %3974 = vmatpush1.bf16.msra.mxu0 0
      %3975 = vmatprep.subr.bf16.mxu0 0
      %3976 = vmatpush1.bf16.msra.mxu0 0
      %3977 = vmatprep.subr.bf16.mxu0 0
      %3978 = vmatpush1.bf16.msra.mxu0 0
      %3979 = vmatprep.subr.bf16.mxu0 0
      %3980 = vmatpush1.bf16.msra.mxu0 0
      %3981 = vmatprep.subr.bf16.mxu0 0
      %3982 = vmatpush1.bf16.msra.mxu0 0
      %3983 = vmatprep.subr.bf16.mxu0 0
      %3984 = vmatpush1.bf16.msra.mxu0 0
      %3985 = vmatprep.subr.bf16.mxu0 0
      %3986 = vmatpush1.bf16.msra.mxu0 0
      %3987 = vmatprep.subr.bf16.mxu0 0
      %3988 = vmatpush1.bf16.msra.mxu0 0
      %3989 = vmatprep.subr.bf16.mxu0 0
      %3990 = vmatpush1.bf16.msra.mxu0 0
      %3991 = vmatprep.subr.bf16.mxu0 0
      %3992 = vmatpush1.bf16.msra.mxu0 0
      %3993 = vmatprep.subr.bf16.mxu0 0
      %3994 = vmatpush1.bf16.msra.mxu0 0
      %3995 = vmatprep.mubr.bf16.mxu0 0
      %3996 = vmatmul.mubr.bf16.gmra.mrb[0].mxu0 %v3961
      %v3997 = vpop.f32.mrb[0].mxu0
      %v3998 = vadd.f32 0.0, %v3997
      %v3999 = vpop.f32.mrb[0].mxu0
      %v4000 = vpop.f32.mrb[0].mxu0
      %v4001 = vadd.f32 0.0, %v4000
      %v4002 = vpop.f32.mrb[0].mxu0
      %4003 = vdwg.mxu0
      %4004 = vrot.lane.b32.xlu0 %v642, 64
      %v4005 = vpop.permute.xlu0 %4004
      %v4008 = vsel %vm2327, %v3052, 0
      %4010 = vmatprep.subr.bf16.mxu0 0
      %4011 = vmatpush1.bf16.msra.mxu0 %v4005
      %4012 = vmatprep.subr.bf16.mxu0 0
      %4013 = vmatpush1.bf16.msra.mxu0 0
      %4014 = vmatprep.subr.bf16.mxu0 0
      %4015 = vmatpush1.bf16.msra.mxu0 0
      %4016 = vmatprep.subr.bf16.mxu0 0
      %4017 = vmatpush1.bf16.msra.mxu0 0
      %4018 = vmatprep.subr.bf16.mxu0 0
      %4019 = vmatpush1.bf16.msra.mxu0 0
      %4020 = vmatprep.subr.bf16.mxu0 0
      %4021 = vmatpush1.bf16.msra.mxu0 0
      %4022 = vmatprep.subr.bf16.mxu0 0
      %4023 = vmatpush1.bf16.msra.mxu0 0
      %4024 = vmatprep.subr.bf16.mxu0 0
      %4025 = vmatpush1.bf16.msra.mxu0 0
      %4026 = vmatprep.subr.bf16.mxu0 0
      %4027 = vmatpush1.bf16.msra.mxu0 0
      %4028 = vmatprep.subr.bf16.mxu0 0
      %4029 = vmatpush1.bf16.msra.mxu0 0
      %4030 = vmatprep.subr.bf16.mxu0 0
      %4031 = vmatpush1.bf16.msra.mxu0 0
      %4032 = vmatprep.subr.bf16.mxu0 0
      %4033 = vmatpush1.bf16.msra.mxu0 0
      %4034 = vmatprep.subr.bf16.mxu0 0
      %4035 = vmatpush1.bf16.msra.mxu0 0
      %4036 = vmatprep.subr.bf16.mxu0 0
      %4037 = vmatpush1.bf16.msra.mxu0 0
      %4038 = vmatprep.subr.bf16.mxu0 0
      %4039 = vmatpush1.bf16.msra.mxu0 0
      %4040 = vmatprep.subr.bf16.mxu0 0
      %4041 = vmatpush1.bf16.msra.mxu0 0
      %4042 = vmatprep.mubr.bf16.mxu0 0
      %4043 = vmatmul.mubr.bf16.gmra.mrb[0].mxu0 %v4008
      %v4044 = vpop.f32.mrb[0].mxu0
      %v4045 = vadd.f32 0.0, %v4044
      %v4046 = vpop.f32.mrb[0].mxu0
      %v4047 = vpop.f32.mrb[0].mxu0
      %v4048 = vadd.f32 0.0, %v4047
      %v4049 = vpop.f32.mrb[0].mxu0
      %4050 = vdwg.mxu0
      %4051 = vrot.lane.b32.xlu0 %v643, 64
      %v4052 = vpop.permute.xlu0 %4051
      %v4055 = vsel %vm2327, %v3053, 0
      %4057 = vmatprep.subr.bf16.mxu0 0
      %4058 = vmatpush1.bf16.msra.mxu0 %v4052
      %4059 = vmatprep.subr.bf16.mxu0 0
      %4060 = vmatpush1.bf16.msra.mxu0 0
      %4061 = vmatprep.subr.bf16.mxu0 0
      %4062 = vmatpush1.bf16.msra.mxu0 0
      %4063 = vmatprep.subr.bf16.mxu0 0
      %4064 = vmatpush1.bf16.msra.mxu0 0
      %4065 = vmatprep.subr.bf16.mxu0 0
      %4066 = vmatpush1.bf16.msra.mxu0 0
      %4067 = vmatprep.subr.bf16.mxu0 0
      %4068 = vmatpush1.bf16.msra.mxu0 0
      %4069 = vmatprep.subr.bf16.mxu0 0
      %4070 = vmatpush1.bf16.msra.mxu0 0
      %4071 = vmatprep.subr.bf16.mxu0 0
      %4072 = vmatpush1.bf16.msra.mxu0 0
      %4073 = vmatprep.subr.bf16.mxu0 0
      %4074 = vmatpush1.bf16.msra.mxu0 0
      %4075 = vmatprep.subr.bf16.mxu0 0
      %4076 = vmatpush1.bf16.msra.mxu0 0
      %4077 = vmatprep.subr.bf16.mxu0 0
      %4078 = vmatpush1.bf16.msra.mxu0 0
      %4079 = vmatprep.subr.bf16.mxu0 0
      %4080 = vmatpush1.bf16.msra.mxu0 0
      %4081 = vmatprep.subr.bf16.mxu0 0
      %4082 = vmatpush1.bf16.msra.mxu0 0
      %4083 = vmatprep.subr.bf16.mxu0 0
      %4084 = vmatpush1.bf16.msra.mxu0 0
      %4085 = vmatprep.subr.bf16.mxu0 0
      %4086 = vmatpush1.bf16.msra.mxu0 0
      %4087 = vmatprep.subr.bf16.mxu0 0
      %4088 = vmatpush1.bf16.msra.mxu0 0
      %4089 = vmatprep.mubr.bf16.mxu0 0
      %4090 = vmatmul.mubr.bf16.gmra.mrb[0].mxu0 %v4055
      %v4091 = vpop.f32.mrb[0].mxu0
      %v4092 = vadd.f32 0.0, %v4091
      %v4093 = vpop.f32.mrb[0].mxu0
      %v4094 = vpop.f32.mrb[0].mxu0
      %v4095 = vadd.f32 0.0, %v4094
      %v4096 = vpop.f32.mrb[0].mxu0
      %4097 = vdwg.mxu0
      %4098 = vrot.lane.b32.xlu0 %v644, 64
      %v4099 = vpop.permute.xlu0 %4098
      %v4102 = vsel %vm2327, %v3054, 0
      %4104 = vmatprep.subr.bf16.mxu0 0
      %4105 = vmatpush1.bf16.msra.mxu0 %v4099
      %4106 = vmatprep.subr.bf16.mxu0 0
      %4107 = vmatpush1.bf16.msra.mxu0 0
      %4108 = vmatprep.subr.bf16.mxu0 0
      %4109 = vmatpush1.bf16.msra.mxu0 0
      %4110 = vmatprep.subr.bf16.mxu0 0
      %4111 = vmatpush1.bf16.msra.mxu0 0
      %4112 = vmatprep.subr.bf16.mxu0 0
      %4113 = vmatpush1.bf16.msra.mxu0 0
      %4114 = vmatprep.subr.bf16.mxu0 0
      %4115 = vmatpush1.bf16.msra.mxu0 0
      %4116 = vmatprep.subr.bf16.mxu0 0
      %4117 = vmatpush1.bf16.msra.mxu0 0
      %4118 = vmatprep.subr.bf16.mxu0 0
      %4119 = vmatpush1.bf16.msra.mxu0 0
      %4120 = vmatprep.subr.bf16.mxu0 0
      %4121 = vmatpush1.bf16.msra.mxu0 0
      %4122 = vmatprep.subr.bf16.mxu0 0
      %4123 = vmatpush1.bf16.msra.mxu0 0
      %4124 = vmatprep.subr.bf16.mxu0 0
      %4125 = vmatpush1.bf16.msra.mxu0 0
      %4126 = vmatprep.subr.bf16.mxu0 0
      %4127 = vmatpush1.bf16.msra.mxu0 0
      %4128 = vmatprep.subr.bf16.mxu0 0
      %4129 = vmatpush1.bf16.msra.mxu0 0
      %4130 = vmatprep.subr.bf16.mxu0 0
      %4131 = vmatpush1.bf16.msra.mxu0 0
      %4132 = vmatprep.subr.bf16.mxu0 0
      %4133 = vmatpush1.bf16.msra.mxu0 0
      %4134 = vmatprep.subr.bf16.mxu0 0
      %4135 = vmatpush1.bf16.msra.mxu0 0
      %4136 = vmatprep.mubr.bf16.mxu0 0
      %4137 = vmatmul.mubr.bf16.gmra.mrb[0].mxu0 %v4102
      %v4138 = vpop.f32.mrb[0].mxu0
      %v4139 = vadd.f32 0.0, %v4138
      %v4140 = vpop.f32.mrb[0].mxu0
      %v4141 = vpop.f32.mrb[0].mxu0
      %v4142 = vadd.f32 0.0, %v4141
      %v4143 = vpop.f32.mrb[0].mxu0
      %4144 = vdwg.mxu0
      %4145 = vrot.lane.b32.xlu0 %v645, 64
      %v4146 = vpop.permute.xlu0 %4145
      %v4149 = vsel %vm2327, %v3055, 0
      %4151 = vmatprep.subr.bf16.mxu0 0
      %4152 = vmatpush1.bf16.msra.mxu0 %v4146
      %4153 = vmatprep.subr.bf16.mxu0 0
      %4154 = vmatpush1.bf16.msra.mxu0 0
      %4155 = vmatprep.subr.bf16.mxu0 0
      %4156 = vmatpush1.bf16.msra.mxu0 0
      %4157 = vmatprep.subr.bf16.mxu0 0
      %4158 = vmatpush1.bf16.msra.mxu0 0
      %4159 = vmatprep.subr.bf16.mxu0 0
      %4160 = vmatpush1.bf16.msra.mxu0 0
      %4161 = vmatprep.subr.bf16.mxu0 0
      %4162 = vmatpush1.bf16.msra.mxu0 0
      %4163 = vmatprep.subr.bf16.mxu0 0
      %4164 = vmatpush1.bf16.msra.mxu0 0
      %4165 = vmatprep.subr.bf16.mxu0 0
      %4166 = vmatpush1.bf16.msra.mxu0 0
      %4167 = vmatprep.subr.bf16.mxu0 0
      %4168 = vmatpush1.bf16.msra.mxu0 0
      %4169 = vmatprep.subr.bf16.mxu0 0
      %4170 = vmatpush1.bf16.msra.mxu0 0
      %4171 = vmatprep.subr.bf16.mxu0 0
      %4172 = vmatpush1.bf16.msra.mxu0 0
      %4173 = vmatprep.subr.bf16.mxu0 0
      %4174 = vmatpush1.bf16.msra.mxu0 0
      %4175 = vmatprep.subr.bf16.mxu0 0
      %4176 = vmatpush1.bf16.msra.mxu0 0
      %4177 = vmatprep.subr.bf16.mxu0 0
      %4178 = vmatpush1.bf16.msra.mxu0 0
      %4179 = vmatprep.subr.bf16.mxu0 0
      %4180 = vmatpush1.bf16.msra.mxu0 0
      %4181 = vmatprep.subr.bf16.mxu0 0
      %4182 = vmatpush1.bf16.msra.mxu0 0
      %4183 = vmatprep.mubr.bf16.mxu0 0
      %4184 = vmatmul.mubr.bf16.gmra.mrb[0].mxu0 %v4149
      %v4185 = vpop.f32.mrb[0].mxu0
      %v4186 = vadd.f32 0.0, %v4185
      %v4187 = vpop.f32.mrb[0].mxu0
      %v4188 = vpop.f32.mrb[0].mxu0
      %v4189 = vadd.f32 0.0, %v4188
      %v4190 = vpop.f32.mrb[0].mxu0
      %4191 = vdwg.mxu0
      %4192 = vrot.lane.b32.xlu0 %v646, 64
      %v4193 = vpop.permute.xlu0 %4192
      %v4196 = vsel %vm2327, %v3056, 0
      %4198 = vmatprep.subr.bf16.mxu0 0
      %4199 = vmatpush1.bf16.msra.mxu0 %v4193
      %4200 = vmatprep.subr.bf16.mxu0 0
      %4201 = vmatpush1.bf16.msra.mxu0 0
      %4202 = vmatprep.subr.bf16.mxu0 0
      %4203 = vmatpush1.bf16.msra.mxu0 0
      %4204 = vmatprep.subr.bf16.mxu0 0
      %4205 = vmatpush1.bf16.msra.mxu0 0
      %4206 = vmatprep.subr.bf16.mxu0 0
      %4207 = vmatpush1.bf16.msra.mxu0 0
      %4208 = vmatprep.subr.bf16.mxu0 0
      %4209 = vmatpush1.bf16.msra.mxu0 0
      %4210 = vmatprep.subr.bf16.mxu0 0
      %4211 = vmatpush1.bf16.msra.mxu0 0
      %4212 = vmatprep.subr.bf16.mxu0 0
      %4213 = vmatpush1.bf16.msra.mxu0 0
      %4214 = vmatprep.subr.bf16.mxu0 0
      %4215 = vmatpush1.bf16.msra.mxu0 0
      %4216 = vmatprep.subr.bf16.mxu0 0
      %4217 = vmatpush1.bf16.msra.mxu0 0
      %4218 = vmatprep.subr.bf16.mxu0 0
      %4219 = vmatpush1.bf16.msra.mxu0 0
      %4220 = vmatprep.subr.bf16.mxu0 0
      %4221 = vmatpush1.bf16.msra.mxu0 0
      %4222 = vmatprep.subr.bf16.mxu0 0
      %4223 = vmatpush1.bf16.msra.mxu0 0
      %4224 = vmatprep.subr.bf16.mxu0 0
      %4225 = vmatpush1.bf16.msra.mxu0 0
      %4226 = vmatprep.subr.bf16.mxu0 0
      %4227 = vmatpush1.bf16.msra.mxu0 0
      %4228 = vmatprep.subr.bf16.mxu0 0
      %4229 = vmatpush1.bf16.msra.mxu0 0
      %4230 = vmatprep.mubr.bf16.mxu0 0
      %4231 = vmatmul.mubr.bf16.gmra.mrb[0].mxu0 %v4196
      %v4232 = vpop.f32.mrb[0].mxu0
      %v4233 = vadd.f32 0.0, %v4232
      %v4234 = vpop.f32.mrb[0].mxu0
      %v4235 = vpop.f32.mrb[0].mxu0
      %v4236 = vadd.f32 0.0, %v4235
      %v4237 = vpop.f32.mrb[0].mxu0
      %4238 = vdwg.mxu0
      %4239 = vrot.lane.b32.xlu0 %v647, 64
      %v4240 = vpop.permute.xlu0 %4239
      %v4243 = vsel %vm2327, %v3057, 0
      %4245 = vmatprep.subr.bf16.mxu0 0
      %4246 = vmatpush1.bf16.msra.mxu0 %v4240
      %4247 = vmatprep.subr.bf16.mxu0 0
      %4248 = vmatpush1.bf16.msra.mxu0 0
      %4249 = vmatprep.subr.bf16.mxu0 0
      %4250 = vmatpush1.bf16.msra.mxu0 0
      %4251 = vmatprep.subr.bf16.mxu0 0
      %4252 = vmatpush1.bf16.msra.mxu0 0
      %4253 = vmatprep.subr.bf16.mxu0 0
      %4254 = vmatpush1.bf16.msra.mxu0 0
      %4255 = vmatprep.subr.bf16.mxu0 0
      %4256 = vmatpush1.bf16.msra.mxu0 0
      %4257 = vmatprep.subr.bf16.mxu0 0
      %4258 = vmatpush1.bf16.msra.mxu0 0
      %4259 = vmatprep.subr.bf16.mxu0 0
      %4260 = vmatpush1.bf16.msra.mxu0 0
      %4261 = vmatprep.subr.bf16.mxu0 0
      %4262 = vmatpush1.bf16.msra.mxu0 0
      %4263 = vmatprep.subr.bf16.mxu0 0
      %4264 = vmatpush1.bf16.msra.mxu0 0
      %4265 = vmatprep.subr.bf16.mxu0 0
      %4266 = vmatpush1.bf16.msra.mxu0 0
      %4267 = vmatprep.subr.bf16.mxu0 0
      %4268 = vmatpush1.bf16.msra.mxu0 0
      %4269 = vmatprep.subr.bf16.mxu0 0
      %4270 = vmatpush1.bf16.msra.mxu0 0
      %4271 = vmatprep.subr.bf16.mxu0 0
      %4272 = vmatpush1.bf16.msra.mxu0 0
      %4273 = vmatprep.subr.bf16.mxu0 0
      %4274 = vmatpush1.bf16.msra.mxu0 0
      %4275 = vmatprep.subr.bf16.mxu0 0
      %4276 = vmatpush1.bf16.msra.mxu0 0
      %4277 = vmatprep.mubr.bf16.mxu0 0
      %4278 = vmatmul.mubr.bf16.gmra.mrb[0].mxu0 %v4243
      %v4279 = vpop.f32.mrb[0].mxu0
      %v4280 = vadd.f32 0.0, %v4279
      %v4281 = vpop.f32.mrb[0].mxu0
      %v4282 = vpop.f32.mrb[0].mxu0
      %v4283 = vadd.f32 0.0, %v4282
      %v4284 = vpop.f32.mrb[0].mxu0
      %4285 = vdwg.mxu0
      %4286 = vrot.lane.b32.xlu0 %v648, 64
      %v4287 = vpop.permute.xlu0 %4286
      %v4290 = vsel %vm2327, %v3058, 0
      %4292 = vmatprep.subr.bf16.mxu0 0
      %4293 = vmatpush1.bf16.msra.mxu0 %v4287
      %4294 = vmatprep.subr.bf16.mxu0 0
      %4295 = vmatpush1.bf16.msra.mxu0 0
      %4296 = vmatprep.subr.bf16.mxu0 0
      %4297 = vmatpush1.bf16.msra.mxu0 0
      %4298 = vmatprep.subr.bf16.mxu0 0
      %4299 = vmatpush1.bf16.msra.mxu0 0
      %4300 = vmatprep.subr.bf16.mxu0 0
      %4301 = vmatpush1.bf16.msra.mxu0 0
      %4302 = vmatprep.subr.bf16.mxu0 0
      %4303 = vmatpush1.bf16.msra.mxu0 0
      %4304 = vmatprep.subr.bf16.mxu0 0
      %4305 = vmatpush1.bf16.msra.mxu0 0
      %4306 = vmatprep.subr.bf16.mxu0 0
      %4307 = vmatpush1.bf16.msra.mxu0 0
      %4308 = vmatprep.subr.bf16.mxu0 0
      %4309 = vmatpush1.bf16.msra.mxu0 0
      %4310 = vmatprep.subr.bf16.mxu0 0
      %4311 = vmatpush1.bf16.msra.mxu0 0
      %4312 = vmatprep.subr.bf16.mxu0 0
      %4313 = vmatpush1.bf16.msra.mxu0 0
      %4314 = vmatprep.subr.bf16.mxu0 0
      %4315 = vmatpush1.bf16.msra.mxu0 0
      %4316 = vmatprep.subr.bf16.mxu0 0
      %4317 = vmatpush1.bf16.msra.mxu0 0
      %4318 = vmatprep.subr.bf16.mxu0 0
      %4319 = vmatpush1.bf16.msra.mxu0 0
      %4320 = vmatprep.subr.bf16.mxu0 0
      %4321 = vmatpush1.bf16.msra.mxu0 0
      %4322 = vmatprep.subr.bf16.mxu0 0
      %4323 = vmatpush1.bf16.msra.mxu0 0
      %4324 = vmatprep.mubr.bf16.mxu0 0
      %4325 = vmatmul.mubr.bf16.gmra.mrb[0].mxu0 %v4290
      %v4326 = vpop.f32.mrb[0].mxu0
      %v4327 = vadd.f32 0.0, %v4326
      %v4328 = vpop.f32.mrb[0].mxu0
      %v4329 = vpop.f32.mrb[0].mxu0
      %v4330 = vadd.f32 0.0, %v4329
      %v4331 = vpop.f32.mrb[0].mxu0
      %4332 = vdwg.mxu0
      %4333 = vrot.lane.b32.xlu0 %v649, 64
      %v4334 = vpop.permute.xlu0 %4333
      %v4337 = vsel %vm2327, %v3059, 0
      %4339 = vmatprep.subr.bf16.mxu0 0
      %4340 = vmatpush1.bf16.msra.mxu0 %v4334
      %4341 = vmatprep.subr.bf16.mxu0 0
      %4342 = vmatpush1.bf16.msra.mxu0 0
      %4343 = vmatprep.subr.bf16.mxu0 0
      %4344 = vmatpush1.bf16.msra.mxu0 0
      %4345 = vmatprep.subr.bf16.mxu0 0
      %4346 = vmatpush1.bf16.msra.mxu0 0
      %4347 = vmatprep.subr.bf16.mxu0 0
      %4348 = vmatpush1.bf16.msra.mxu0 0
      %4349 = vmatprep.subr.bf16.mxu0 0
      %4350 = vmatpush1.bf16.msra.mxu0 0
      %4351 = vmatprep.subr.bf16.mxu0 0
      %4352 = vmatpush1.bf16.msra.mxu0 0
      %4353 = vmatprep.subr.bf16.mxu0 0
      %4354 = vmatpush1.bf16.msra.mxu0 0
      %4355 = vmatprep.subr.bf16.mxu0 0
      %4356 = vmatpush1.bf16.msra.mxu0 0
      %4357 = vmatprep.subr.bf16.mxu0 0
      %4358 = vmatpush1.bf16.msra.mxu0 0
      %4359 = vmatprep.subr.bf16.mxu0 0
      %4360 = vmatpush1.bf16.msra.mxu0 0
      %4361 = vmatprep.subr.bf16.mxu0 0
      %4362 = vmatpush1.bf16.msra.mxu0 0
      %4363 = vmatprep.subr.bf16.mxu0 0
      %4364 = vmatpush1.bf16.msra.mxu0 0
      %4365 = vmatprep.subr.bf16.mxu0 0
      %4366 = vmatpush1.bf16.msra.mxu0 0
      %4367 = vmatprep.subr.bf16.mxu0 0
      %4368 = vmatpush1.bf16.msra.mxu0 0
      %4369 = vmatprep.subr.bf16.mxu0 0
      %4370 = vmatpush1.bf16.msra.mxu0 0
      %4371 = vmatprep.mubr.bf16.mxu0 0
      %4372 = vmatmul.mubr.bf16.gmra.mrb[0].mxu0 %v4337
      %v4373 = vpop.f32.mrb[0].mxu0
      %v4374 = vadd.f32 0.0, %v4373
      %v4375 = vpop.f32.mrb[0].mxu0
      %v4376 = vpop.f32.mrb[0].mxu0
      %v4377 = vadd.f32 0.0, %v4376
      %v4378 = vpop.f32.mrb[0].mxu0
      %4379 = vdwg.mxu0
      %4380 = vrot.lane.b32.xlu0 %v650, 64
      %v4381 = vpop.permute.xlu0 %4380
      %v4384 = vsel %vm2327, %v3060, 0
      %4386 = vmatprep.subr.bf16.mxu0 0
      %4387 = vmatpush1.bf16.msra.mxu0 %v4381
      %4388 = vmatprep.subr.bf16.mxu0 0
      %4389 = vmatpush1.bf16.msra.mxu0 0
      %4390 = vmatprep.subr.bf16.mxu0 0
      %4391 = vmatpush1.bf16.msra.mxu0 0
      %4392 = vmatprep.subr.bf16.mxu0 0
      %4393 = vmatpush1.bf16.msra.mxu0 0
      %4394 = vmatprep.subr.bf16.mxu0 0
      %4395 = vmatpush1.bf16.msra.mxu0 0
      %4396 = vmatprep.subr.bf16.mxu0 0
      %4397 = vmatpush1.bf16.msra.mxu0 0
      %4398 = vmatprep.subr.bf16.mxu0 0
      %4399 = vmatpush1.bf16.msra.mxu0 0
      %4400 = vmatprep.subr.bf16.mxu0 0
      %4401 = vmatpush1.bf16.msra.mxu0 0
      %4402 = vmatprep.subr.bf16.mxu0 0
      %4403 = vmatpush1.bf16.msra.mxu0 0
      %4404 = vmatprep.subr.bf16.mxu0 0
      %4405 = vmatpush1.bf16.msra.mxu0 0
      %4406 = vmatprep.subr.bf16.mxu0 0
      %4407 = vmatpush1.bf16.msra.mxu0 0
      %4408 = vmatprep.subr.bf16.mxu0 0
      %4409 = vmatpush1.bf16.msra.mxu0 0
      %4410 = vmatprep.subr.bf16.mxu0 0
      %4411 = vmatpush1.bf16.msra.mxu0 0
      %4412 = vmatprep.subr.bf16.mxu0 0
      %4413 = vmatpush1.bf16.msra.mxu0 0
      %4414 = vmatprep.subr.bf16.mxu0 0
      %4415 = vmatpush1.bf16.msra.mxu0 0
      %4416 = vmatprep.subr.bf16.mxu0 0
      %4417 = vmatpush1.bf16.msra.mxu0 0
      %4418 = vmatprep.mubr.bf16.mxu0 0
      %4419 = vmatmul.mubr.bf16.gmra.mrb[0].mxu0 %v4384
      %v4420 = vpop.f32.mrb[0].mxu0
      %v4421 = vadd.f32 0.0, %v4420
      %v4422 = vpop.f32.mrb[0].mxu0
      %v4423 = vpop.f32.mrb[0].mxu0
      %v4424 = vadd.f32 0.0, %v4423
      %v4425 = vpop.f32.mrb[0].mxu0
      %4426 = vdwg.mxu0
      %4427 = vrot.lane.b32.xlu0 %v651, 64
      %v4428 = vpop.permute.xlu0 %4427
      %v4431 = vsel %vm2327, %v3061, 0
      %4433 = vmatprep.subr.bf16.mxu0 0
      %4434 = vmatpush1.bf16.msra.mxu0 %v4428
      %4435 = vmatprep.subr.bf16.mxu0 0
      %4436 = vmatpush1.bf16.msra.mxu0 0
      %4437 = vmatprep.subr.bf16.mxu0 0
      %4438 = vmatpush1.bf16.msra.mxu0 0
      %4439 = vmatprep.subr.bf16.mxu0 0
      %4440 = vmatpush1.bf16.msra.mxu0 0
      %4441 = vmatprep.subr.bf16.mxu0 0
      %4442 = vmatpush1.bf16.msra.mxu0 0
      %4443 = vmatprep.subr.bf16.mxu0 0
      %4444 = vmatpush1.bf16.msra.mxu0 0
      %4445 = vmatprep.subr.bf16.mxu0 0
      %4446 = vmatpush1.bf16.msra.mxu0 0
      %4447 = vmatprep.subr.bf16.mxu0 0
      %4448 = vmatpush1.bf16.msra.mxu0 0
      %4449 = vmatprep.subr.bf16.mxu0 0
      %4450 = vmatpush1.bf16.msra.mxu0 0
      %4451 = vmatprep.subr.bf16.mxu0 0
      %4452 = vmatpush1.bf16.msra.mxu0 0
      %4453 = vmatprep.subr.bf16.mxu0 0
      %4454 = vmatpush1.bf16.msra.mxu0 0
      %4455 = vmatprep.subr.bf16.mxu0 0
      %4456 = vmatpush1.bf16.msra.mxu0 0
      %4457 = vmatprep.subr.bf16.mxu0 0
      %4458 = vmatpush1.bf16.msra.mxu0 0
      %4459 = vmatprep.subr.bf16.mxu0 0
      %4460 = vmatpush1.bf16.msra.mxu0 0
      %4461 = vmatprep.subr.bf16.mxu0 0
      %4462 = vmatpush1.bf16.msra.mxu0 0
      %4463 = vmatprep.subr.bf16.mxu0 0
      %4464 = vmatpush1.bf16.msra.mxu0 0
      %4465 = vmatprep.mubr.bf16.mxu0 0
      %4466 = vmatmul.mubr.bf16.gmra.mrb[0].mxu0 %v4431
      %v4467 = vpop.f32.mrb[0].mxu0
      %v4468 = vadd.f32 0.0, %v4467
      %v4469 = vpop.f32.mrb[0].mxu0
      %v4470 = vpop.f32.mrb[0].mxu0
      %v4471 = vadd.f32 0.0, %v4470
      %v4472 = vpop.f32.mrb[0].mxu0
      %4473 = vdwg.mxu0
      %4474 = vrot.lane.b32.xlu0 %v652, 64
      %v4475 = vpop.permute.xlu0 %4474
      %v4478 = vsel %vm2327, %v3062, 0
      %4480 = vmatprep.subr.bf16.mxu0 0
      %4481 = vmatpush1.bf16.msra.mxu0 %v4475
      %4482 = vmatprep.subr.bf16.mxu0 0
      %4483 = vmatpush1.bf16.msra.mxu0 0
      %4484 = vmatprep.subr.bf16.mxu0 0
      %4485 = vmatpush1.bf16.msra.mxu0 0
      %4486 = vmatprep.subr.bf16.mxu0 0
      %4487 = vmatpush1.bf16.msra.mxu0 0
      %4488 = vmatprep.subr.bf16.mxu0 0
      %4489 = vmatpush1.bf16.msra.mxu0 0
      %4490 = vmatprep.subr.bf16.mxu0 0
      %4491 = vmatpush1.bf16.msra.mxu0 0
      %4492 = vmatprep.subr.bf16.mxu0 0
      %4493 = vmatpush1.bf16.msra.mxu0 0
      %4494 = vmatprep.subr.bf16.mxu0 0
      %4495 = vmatpush1.bf16.msra.mxu0 0
      %4496 = vmatprep.subr.bf16.mxu0 0
      %4497 = vmatpush1.bf16.msra.mxu0 0
      %4498 = vmatprep.subr.bf16.mxu0 0
      %4499 = vmatpush1.bf16.msra.mxu0 0
      %4500 = vmatprep.subr.bf16.mxu0 0
      %4501 = vmatpush1.bf16.msra.mxu0 0
      %4502 = vmatprep.subr.bf16.mxu0 0
      %4503 = vmatpush1.bf16.msra.mxu0 0
      %4504 = vmatprep.subr.bf16.mxu0 0
      %4505 = vmatpush1.bf16.msra.mxu0 0
      %4506 = vmatprep.subr.bf16.mxu0 0
      %4507 = vmatpush1.bf16.msra.mxu0 0
      %4508 = vmatprep.subr.bf16.mxu0 0
      %4509 = vmatpush1.bf16.msra.mxu0 0
      %4510 = vmatprep.subr.bf16.mxu0 0
      %4511 = vmatpush1.bf16.msra.mxu0 0
      %4512 = vmatprep.mubr.bf16.mxu0 0
      %4513 = vmatmul.mubr.bf16.gmra.mrb[0].mxu0 %v4478
      %v4514 = vpop.f32.mrb[0].mxu0
      %v4515 = vadd.f32 0.0, %v4514
      %v4516 = vpop.f32.mrb[0].mxu0
      %v4517 = vpop.f32.mrb[0].mxu0
      %v4518 = vadd.f32 0.0, %v4517
      %v4519 = vpop.f32.mrb[0].mxu0
      %4520 = vdwg.mxu0
      %4521 = vrot.lane.b32.xlu0 %v653, 64
      %v4522 = vpop.permute.xlu0 %4521
      %v4525 = vsel %vm2327, %v3063, 0
      %4527 = vmatprep.subr.bf16.mxu0 0
      %4528 = vmatpush1.bf16.msra.mxu0 %v4522
      %4529 = vmatprep.subr.bf16.mxu0 0
      %4530 = vmatpush1.bf16.msra.mxu0 0
      %4531 = vmatprep.subr.bf16.mxu0 0
      %4532 = vmatpush1.bf16.msra.mxu0 0
      %4533 = vmatprep.subr.bf16.mxu0 0
      %4534 = vmatpush1.bf16.msra.mxu0 0
      %4535 = vmatprep.subr.bf16.mxu0 0
      %4536 = vmatpush1.bf16.msra.mxu0 0
      %4537 = vmatprep.subr.bf16.mxu0 0
      %4538 = vmatpush1.bf16.msra.mxu0 0
      %4539 = vmatprep.subr.bf16.mxu0 0
      %4540 = vmatpush1.bf16.msra.mxu0 0
      %4541 = vmatprep.subr.bf16.mxu0 0
      %4542 = vmatpush1.bf16.msra.mxu0 0
      %4543 = vmatprep.subr.bf16.mxu0 0
      %4544 = vmatpush1.bf16.msra.mxu0 0
      %4545 = vmatprep.subr.bf16.mxu0 0
      %4546 = vmatpush1.bf16.msra.mxu0 0
      %4547 = vmatprep.subr.bf16.mxu0 0
      %4548 = vmatpush1.bf16.msra.mxu0 0
      %4549 = vmatprep.subr.bf16.mxu0 0
      %4550 = vmatpush1.bf16.msra.mxu0 0
      %4551 = vmatprep.subr.bf16.mxu0 0
      %4552 = vmatpush1.bf16.msra.mxu0 0
      %4553 = vmatprep.subr.bf16.mxu0 0
      %4554 = vmatpush1.bf16.msra.mxu0 0
      %4555 = vmatprep.subr.bf16.mxu0 0
      %4556 = vmatpush1.bf16.msra.mxu0 0
      %4557 = vmatprep.subr.bf16.mxu0 0
      %4558 = vmatpush1.bf16.msra.mxu0 0
      %4559 = vmatprep.mubr.bf16.mxu0 0
      %4560 = vmatmul.mubr.bf16.gmra.mrb[0].mxu0 %v4525
      %v4561 = vpop.f32.mrb[0].mxu0
      %v4562 = vadd.f32 0.0, %v4561
      %v4563 = vpop.f32.mrb[0].mxu0
      %v4564 = vpop.f32.mrb[0].mxu0
      %v4565 = vadd.f32 0.0, %v4564
      %v4566 = vpop.f32.mrb[0].mxu0
      %4567 = vdwg.mxu0
      %v4568 = vpack.c.bf16 %v3108, %v3105
      %v4569 = vpack.c.bf16 %v3155, %v3152
      %v4570 = vpack.c.bf16 %v3202, %v3199
      %v4571 = vpack.c.bf16 %v3249, %v3246
      %v4572 = vpack.c.bf16 %v3296, %v3293
      %v4573 = vpack.c.bf16 %v3343, %v3340
      %v4574 = vpack.c.bf16 %v3390, %v3387
      %v4575 = vpack.c.bf16 %v3437, %v3434
      %v4576 = vpack.c.bf16 %v3484, %v3481
      %v4577 = vpack.c.bf16 %v3531, %v3528
      %v4578 = vpack.c.bf16 %v3578, %v3575
      %v4579 = vpack.c.bf16 %v3625, %v3622
      %v4580 = vpack.c.bf16 %v3672, %v3669
      %v4581 = vpack.c.bf16 %v3719, %v3716
      %v4582 = vpack.c.bf16 %v3766, %v3763
      %v4583 = vpack.c.bf16 %v3813, %v3810
      %v4584 = vpack.c.bf16 %v3860, %v3857
      %v4585 = vpack.c.bf16 %v3907, %v3904
      %v4586 = vpack.c.bf16 %v3954, %v3951
      %v4587 = vpack.c.bf16 %v4001, %v3998
      %v4588 = vpack.c.bf16 %v4048, %v4045
      %v4589 = vpack.c.bf16 %v4095, %v4092
      %v4590 = vpack.c.bf16 %v4142, %v4139
      %v4591 = vpack.c.bf16 %v4189, %v4186
      %v4592 = vpack.c.bf16 %v4236, %v4233
      %v4593 = vpack.c.bf16 %v4283, %v4280
      %v4594 = vpack.c.bf16 %v4330, %v4327
      %v4595 = vpack.c.bf16 %v4377, %v4374
      %v4596 = vpack.c.bf16 %v4424, %v4421
      %v4597 = vpack.c.bf16 %v4471, %v4468
      %v4598 = vpack.c.bf16 %v4518, %v4515
      %v4599 = vpack.c.bf16 %v4565, %v4562
      %v4600 = vld [vmem:[%s4] sm:$0x1]
      %v4601 = vld [vmem:[%s3] sm:$0xf]
      %v4603 = vsel %vm657, %v4568, 0
      %v4606 = vsel %vm657, %v4569, 0
      %v4609 = vsel %vm657, %v4570, 0
      %v4612 = vsel %vm657, %v4571, 0
      %v4615 = vsel %vm657, %v4572, 0
      %v4618 = vsel %vm657, %v4573, 0
      %v4621 = vsel %vm657, %v4574, 0
      %v4624 = vsel %vm657, %v4575, 0
      %vm4626 = vcmask 1043456
      %v4628 = vsel %vm4626, %v4601, 0
      %4630 = vmatprep.subr.bf16.mxu0 0
      %4631 = vmatpush1.bf16.msra.mxu0 %v4628
      %4632 = vmatprep.subr.bf16.mxu0 0
      %4633 = vmatpush1.bf16.msra.mxu0 0
      %4634 = vmatprep.subr.bf16.mxu0 0
      %4635 = vmatpush1.bf16.msra.mxu0 0
      %4636 = vmatprep.subr.bf16.mxu0 0
      %4637 = vmatpush1.bf16.msra.mxu0 0
      %4638 = vmatprep.subr.bf16.mxu0 0
      %4639 = vmatpush1.bf16.msra.mxu0 0
      %4640 = vmatprep.subr.bf16.mxu0 0
      %4641 = vmatpush1.bf16.msra.mxu0 0
      %4642 = vmatprep.subr.bf16.mxu0 0
      %4643 = vmatpush1.bf16.msra.mxu0 0
      %4644 = vmatprep.subr.bf16.mxu0 0
      %4645 = vmatpush1.bf16.msra.mxu0 0
      %4646 = vmatprep.subr.bf16.mxu0 0
      %4647 = vmatpush1.bf16.msra.mxu0 0
      %4648 = vmatprep.subr.bf16.mxu0 0
      %4649 = vmatpush1.bf16.msra.mxu0 0
      %4650 = vmatprep.subr.bf16.mxu0 0
      %4651 = vmatpush1.bf16.msra.mxu0 0
      %4652 = vmatprep.subr.bf16.mxu0 0
      %4653 = vmatpush1.bf16.msra.mxu0 0
      %4654 = vmatprep.subr.bf16.mxu0 0
      %4655 = vmatpush1.bf16.msra.mxu0 0
      %4656 = vmatprep.subr.bf16.mxu0 0
      %4657 = vmatpush1.bf16.msra.mxu0 0
      %4658 = vmatprep.subr.bf16.mxu0 0
      %4659 = vmatpush1.bf16.msra.mxu0 0
      %4660 = vmatprep.subr.bf16.mxu0 0
      %4661 = vmatpush1.bf16.msra.mxu0 0
      %4662 = vmatprep.mubr.bf16.mxu0 0
      %4663 = vmatmul.mubr.bf16.gmra.mrb[0].mxu0 %v4603
      %v4664 = vpop.f32.mrb[0].mxu0
      %v4665 = vadd.f32 0.0, %v4664
      %v4666 = vpop.f32.mrb[0].mxu0
      %v4667 = vpop.f32.mrb[0].mxu0
      %v4668 = vadd.f32 0.0, %v4667
      %v4669 = vpop.f32.mrb[0].mxu0
      %4670 = vmatprep.mubr.bf16.mxu0 0
      %4671 = vmatmul.mubr.bf16.gmra.mrb[0].mxu0 %v4606
      %v4672 = vpop.f32.mrb[0].mxu0
      %v4673 = vadd.f32 0.0, %v4672
      %v4674 = vpop.f32.mrb[0].mxu0
      %v4675 = vpop.f32.mrb[0].mxu0
      %v4676 = vadd.f32 0.0, %v4675
      %v4677 = vpop.f32.mrb[0].mxu0
      %4678 = vmatprep.mubr.bf16.mxu0 0
      %4679 = vmatmul.mubr.bf16.gmra.mrb[0].mxu0 %v4609
      %v4680 = vpop.f32.mrb[0].mxu0
      %v4681 = vadd.f32 0.0, %v4680
      %v4682 = vpop.f32.mrb[0].mxu0
      %v4683 = vpop.f32.mrb[0].mxu0
      %v4684 = vadd.f32 0.0, %v4683
      %v4685 = vpop.f32.mrb[0].mxu0
      %4686 = vmatprep.mubr.bf16.mxu0 0
      %4687 = vmatmul.mubr.bf16.gmra.mrb[0].mxu0 %v4612
      %v4688 = vpop.f32.mrb[0].mxu0
      %v4689 = vadd.f32 0.0, %v4688
      %v4690 = vpop.f32.mrb[0].mxu0
      %v4691 = vpop.f32.mrb[0].mxu0
      %v4692 = vadd.f32 0.0, %v4691
      %v4693 = vpop.f32.mrb[0].mxu0
      %4694 = vmatprep.mubr.bf16.mxu0 0
      %4695 = vmatmul.mubr.bf16.gmra.mrb[0].mxu0 %v4615
      %v4696 = vpop.f32.mrb[0].mxu0
      %v4697 = vadd.f32 0.0, %v4696
      %v4698 = vpop.f32.mrb[0].mxu0
      %v4699 = vpop.f32.mrb[0].mxu0
      %v4700 = vadd.f32 0.0, %v4699
      %v4701 = vpop.f32.mrb[0].mxu0
      %4702 = vmatprep.mubr.bf16.mxu0 0
      %4703 = vmatmul.mubr.bf16.gmra.mrb[0].mxu0 %v4618
      %v4704 = vpop.f32.mrb[0].mxu0
      %v4705 = vadd.f32 0.0, %v4704
      %v4706 = vpop.f32.mrb[0].mxu0
      %v4707 = vpop.f32.mrb[0].mxu0
      %v4708 = vadd.f32 0.0, %v4707
      %v4709 = vpop.f32.mrb[0].mxu0
      %4710 = vmatprep.mubr.bf16.mxu0 0
      %4711 = vmatmul.mubr.bf16.gmra.mrb[0].mxu0 %v4621
      %v4712 = vpop.f32.mrb[0].mxu0
      %v4713 = vadd.f32 0.0, %v4712
      %v4714 = vpop.f32.mrb[0].mxu0
      %v4715 = vpop.f32.mrb[0].mxu0
      %v4716 = vadd.f32 0.0, %v4715
      %v4717 = vpop.f32.mrb[0].mxu0
      %4718 = vmatprep.mubr.bf16.mxu0 0
      %4719 = vmatmul.mubr.bf16.gmra.mrb[0].mxu0 %v4624
      %v4720 = vpop.f32.mrb[0].mxu0
      %v4721 = vadd.f32 0.0, %v4720
      %v4722 = vpop.f32.mrb[0].mxu0
      %v4723 = vpop.f32.mrb[0].mxu0
      %v4724 = vadd.f32 0.0, %v4723
      %v4725 = vpop.f32.mrb[0].mxu0
      %4726 = vdwg.mxu0
      %v4728 = vlaneseq
      %v4729 = vshrl.u32 %v4728, 7
      %v4730 = vsub.s32 0, %v4729
      %v4731 = vrot.slane %v4600, %v4730
      %v4733 = vadd.f32 %v4731, %v4665
      %v4734 = vadd.f32 %v4731, %v4668
      %v4735 = vadd.f32 %v4731, %v4673
      %v4736 = vadd.f32 %v4731, %v4676
      %v4737 = vadd.f32 %v4731, %v4681
      %v4738 = vadd.f32 %v4731, %v4684
      %v4739 = vadd.f32 %v4731, %v4689
      %v4740 = vadd.f32 %v4731, %v4692
      %v4741 = vadd.f32 %v4731, %v4697
      %v4742 = vadd.f32 %v4731, %v4700
      %v4743 = vadd.f32 %v4731, %v4705
      %v4744 = vadd.f32 %v4731, %v4708
      %v4745 = vadd.f32 %v4731, %v4713
      %v4746 = vadd.f32 %v4731, %v4716
      %v4747 = vadd.f32 %v4731, %v4721
      %v4748 = vadd.f32 %v4731, %v4724
      %s4749 = scalar_lea.vmem %s3, 4
      %v4750 = vld [vmem:[%s4749] sm:$0xf]
      %v4752 = vsel %vm657, %v4576, 0
      %v4755 = vsel %vm657, %v4577, 0
      %v4758 = vsel %vm657, %v4578, 0
      %v4761 = vsel %vm657, %v4579, 0
      %v4764 = vsel %vm657, %v4580, 0
      %v4767 = vsel %vm657, %v4581, 0
      %v4770 = vsel %vm657, %v4582, 0
      %v4773 = vsel %vm657, %v4583, 0
      %v4776 = vsel %vm4626, %v4750, 0
      %4778 = vmatprep.subr.bf16.mxu0 0
      %4779 = vmatpush1.bf16.msra.mxu0 %v4776
      %4780 = vmatprep.subr.bf16.mxu0 0
      %4781 = vmatpush1.bf16.msra.mxu0 0
      %4782 = vmatprep.subr.bf16.mxu0 0
      %4783 = vmatpush1.bf16.msra.mxu0 0
      %4784 = vmatprep.subr.bf16.mxu0 0
      %4785 = vmatpush1.bf16.msra.mxu0 0
      %4786 = vmatprep.subr.bf16.mxu0 0
      %4787 = vmatpush1.bf16.msra.mxu0 0
      %4788 = vmatprep.subr.bf16.mxu0 0
      %4789 = vmatpush1.bf16.msra.mxu0 0
      %4790 = vmatprep.subr.bf16.mxu0 0
      %4791 = vmatpush1.bf16.msra.mxu0 0
      %4792 = vmatprep.subr.bf16.mxu0 0
      %4793 = vmatpush1.bf16.msra.mxu0 0
      %4794 = vmatprep.subr.bf16.mxu0 0
      %4795 = vmatpush1.bf16.msra.mxu0 0
      %4796 = vmatprep.subr.bf16.mxu0 0
      %4797 = vmatpush1.bf16.msra.mxu0 0
      %4798 = vmatprep.subr.bf16.mxu0 0
      %4799 = vmatpush1.bf16.msra.mxu0 0
      %4800 = vmatprep.subr.bf16.mxu0 0
      %4801 = vmatpush1.bf16.msra.mxu0 0
      %4802 = vmatprep.subr.bf16.mxu0 0
      %4803 = vmatpush1.bf16.msra.mxu0 0
      %4804 = vmatprep.subr.bf16.mxu0 0
      %4805 = vmatpush1.bf16.msra.mxu0 0
      %4806 = vmatprep.subr.bf16.mxu0 0
      %4807 = vmatpush1.bf16.msra.mxu0 0
      %4808 = vmatprep.subr.bf16.mxu0 0
      %4809 = vmatpush1.bf16.msra.mxu0 0
      %4810 = vmatprep.mubr.bf16.mxu0 0
      %4811 = vmatmul.mubr.bf16.gmra.mrb[0].mxu0 %v4752
      %v4812 = vpop.f32.mrb[0].mxu0
      %v4813 = vadd.f32 0.0, %v4812
      %v4814 = vpop.f32.mrb[0].mxu0
      %v4815 = vpop.f32.mrb[0].mxu0
      %v4816 = vadd.f32 0.0, %v4815
      %v4817 = vpop.f32.mrb[0].mxu0
      %4818 = vmatprep.mubr.bf16.mxu0 0
      %4819 = vmatmul.mubr.bf16.gmra.mrb[0].mxu0 %v4755
      %v4820 = vpop.f32.mrb[0].mxu0
      %v4821 = vadd.f32 0.0, %v4820
      %v4822 = vpop.f32.mrb[0].mxu0
      %v4823 = vpop.f32.mrb[0].mxu0
      %v4824 = vadd.f32 0.0, %v4823
      %v4825 = vpop.f32.mrb[0].mxu0
      %4826 = vmatprep.mubr.bf16.mxu0 0
      %4827 = vmatmul.mubr.bf16.gmra.mrb[0].mxu0 %v4758
      %v4828 = vpop.f32.mrb[0].mxu0
      %v4829 = vadd.f32 0.0, %v4828
      %v4830 = vpop.f32.mrb[0].mxu0
      %v4831 = vpop.f32.mrb[0].mxu0
      %v4832 = vadd.f32 0.0, %v4831
      %v4833 = vpop.f32.mrb[0].mxu0
      %4834 = vmatprep.mubr.bf16.mxu0 0
      %4835 = vmatmul.mubr.bf16.gmra.mrb[0].mxu0 %v4761
      %v4836 = vpop.f32.mrb[0].mxu0
      %v4837 = vadd.f32 0.0, %v4836
      %v4838 = vpop.f32.mrb[0].mxu0
      %v4839 = vpop.f32.mrb[0].mxu0
      %v4840 = vadd.f32 0.0, %v4839
      %v4841 = vpop.f32.mrb[0].mxu0
      %4842 = vmatprep.mubr.bf16.mxu0 0
      %4843 = vmatmul.mubr.bf16.gmra.mrb[0].mxu0 %v4764
      %v4844 = vpop.f32.mrb[0].mxu0
      %v4845 = vadd.f32 0.0, %v4844
      %v4846 = vpop.f32.mrb[0].mxu0
      %v4847 = vpop.f32.mrb[0].mxu0
      %v4848 = vadd.f32 0.0, %v4847
      %v4849 = vpop.f32.mrb[0].mxu0
      %4850 = vmatprep.mubr.bf16.mxu0 0
      %4851 = vmatmul.mubr.bf16.gmra.mrb[0].mxu0 %v4767
      %v4852 = vpop.f32.mrb[0].mxu0
      %v4853 = vadd.f32 0.0, %v4852
      %v4854 = vpop.f32.mrb[0].mxu0
      %v4855 = vpop.f32.mrb[0].mxu0
      %v4856 = vadd.f32 0.0, %v4855
      %v4857 = vpop.f32.mrb[0].mxu0
      %4858 = vmatprep.mubr.bf16.mxu0 0
      %4859 = vmatmul.mubr.bf16.gmra.mrb[0].mxu0 %v4770
      %v4860 = vpop.f32.mrb[0].mxu0
      %v4861 = vadd.f32 0.0, %v4860
      %v4862 = vpop.f32.mrb[0].mxu0
      %v4863 = vpop.f32.mrb[0].mxu0
      %v4864 = vadd.f32 0.0, %v4863
      %v4865 = vpop.f32.mrb[0].mxu0
      %4866 = vmatprep.mubr.bf16.mxu0 0
      %4867 = vmatmul.mubr.bf16.gmra.mrb[0].mxu0 %v4773
      %v4868 = vpop.f32.mrb[0].mxu0
      %v4869 = vadd.f32 0.0, %v4868
      %v4870 = vpop.f32.mrb[0].mxu0
      %v4871 = vpop.f32.mrb[0].mxu0
      %v4872 = vadd.f32 0.0, %v4871
      %v4873 = vpop.f32.mrb[0].mxu0
      %4874 = vdwg.mxu0
      %v4875 = vadd.f32 %v4733, %v4813
      %v4876 = vadd.f32 %v4734, %v4816
      %v4877 = vadd.f32 %v4735, %v4821
      %v4878 = vadd.f32 %v4736, %v4824
      %v4879 = vadd.f32 %v4737, %v4829
      %v4880 = vadd.f32 %v4738, %v4832
      %v4881 = vadd.f32 %v4739, %v4837
      %v4882 = vadd.f32 %v4740, %v4840
      %v4883 = vadd.f32 %v4741, %v4845
      %v4884 = vadd.f32 %v4742, %v4848
      %v4885 = vadd.f32 %v4743, %v4853
      %v4886 = vadd.f32 %v4744, %v4856
      %v4887 = vadd.f32 %v4745, %v4861
      %v4888 = vadd.f32 %v4746, %v4864
      %v4889 = vadd.f32 %v4747, %v4869
      %v4890 = vadd.f32 %v4748, %v4872
      %s4891 = scalar_lea.vmem %s3, 8
      %v4892 = vld [vmem:[%s4891] sm:$0xf]
      %v4894 = vsel %vm657, %v4584, 0
      %v4897 = vsel %vm657, %v4585, 0
      %v4900 = vsel %vm657, %v4586, 0
      %v4903 = vsel %vm657, %v4587, 0
      %v4906 = vsel %vm657, %v4588, 0
      %v4909 = vsel %vm657, %v4589, 0
      %v4912 = vsel %vm657, %v4590, 0
      %v4915 = vsel %vm657, %v4591, 0
      %v4918 = vsel %vm4626, %v4892, 0
      %4920 = vmatprep.subr.bf16.mxu0 0
      %4921 = vmatpush1.bf16.msra.mxu0 %v4918
      %4922 = vmatprep.subr.bf16.mxu0 0
      %4923 = vmatpush1.bf16.msra.mxu0 0
      %4924 = vmatprep.subr.bf16.mxu0 0
      %4925 = vmatpush1.bf16.msra.mxu0 0
      %4926 = vmatprep.subr.bf16.mxu0 0
      %4927 = vmatpush1.bf16.msra.mxu0 0
      %4928 = vmatprep.subr.bf16.mxu0 0
      %4929 = vmatpush1.bf16.msra.mxu0 0
      %4930 = vmatprep.subr.bf16.mxu0 0
      %4931 = vmatpush1.bf16.msra.mxu0 0
      %4932 = vmatprep.subr.bf16.mxu0 0
      %4933 = vmatpush1.bf16.msra.mxu0 0
      %4934 = vmatprep.subr.bf16.mxu0 0
      %4935 = vmatpush1.bf16.msra.mxu0 0
      %4936 = vmatprep.subr.bf16.mxu0 0
      %4937 = vmatpush1.bf16.msra.mxu0 0
      %4938 = vmatprep.subr.bf16.mxu0 0
      %4939 = vmatpush1.bf16.msra.mxu0 0
      %4940 = vmatprep.subr.bf16.mxu0 0
      %4941 = vmatpush1.bf16.msra.mxu0 0
      %4942 = vmatprep.subr.bf16.mxu0 0
      %4943 = vmatpush1.bf16.msra.mxu0 0
      %4944 = vmatprep.subr.bf16.mxu0 0
      %4945 = vmatpush1.bf16.msra.mxu0 0
      %4946 = vmatprep.subr.bf16.mxu0 0
      %4947 = vmatpush1.bf16.msra.mxu0 0
      %4948 = vmatprep.subr.bf16.mxu0 0
      %4949 = vmatpush1.bf16.msra.mxu0 0
      %4950 = vmatprep.subr.bf16.mxu0 0
      %4951 = vmatpush1.bf16.msra.mxu0 0
      %4952 = vmatprep.mubr.bf16.mxu0 0
      %4953 = vmatmul.mubr.bf16.gmra.mrb[0].mxu0 %v4894
      %v4954 = vpop.f32.mrb[0].mxu0
      %v4955 = vadd.f32 0.0, %v4954
      %v4956 = vpop.f32.mrb[0].mxu0
      %v4957 = vpop.f32.mrb[0].mxu0
      %v4958 = vadd.f32 0.0, %v4957
      %v4959 = vpop.f32.mrb[0].mxu0
      %4960 = vmatprep.mubr.bf16.mxu0 0
      %4961 = vmatmul.mubr.bf16.gmra.mrb[0].mxu0 %v4897
      %v4962 = vpop.f32.mrb[0].mxu0
      %v4963 = vadd.f32 0.0, %v4962
      %v4964 = vpop.f32.mrb[0].mxu0
      %v4965 = vpop.f32.mrb[0].mxu0
      %v4966 = vadd.f32 0.0, %v4965
      %v4967 = vpop.f32.mrb[0].mxu0
      %4968 = vmatprep.mubr.bf16.mxu0 0
      %4969 = vmatmul.mubr.bf16.gmra.mrb[0].mxu0 %v4900
      %v4970 = vpop.f32.mrb[0].mxu0
      %v4971 = vadd.f32 0.0, %v4970
      %v4972 = vpop.f32.mrb[0].mxu0
      %v4973 = vpop.f32.mrb[0].mxu0
      %v4974 = vadd.f32 0.0, %v4973
      %v4975 = vpop.f32.mrb[0].mxu0
      %4976 = vmatprep.mubr.bf16.mxu0 0
      %4977 = vmatmul.mubr.bf16.gmra.mrb[0].mxu0 %v4903
      %v4978 = vpop.f32.mrb[0].mxu0
      %v4979 = vadd.f32 0.0, %v4978
      %v4980 = vpop.f32.mrb[0].mxu0
      %v4981 = vpop.f32.mrb[0].mxu0
      %v4982 = vadd.f32 0.0, %v4981
      %v4983 = vpop.f32.mrb[0].mxu0
      %4984 = vmatprep.mubr.bf16.mxu0 0
      %4985 = vmatmul.mubr.bf16.gmra.mrb[0].mxu0 %v4906
      %v4986 = vpop.f32.mrb[0].mxu0
      %v4987 = vadd.f32 0.0, %v4986
      %v4988 = vpop.f32.mrb[0].mxu0
      %v4989 = vpop.f32.mrb[0].mxu0
      %v4990 = vadd.f32 0.0, %v4989
      %v4991 = vpop.f32.mrb[0].mxu0
      %4992 = vmatprep.mubr.bf16.mxu0 0
      %4993 = vmatmul.mubr.bf16.gmra.mrb[0].mxu0 %v4909
      %v4994 = vpop.f32.mrb[0].mxu0
      %v4995 = vadd.f32 0.0, %v4994
      %v4996 = vpop.f32.mrb[0].mxu0
      %v4997 = vpop.f32.mrb[0].mxu0
      %v4998 = vadd.f32 0.0, %v4997
      %v4999 = vpop.f32.mrb[0].mxu0
      %5000 = vmatprep.mubr.bf16.mxu0 0
      %5001 = vmatmul.mubr.bf16.gmra.mrb[0].mxu0 %v4912
      %v5002 = vpop.f32.mrb[0].mxu0
      %v5003 = vadd.f32 0.0, %v5002
      %v5004 = vpop.f32.mrb[0].mxu0
      %v5005 = vpop.f32.mrb[0].mxu0
      %v5006 = vadd.f32 0.0, %v5005
      %v5007 = vpop.f32.mrb[0].mxu0
      %5008 = vmatprep.mubr.bf16.mxu0 0
      %5009 = vmatmul.mubr.bf16.gmra.mrb[0].mxu0 %v4915
      %v5010 = vpop.f32.mrb[0].mxu0
      %v5011 = vadd.f32 0.0, %v5010
      %v5012 = vpop.f32.mrb[0].mxu0
      %v5013 = vpop.f32.mrb[0].mxu0
      %v5014 = vadd.f32 0.0, %v5013
      %v5015 = vpop.f32.mrb[0].mxu0
      %5016 = vdwg.mxu0
      %v5017 = vadd.f32 %v4875, %v4955
      %v5018 = vadd.f32 %v4876, %v4958
      %v5019 = vadd.f32 %v4877, %v4963
      %v5020 = vadd.f32 %v4878, %v4966
      %v5021 = vadd.f32 %v4879, %v4971
      %v5022 = vadd.f32 %v4880, %v4974
      %v5023 = vadd.f32 %v4881, %v4979
      %v5024 = vadd.f32 %v4882, %v4982
      %v5025 = vadd.f32 %v4883, %v4987
      %v5026 = vadd.f32 %v4884, %v4990
      %v5027 = vadd.f32 %v4885, %v4995
      %v5028 = vadd.f32 %v4886, %v4998
      %v5029 = vadd.f32 %v4887, %v5003
      %v5030 = vadd.f32 %v4888, %v5006
      %v5031 = vadd.f32 %v4889, %v5011
      %v5032 = vadd.f32 %v4890, %v5014
      %s5033 = scalar_lea.vmem %s3, 12
      %v5034 = vld [vmem:[%s5033] sm:$0xf]
      %v5036 = vsel %vm657, %v4592, 0
      %v5039 = vsel %vm657, %v4593, 0
      %v5042 = vsel %vm657, %v4594, 0
      %v5045 = vsel %vm657, %v4595, 0
      %v5048 = vsel %vm657, %v4596, 0
      %v5051 = vsel %vm657, %v4597, 0
      %v5054 = vsel %vm657, %v4598, 0
      %v5057 = vsel %vm657, %v4599, 0
      %v5060 = vsel %vm4626, %v5034, 0
      %5062 = vmatprep.subr.bf16.mxu0 0
      %5063 = vmatpush1.bf16.msra.mxu0 %v5060
      %5064 = vmatprep.subr.bf16.mxu0 0
      %5065 = vmatpush1.bf16.msra.mxu0 0
      %5066 = vmatprep.subr.bf16.mxu0 0
      %5067 = vmatpush1.bf16.msra.mxu0 0
      %5068 = vmatprep.subr.bf16.mxu0 0
      %5069 = vmatpush1.bf16.msra.mxu0 0
      %5070 = vmatprep.subr.bf16.mxu0 0
      %5071 = vmatpush1.bf16.msra.mxu0 0
      %5072 = vmatprep.subr.bf16.mxu0 0
      %5073 = vmatpush1.bf16.msra.mxu0 0
      %5074 = vmatprep.subr.bf16.mxu0 0
      %5075 = vmatpush1.bf16.msra.mxu0 0
      %5076 = vmatprep.subr.bf16.mxu0 0
      %5077 = vmatpush1.bf16.msra.mxu0 0
      %5078 = vmatprep.subr.bf16.mxu0 0
      %5079 = vmatpush1.bf16.msra.mxu0 0
      %5080 = vmatprep.subr.bf16.mxu0 0
      %5081 = vmatpush1.bf16.msra.mxu0 0
      %5082 = vmatprep.subr.bf16.mxu0 0
      %5083 = vmatpush1.bf16.msra.mxu0 0
      %5084 = vmatprep.subr.bf16.mxu0 0
      %5085 = vmatpush1.bf16.msra.mxu0 0
      %5086 = vmatprep.subr.bf16.mxu0 0
      %5087 = vmatpush1.bf16.msra.mxu0 0
      %5088 = vmatprep.subr.bf16.mxu0 0
      %5089 = vmatpush1.bf16.msra.mxu0 0
      %5090 = vmatprep.subr.bf16.mxu0 0
      %5091 = vmatpush1.bf16.msra.mxu0 0
      %5092 = vmatprep.subr.bf16.mxu0 0
      %5093 = vmatpush1.bf16.msra.mxu0 0
      %5094 = vmatprep.mubr.bf16.mxu0 0
      %5095 = vmatmul.mubr.bf16.gmra.mrb[0].mxu0 %v5036
      %v5096 = vpop.f32.mrb[0].mxu0
      %v5097 = vadd.f32 0.0, %v5096
      %v5098 = vpop.f32.mrb[0].mxu0
      %v5099 = vpop.f32.mrb[0].mxu0
      %v5100 = vadd.f32 0.0, %v5099
      %v5101 = vpop.f32.mrb[0].mxu0
      %5102 = vmatprep.mubr.bf16.mxu0 0
      %5103 = vmatmul.mubr.bf16.gmra.mrb[0].mxu0 %v5039
      %v5104 = vpop.f32.mrb[0].mxu0
      %v5105 = vadd.f32 0.0, %v5104
      %v5106 = vpop.f32.mrb[0].mxu0
      %v5107 = vpop.f32.mrb[0].mxu0
      %v5108 = vadd.f32 0.0, %v5107
      %v5109 = vpop.f32.mrb[0].mxu0
      %5110 = vmatprep.mubr.bf16.mxu0 0
      %5111 = vmatmul.mubr.bf16.gmra.mrb[0].mxu0 %v5042
      %v5112 = vpop.f32.mrb[0].mxu0
      %v5113 = vadd.f32 0.0, %v5112
      %v5114 = vpop.f32.mrb[0].mxu0
      %v5115 = vpop.f32.mrb[0].mxu0
      %v5116 = vadd.f32 0.0, %v5115
      %v5117 = vpop.f32.mrb[0].mxu0
      %5118 = vmatprep.mubr.bf16.mxu0 0
      %5119 = vmatmul.mubr.bf16.gmra.mrb[0].mxu0 %v5045
      %v5120 = vpop.f32.mrb[0].mxu0
      %v5121 = vadd.f32 0.0, %v5120
      %v5122 = vpop.f32.mrb[0].mxu0
      %v5123 = vpop.f32.mrb[0].mxu0
      %v5124 = vadd.f32 0.0, %v5123
      %v5125 = vpop.f32.mrb[0].mxu0
      %5126 = vmatprep.mubr.bf16.mxu0 0
      %5127 = vmatmul.mubr.bf16.gmra.mrb[0].mxu0 %v5048
      %v5128 = vpop.f32.mrb[0].mxu0
      %v5129 = vadd.f32 0.0, %v5128
      %v5130 = vpop.f32.mrb[0].mxu0
      %v5131 = vpop.f32.mrb[0].mxu0
      %v5132 = vadd.f32 0.0, %v5131
      %v5133 = vpop.f32.mrb[0].mxu0
      %5134 = vmatprep.mubr.bf16.mxu0 0
      %5135 = vmatmul.mubr.bf16.gmra.mrb[0].mxu0 %v5051
      %v5136 = vpop.f32.mrb[0].mxu0
      %v5137 = vadd.f32 0.0, %v5136
      %v5138 = vpop.f32.mrb[0].mxu0
      %v5139 = vpop.f32.mrb[0].mxu0
      %v5140 = vadd.f32 0.0, %v5139
      %v5141 = vpop.f32.mrb[0].mxu0
      %5142 = vmatprep.mubr.bf16.mxu0 0
      %5143 = vmatmul.mubr.bf16.gmra.mrb[0].mxu0 %v5054
      %v5144 = vpop.f32.mrb[0].mxu0
      %v5145 = vadd.f32 0.0, %v5144
      %v5146 = vpop.f32.mrb[0].mxu0
      %v5147 = vpop.f32.mrb[0].mxu0
      %v5148 = vadd.f32 0.0, %v5147
      %v5149 = vpop.f32.mrb[0].mxu0
      %5150 = vmatprep.mubr.bf16.mxu0 0
      %5151 = vmatmul.mubr.bf16.gmra.mrb[0].mxu0 %v5057
      %v5152 = vpop.f32.mrb[0].mxu0
      %v5153 = vadd.f32 0.0, %v5152
      %v5154 = vpop.f32.mrb[0].mxu0
      %v5155 = vpop.f32.mrb[0].mxu0
      %v5156 = vadd.f32 0.0, %v5155
      %v5157 = vpop.f32.mrb[0].mxu0
      %5158 = vdwg.mxu0
      %v5159 = vadd.f32 %v5017, %v5097
      %v5160 = vadd.f32 %v5018, %v5100
      %v5161 = vadd.f32 %v5019, %v5105
      %v5162 = vadd.f32 %v5020, %v5108
      %v5163 = vadd.f32 %v5021, %v5113
      %v5164 = vadd.f32 %v5022, %v5116
      %v5165 = vadd.f32 %v5023, %v5121
      %v5166 = vadd.f32 %v5024, %v5124
      %v5167 = vadd.f32 %v5025, %v5129
      %v5168 = vadd.f32 %v5026, %v5132
      %v5169 = vadd.f32 %v5027, %v5137
      %v5170 = vadd.f32 %v5028, %v5140
      %v5171 = vadd.f32 %v5029, %v5145
      %v5172 = vadd.f32 %v5030, %v5148
      %v5173 = vadd.f32 %v5031, %v5153
      %v5174 = vadd.f32 %v5032, %v5156
      %5175 = vst.msk [vmem:[%s258] sm:$0xff] %vm340, %v5159
      %5176 = vst.msk [vmem:[%s258 + $0x8] sm:$0xff] %vm340, %v5160
      %5177 = vst.msk [vmem:[%s258 + $0x10] sm:$0xff] %vm340, %v5161
      %5178 = vst.msk [vmem:[%s258 + $0x18] sm:$0xff] %vm340, %v5162
      %5179 = vst.msk [vmem:[%s258 + $0x20] sm:$0xff] %vm340, %v5163
      %5180 = vst.msk [vmem:[%s258 + $0x28] sm:$0xff] %vm340, %v5164
      %5181 = vst.msk [vmem:[%s258 + $0x30] sm:$0xff] %vm340, %v5165
      %5182 = vst.msk [vmem:[%s258 + $0x38] sm:$0xff] %vm340, %v5166
      %5183 = vst.msk [vmem:[%s258 + $0x40] sm:$0xff] %vm340, %v5167
      %5184 = vst.msk [vmem:[%s258 + $0x48] sm:$0xff] %vm340, %v5168
      %5185 = vst.msk [vmem:[%s258 + $0x50] sm:$0xff] %vm340, %v5169
      %5186 = vst.msk [vmem:[%s258 + $0x58] sm:$0xff] %vm340, %v5170
      %5187 = vst.msk [vmem:[%s258 + $0x60] sm:$0xff] %vm340, %v5171
      %5188 = vst.msk [vmem:[%s258 + $0x68] sm:$0xff] %vm340, %v5172
      %5189 = vst.msk [vmem:[%s258 + $0x70] sm:$0xff] %vm340, %v5173
      %5190 = vst.msk [vmem:[%s258 + $0x78] sm:$0xff] %vm340, %v5174
      %s5191 = smul.u32 8, %s17
      %p5192 = scmp.lt.s32.totalorder %s5191, 63
      %s5193 = scalar_select %p5192, %s5191, 63
      %s5194 = smul.addr %s5193, 2
      %s5195 = smul.addr %s5194, 8
      %s5196 = scalar_lea.vmem %s6, %s5195
      // Predicated region
      $region45: #{tpu_custom_call.1} parent=43 // pred_check
        %p5197 = pneg %p166
      $region46: #{tpu_custom_call.1} parent=43 // pred_check_branch
        %5199 = sbr.rel (%p5197) target = $region48
      $region47: #{tpu_custom_call.1} parent=43 // pred_region
        %s5200 = smul.u32 8, %s17
      $region48: #{tpu_custom_call.1} parent=43 // pred_fallthru
        _
    $region44: #{tpu_custom_call.1} parent=5 // pred_fallthru
      _
    %p5201 = scmp.le.s32.totalorder 2, %s12
    // Predicated region
    $region49: #{tpu_custom_call.1} parent=5 // pred_check
      %p5202 = pneg %p5201
    $region50: #{tpu_custom_call.1} parent=5 // pred_check_branch
      %5204 = sbr.rel (%p5202) target = $region52
    $region51: #{tpu_custom_call.1} parent=5 // pred_region
      %s5205 = ssub.s32 %s12, 2
      // Predicated region
      $region53: #{tpu_custom_call.1} parent=51 // pred_check
        %p5206 = pneg %p172
      $region54: #{tpu_custom_call.1} parent=51 // pred_check_branch
        %5208 = sbr.rel (%p5206) target = $region56
      $region55: #{tpu_custom_call.1} parent=51 // pred_region
        %s5209 = smul.u32 8, %s18
        %p5210 = scmp.lt.s32.totalorder %s5209, 63
        %s5211 = scalar_select %p5210, %s5209, 63
        %s5212 = smul.addr %s5211, 2
        %s5213 = smul.addr %s5212, 8
        %s5214 = scalar_lea.vmem %s6, %s5213
      $region56: #{tpu_custom_call.1} parent=51 // pred_fallthru
        _
    $region52: #{tpu_custom_call.1} parent=5 // pred_fallthru
      _
  $region6: #{tpu_custom_call.1} parent=0 // loop_footer
    %s16 = sadd.s32 1, %s12
  $region7: #{tpu_custom_call.1} parent=0 // loop_footer_branch
    %11 = sbr.rel target = $region3
  $region8: #{tpu_custom_call.1} parent=0 // loop_exit
    _

</llo_original>
